<compile_context>
chip_gen: v5e
topology: v5e:2x2
jax: 0.10.0
libtpu: 0.0.40
codegen_flags: <defaults>
</compile_context>

<pallas_src>
import functools

import jax
import jax.numpy as jnp
from jax import lax
from jax.experimental import pallas as pl
from jax.experimental.pallas import tpu as pltpu


# ----------------------------- kernel ---------------------------------------


def _normalize(x, eps=1e-5):
    """LayerNorm normalize step only (affine folded into the following Linear)."""
    mu = jnp.mean(x, axis=-1, keepdims=True)
    var = jnp.mean((x - mu) ** 2, axis=-1, keepdims=True)
    return (x - mu) * lax.rsqrt(var + eps)


def _gelu_exact(x):
    # PyTorch nn.GELU() default (erf-based, approximate='none')
    return 0.5 * x * (1.0 + lax.erf(x * (2.0 ** -0.5)))


def masked_goal_vit_kernel(
    goal_idx_ref,                                   # (B,) int32, SMEM prefetch
    # constant inputs (index_map constant over the depth grid -> fetched once)
    patches_ref, pe_ref, cross_tbl_ref, pool_w_ref,
    wp_ref, bp_ref, lnp2_w_ref, lnp2_b_ref,
    # per-layer inputs (streamed: one squeezed slab per grid step)
    wq_ref, wk_ref, wv_ref, bq_ref, bk_ref, bv_ref, wout_ref,
    w1_ref, b1_ref, w2_ref, b2_ref,
    out_ref,                                        # (B, dim) f32
    x_ref,                                          # VMEM scratch (B*N, dim) f32
    *, batch, n_tokens, heads, dim_head,
):
    bf16 = jnp.bfloat16
    f32 = jnp.float32
    layer = pl.program_id(0)

    # ---- grid step 0: patch embedding + positional embedding -> x scratch ----
    @pl.when(layer == 0)
    def _():
        p = _normalize(patches_ref[...])            # LN1 affine folded into wp/bp
        emb = jnp.dot(p.astype(bf16), wp_ref[...],
                      preferred_element_type=f32) + bp_ref[...]
        emb = _normalize(emb) * lnp2_w_ref[...] + lnp2_b_ref[...]
        pe = pe_ref[...]                            # (N, dim), broadcast per batch
        for b in range(batch):
            r0 = b * n_tokens
            x_ref[r0:r0 + n_tokens, :] = emb[r0:r0 + n_tokens, :] + pe

    x = x_ref[...]                                  # (B*N, dim) resident activation

    # ---- Attention (pre-LN folded into wq/wk/wv; q-scale folded as well) ----
    y = _normalize(x).astype(bf16)
    q = jnp.dot(y, wq_ref[...], preferred_element_type=f32) + bq_ref[...]
    k = jnp.dot(y, wk_ref[...], preferred_element_type=f32) + bk_ref[...]
    v = jnp.dot(y, wv_ref[...], preferred_element_type=f32) + bv_ref[...]

    # stack (batch, head) into one leading batch axis -> flash-style 3D einsums
    q_l, k_l, v_l, m_l = [], [], [], []
    for b in range(batch):
        r0 = b * n_tokens
        mask_b = cross_tbl_ref[goal_idx_ref[b]]     # (N, N) dynamic select
        for h in range(heads):
            c0 = h * dim_head
            q_l.append(q[r0:r0 + n_tokens, c0:c0 + dim_head])
            k_l.append(k[r0:r0 + n_tokens, c0:c0 + dim_head])
            v_l.append(v[r0:r0 + n_tokens, c0:c0 + dim_head])
            m_l.append(mask_b)
    qs = jnp.stack(q_l, axis=0).astype(bf16)        # (B*H, N, D)
    ks = jnp.stack(k_l, axis=0).astype(bf16)
    vs = jnp.stack(v_l, axis=0).astype(bf16)
    ms = jnp.stack(m_l, axis=0)                     # (B*H, N, N) additive mask

    dots = jnp.einsum('bnd,bmd->bnm', qs, ks,
                      preferred_element_type=f32) + ms
    dots = dots - jnp.max(dots, axis=-1, keepdims=True)
    ex = jnp.exp(dots)
    # fully-masked rows (-1e9 everywhere) become uniform attention, matching
    # jax.nn.softmax / torch.softmax in the reference.
    attn = ex * pl.reciprocal(jnp.sum(ex, axis=-1, keepdims=True), approx=True)
    o = jnp.einsum('bnm,bmd->bnd', attn.astype(bf16), vs,
                   preferred_element_type=f32)      # (B*H, N, D)

    # merge heads in registers (no VMEM scratch round trip), one out-proj matmul
    rows = []
    for b in range(batch):
        rows.append(jnp.concatenate(
            [o[b * heads + h] for h in range(heads)], axis=-1))   # (N, inner)
    o_merged = jnp.concatenate(rows, axis=0)        # (B*N, inner)

    x = jnp.dot(o_merged.astype(bf16), wout_ref[...],
                preferred_element_type=f32) + x

    # ---- FeedForward (pre-LN folded into w1/b1; exact erf GELU) ----
    h1 = jnp.dot(_normalize(x).astype(bf16), w1_ref[...],
                 preferred_element_type=f32) + b1_ref[...]
    h1 = _gelu_exact(h1)
    h2 = jnp.dot(h1.astype(bf16), w2_ref[...],
                 preferred_element_type=f32) + b2_ref[...]
    x = h2 + x

    x_ref[...] = x                                  # carry to next grid step

    # ---- last grid step: masked mean pooling (weighted row reduction) ----
    @pl.when(layer == pl.num_programs(0) - 1)
    def _():
        xw = x * pool_w_ref[...]                    # (B*N, dim) * (B*N, 1)
        for b in range(batch):
            r0 = b * n_tokens
            out_ref[b:b + 1, :] = jnp.sum(xw[r0:r0 + n_tokens, :], axis=0,
                                          keepdims=True)


# ----------------------------- glue (plain JAX) ------------------------------


def posemb_sincos_2d(h, w, dim, temperature=10000.0):
    y, x = jnp.meshgrid(jnp.arange(h), jnp.arange(w), indexing="ij")
    assert dim % 4 == 0
    omega = jnp.arange(dim // 4, dtype=jnp.float32) / (dim // 4 - 1)
    omega = 1.0 / (temperature ** omega)
    y = y.reshape(-1).astype(jnp.float32)[:, None] * omega[None, :]
    x = x.reshape(-1).astype(jnp.float32)[:, None] * omega[None, :]
    return jnp.concatenate(
        [jnp.sin(x), jnp.cos(x), jnp.sin(y), jnp.cos(y)], axis=1
    ).astype(jnp.float32)


def extract_patches(img, patch):
    # NCHW -> (B, N, p1*p2*c), feature order (p1, p2, c) like the PyTorch Rearrange
    b, c, H, W = img.shape
    hh, ww = H // patch, W // patch
    x = img.reshape(b, c, hh, patch, ww, patch)
    x = jnp.transpose(x, (0, 2, 4, 3, 5, 1))           # b h w p1 p2 c
    return x.reshape(b, hh * ww, patch * patch * c)


def build_masks(h, w, context_size):
    n = h * w
    goal_mask = jnp.ones((h, w), jnp.float32)
    ncol = w // (context_size + 2)
    goal_mask = goal_mask.at[:, -ncol:].set(0.0).reshape(-1)
    no_mask = jnp.ones((n,), jnp.float32)
    all_masks = jnp.stack([no_mask, goal_mask], axis=0)                      # (2, N)
    no_cross = jnp.ones((n, n), jnp.float32)
    goal_cross = jnp.where(goal_mask[:, None] + goal_mask[None, :] < 2.0, 0.0, 1.0)
    all_cross = jnp.stack([no_cross, goal_cross], axis=0)                    # (2, N, N)
    mean_mask = all_masks / jnp.mean(all_masks, axis=1, keepdims=True)       # (2, N)
    all_cross_add = jnp.where(all_cross == 0.0, -1e9, 0.0)
    return all_cross_add, mean_mask


def init_params(key, *, patch_dim, dim, depth, heads, dim_head, mlp_dim):
    inner = heads * dim_head
    ks = jax.random.split(key, 16)
    f32 = jnp.float32
    # LayerNorm affines perturbed away from (1, 0) so the host-side folding
    # into the following Linear is actually exercised by the correctness check.
    return dict(
        lnp1_w=1.0 + 0.1 * jax.random.normal(ks[8], (1, patch_dim), f32),
        lnp1_b=0.1 * jax.random.normal(ks[9], (1, patch_dim), f32),
        wp=0.05 * jax.random.normal(ks[0], (patch_dim, dim), f32),
        bp=0.02 * jax.random.normal(ks[1], (1, dim), f32),
        lnp2_w=1.0 + 0.1 * jax.random.normal(ks[10], (1, dim), f32),
        lnp2_b=0.1 * jax.random.normal(ks[11], (1, dim), f32),
        a_ln_w=1.0 + 0.1 * jax.random.normal(ks[12], (depth, dim), f32),
        a_ln_b=0.1 * jax.random.normal(ks[13], (depth, dim), f32),
        wqkv=0.05 * jax.random.normal(ks[2], (depth, dim, 3 * inner), f32),
        wout=0.05 * jax.random.normal(ks[3], (depth, inner, dim), f32),
        f_ln_w=1.0 + 0.1 * jax.random.normal(ks[14], (depth, dim), f32),
        f_ln_b=0.1 * jax.random.normal(ks[15], (depth, dim), f32),
        w1=0.05 * jax.random.normal(ks[4], (depth, dim, mlp_dim), f32),
        b1=0.02 * jax.random.normal(ks[5], (depth, mlp_dim), f32),
        w2=0.05 * jax.random.normal(ks[6], (depth, mlp_dim, dim), f32),
        b2=0.02 * jax.random.normal(ks[7], (depth, dim), f32),
    )


def masked_goal_vit_forward(img, input_goal_mask, params, cfg):
    patch = cfg["patch_size"]
    dim, depth = cfg["dim"], cfg["depth"]
    heads, dim_head = cfg["heads"], cfg["dim_head"]
    b, c, H, W = img.shape
    hh, ww = H // patch, W // patch
    n = hh * ww
    patch_dim = c * patch * patch
    inner = heads * dim_head
    scale = dim_head ** -0.5
    bf16 = jnp.bfloat16

    goal_idx = input_goal_mask.astype(jnp.int32)

    # --- host-side glue: patchify, PE, mask tables, pooling weight column ---
    patches = extract_patches(img.astype(jnp.float32), patch).reshape(b * n, patch_dim)
    pe = posemb_sincos_2d(hh, ww, dim)                               # (N, dim)
    all_cross_add, mean_mask_tbl = build_masks(hh, ww, cfg["context_size"])
    pool_w = (mean_mask_tbl[goal_idx] / n).reshape(b * n, 1)         # (B*N, 1)

    # --- fold LayerNorm affine params into the following Linear (exact) ---
    # LN1 -> patch-embedding Linear
    g1 = params["lnp1_w"].reshape(-1)
    wp_f = (g1[:, None] * params["wp"]).astype(bf16)
    bp_f = params["lnp1_b"].reshape(1, -1) @ params["wp"] + params["bp"]

    # attention pre-LN -> wq/wk/wv (bias-free Linear); q-scale folded as well
    wqkv = params["wqkv"]
    wq_o = wqkv[..., :inner]
    wk_o = wqkv[..., inner:2 * inner]
    wv_o = wqkv[..., 2 * inner:]
    g_a = params["a_ln_w"][:, :, None]
    beta_a = params["a_ln_b"]
    wq_f = (g_a * wq_o * scale).astype(bf16)
    wk_f = (g_a * wk_o).astype(bf16)
    wv_f = (g_a * wv_o).astype(bf16)
    bq = (jnp.einsum("ld,lde->le", beta_a, wq_o) * scale)[:, None, :]
    bk = jnp.einsum("ld,lde->le", beta_a, wk_o)[:, None, :]
    bv = jnp.einsum("ld,lde->le", beta_a, wv_o)[:, None, :]

    # FFN pre-LN -> w1/b1
    g_f = params["f_ln_w"][:, :, None]
    beta_f = params["f_ln_b"]
    w1_f = (g_f * params["w1"]).astype(bf16)
    b1_f = (jnp.einsum("ld,lde->le", beta_f, params["w1"]) + params["b1"])[:, None, :]

    wout = params["wout"].astype(bf16)
    w2 = params["w2"].astype(bf16)
    b2 = params["b2"][:, None, :]

    const_inputs = [patches, pe, all_cross_add, pool_w,
                    wp_f, bp_f, params["lnp2_w"], params["lnp2_b"]]
    layer_inputs = [wq_f, wk_f, wv_f, bq, bk, bv, wout, w1_f, b1_f, w2, b2]

    def const_spec(arr):
        nd = arr.ndim
        return pl.BlockSpec(arr.shape, lambda l, gm, _nd=nd: (0,) * _nd)

    def layer_spec(arr):
        _, r, cdim = arr.shape                      # (depth, r, c) -> stream one slab
        return pl.BlockSpec((None, r, cdim), lambda l, gm: (l, 0, 0))

    in_specs = ([const_spec(a) for a in const_inputs]
                + [layer_spec(a) for a in layer_inputs])

    # explicit VMEM budget: resident constants + double-buffered layer slabs
    def nbytes(a):
        return int(a.size) * a.dtype.itemsize
    footprint = (sum(nbytes(a) for a in const_inputs)
                 + 2 * sum(nbytes(a) // depth for a in layer_inputs)
                 + (b * n * dim + b * dim) * 4)
    vmem_limit = int(min(max(4 * footprint + (4 << 20), 16 << 20), 32 << 20))

    kernel = functools.partial(
        masked_goal_vit_kernel,
        batch=b, n_tokens=n, heads=heads, dim_head=dim_head,
    )

    # TODO(synk): on v7x (2 TensorCores) add a 'parallel' grid axis over batch so
    # the second core is not idle; on 1-TC chips (v5e/v6e) it would only add
    # per-step overhead at these sizes, so it is intentionally omitted here.
    out = pl.pallas_call(
        kernel,
        out_shape=jax.ShapeDtypeStruct((b, dim), jnp.float32),
        grid_spec=pltpu.PrefetchScalarGridSpec(
            num_scalar_prefetch=1,
            grid=(depth,),                           # depth streamed, x carried
            in_specs=in_specs,
            out_specs=pl.BlockSpec((b, dim), lambda l, gm: (0, 0)),
            scratch_shapes=[pltpu.VMEM((b * n, dim), jnp.float32)],
        ),
        compiler_params=pltpu.CompilerParams(
            dimension_semantics=("arbitrary",),      # loop-carried x dependency
            vmem_limit_bytes=vmem_limit,
        ),
    )(goal_idx, *const_inputs, *layer_inputs)

    return out   # (B, dim)


# ----------------------------- pure-JAX reference ----------------------------


def reference_forward(img, input_goal_mask, params, cfg):
    patch = cfg["patch_size"]
    dim, depth = cfg["dim"], cfg["depth"]
    heads, dim_head = cfg["heads"], cfg["dim_head"]
    inner = heads * dim_head
    b, c, H, W = img.shape
    hh, ww = H // patch, W // patch
    n = hh * ww

    patches = extract_patches(img.astype(jnp.float32), patch)
    pe = posemb_sincos_2d(hh, ww, dim)
    all_cross_add, mean_mask_tbl = build_masks(hh, ww, cfg["context_size"])
    cross_mask = all_cross_add[input_goal_mask]
    mean_sel = mean_mask_tbl[input_goal_mask][..., None]

    def ln(x, w, bb, eps=1e-5):
        mu = jnp.mean(x, -1, keepdims=True)
        var = jnp.mean((x - mu) ** 2, -1, keepdims=True)
        return (x - mu) / jnp.sqrt(var + eps) * w + bb

    x = ln(patches, params["lnp1_w"], params["lnp1_b"])
    x = x @ params["wp"] + params["bp"]
    x = ln(x, params["lnp2_w"], params["lnp2_b"])
    x = x + pe[None]

    for l in range(depth):
        resid = x
        y = ln(x, params["a_ln_w"][l], params["a_ln_b"][l])
        qkv = y @ params["wqkv"][l]
        q, k, v = jnp.split(qkv, 3, axis=-1)
        q = q.reshape(b, n, heads, dim_head).transpose(0, 2, 1, 3)
        k = k.reshape(b, n, heads, dim_head).transpose(0, 2, 1, 3)
        v = v.reshape(b, n, heads, dim_head).transpose(0, 2, 1, 3)
        dots = jnp.einsum("bhnd,bhmd->bhnm", q, k) * (dim_head ** -0.5)
        dots = dots + cross_mask[:, None]
        attn = jax.nn.softmax(dots, axis=-1)
        o = jnp.einsum("bhnm,bhmd->bhnd", attn, v)
        o = o.transpose(0, 2, 1, 3).reshape(b, n, inner)
        x = o @ params["wout"][l] + resid

        resid = x
        y = ln(x, params["f_ln_w"][l], params["f_ln_b"][l])
        y = y @ params["w1"][l] + params["b1"][l]
        y = 0.5 * y * (1.0 + lax.erf(y * (2.0 ** -0.5)))
        y = y @ params["w2"][l] + params["b2"][l]
        x = y + resid

    x = x * mean_sel
    return jnp.mean(x, axis=1)


# ----------------------------- main ------------------------------------------


if __name__ == "__main__":
    cfg = dict(
        context_size=2,   # w_patches % (context_size + 2) == 0  (4 % 4)
        image_size=16,
        patch_size=4,
        dim=32,
        depth=2,
        heads=4,
        dim_head=8,
        mlp_dim=64,
        channels=3,
    )
    B = 2
    patch_dim = cfg["channels"] * cfg["patch_size"] ** 2

    key = jax.random.PRNGKey(0)
    kp, ki = jax.random.split(key)
    params = init_params(
        kp, patch_dim=patch_dim, dim=cfg["dim"], depth=cfg["depth"],
        heads=cfg["heads"], dim_head=cfg["dim_head"], mlp_dim=cfg["mlp_dim"],
    )
    img = jax.random.normal(
        ki, (B, cfg["channels"], cfg["image_size"], cfg["image_size"]), jnp.float32
    )
    # exercise both the no-mask (0) and goal-mask (1) paths
    input_goal_mask = jnp.array([0, 1], dtype=jnp.int32)

    out = masked_goal_vit_forward(img, input_goal_mask, params, cfg)
    out = jax.block_until_ready(out)

    ref = jax.block_until_ready(reference_forward(img, input_goal_mask, params, cfg))
    assert out.shape == (B, cfg["dim"])
    # bf16 matmul operands (f32 accumulation) + approx reciprocal -> loose tol
    assert jnp.allclose(out, ref, atol=3e-2, rtol=3e-2), (
        f"max abs diff {jnp.max(jnp.abs(out - ref))}"
    )
    print("KERNEL_OK")
</pallas_src>

<mosaic_0001>
module attributes {stable_mosaic.version = 11 : i64} {
  func.func @masked_goal_vit_kernel(%arg0: i32, %arg1: memref<2xi32, #tpu.memory_space<smem>>, %arg2: memref<32x48xf32, #tpu.memory_space<vmem>>, %arg3: memref<16x32xf32, #tpu.memory_space<vmem>>, %arg4: memref<2x16x16xf32, #tpu.memory_space<vmem>>, %arg5: memref<32x1xf32, #tpu.memory_space<vmem>>, %arg6: memref<48x32xbf16, #tpu.memory_space<vmem>>, %arg7: memref<1x32xf32, #tpu.memory_space<vmem>>, %arg8: memref<1x32xf32, #tpu.memory_space<vmem>>, %arg9: memref<1x32xf32, #tpu.memory_space<vmem>>, %arg10: memref<1x32x32xbf16, #tpu.memory_space<vmem>>, %arg11: memref<1x32x32xbf16, #tpu.memory_space<vmem>>, %arg12: memref<1x32x32xbf16, #tpu.memory_space<vmem>>, %arg13: memref<1x1x32xf32, #tpu.memory_space<vmem>>, %arg14: memref<1x1x32xf32, #tpu.memory_space<vmem>>, %arg15: memref<1x1x32xf32, #tpu.memory_space<vmem>>, %arg16: memref<1x32x32xbf16, #tpu.memory_space<vmem>>, %arg17: memref<1x32x64xbf16, #tpu.memory_space<vmem>>, %arg18: memref<1x1x64xf32, #tpu.memory_space<vmem>>, %arg19: memref<1x64x32xbf16, #tpu.memory_space<vmem>>, %arg20: memref<1x1x32xf32, #tpu.memory_space<vmem>>, %arg21: memref<2x32xf32, #tpu.memory_space<vmem>>, %arg22: memref<32x32xf32, #tpu.memory_space<vmem>>) attributes {dimension_semantics = [#tpu.dimension_semantics<arbitrary>], iteration_bounds = array<i64: 2>, scalar_prefetch = 1 : i64, scratch_operands = 1 : i64, tpu.core_type = #tpu.core_type<tc>, window_params = [{pipeline_mode = #tpu.pipeline_mode<synchronous>, transform_indices = @transform_0, window_bounds = array<i64: 32, 48>}, {pipeline_mode = #tpu.pipeline_mode<synchronous>, transform_indices = @transform_1, window_bounds = array<i64: 16, 32>}, {pipeline_mode = #tpu.pipeline_mode<synchronous>, transform_indices = @transform_2, window_bounds = array<i64: 2, 16, 16>}, {pipeline_mode = #tpu.pipeline_mode<synchronous>, transform_indices = @transform_3, window_bounds = array<i64: 32, 1>}, {pipeline_mode = #tpu.pipeline_mode<synchronous>, transform_indices = @transform_4, window_bounds = array<i64: 48, 32>}, {pipeline_mode = #tpu.pipeline_mode<synchronous>, transform_indices = @transform_5, window_bounds = array<i64: 1, 32>}, {pipeline_mode = #tpu.pipeline_mode<synchronous>, transform_indices = @transform_6, window_bounds = array<i64: 1, 32>}, {pipeline_mode = #tpu.pipeline_mode<synchronous>, transform_indices = @transform_7, window_bounds = array<i64: 1, 32>}, {transform_indices = @transform_8, window_bounds = array<i64: 1, 32, 32>}, {transform_indices = @transform_9, window_bounds = array<i64: 1, 32, 32>}, {transform_indices = @transform_10, window_bounds = array<i64: 1, 32, 32>}, {transform_indices = @transform_11, window_bounds = array<i64: 1, 1, 32>}, {transform_indices = @transform_12, window_bounds = array<i64: 1, 1, 32>}, {transform_indices = @transform_13, window_bounds = array<i64: 1, 1, 32>}, {transform_indices = @transform_14, window_bounds = array<i64: 1, 32, 32>}, {transform_indices = @transform_15, window_bounds = array<i64: 1, 32, 64>}, {transform_indices = @transform_16, window_bounds = array<i64: 1, 1, 64>}, {transform_indices = @transform_17, window_bounds = array<i64: 1, 64, 32>}, {transform_indices = @transform_18, window_bounds = array<i64: 1, 1, 32>}, {pipeline_mode = #tpu.pipeline_mode<synchronous>, transform_indices = @transform_19, window_bounds = array<i64: 2, 32>}]} {
    %c0_i32 = arith.constant 0 : i32
    %0 = arith.cmpi eq, %arg0, %c0_i32 : i32
    %1 = arith.extui %0 : i1 to i32
    %c0_i32_0 = arith.constant 0 : i32
    %2 = arith.cmpi ne, %1, %c0_i32_0 : i32
    scf.if %2 {
      %c0_65 = arith.constant 0 : index
      %c0_66 = arith.constant 0 : index
      %200 = vector.load %arg2[%c0_65, %c0_66] : memref<32x48xf32, #tpu.memory_space<vmem>>, vector<32x48xf32>
      %cst_67 = arith.constant dense<0.000000e+00> : vector<32xf32>
      %201 = vector.multi_reduction <add>, %200, %cst_67 [1] : vector<32x48xf32> to vector<32xf32>
      %202 = vector.shape_cast %201 : vector<32xf32> to vector<32x1xf32>
      %cst_68 = arith.constant 4.800000e+01 : f32
      %203 = vector.broadcast %cst_68 : f32 to vector<32x1xf32>
      %204 = arith.divf %202, %203 : vector<32x1xf32>
      %205 = vector.broadcast %204 : vector<32x1xf32> to vector<32x48xf32>
      %206 = arith.subf %200, %205 : vector<32x48xf32>
      %207 = arith.mulf %206, %206 : vector<32x48xf32>
      %cst_69 = arith.constant dense<0.000000e+00> : vector<32xf32>
      %208 = vector.multi_reduction <add>, %207, %cst_69 [1] : vector<32x48xf32> to vector<32xf32>
      %209 = vector.shape_cast %208 : vector<32xf32> to vector<32x1xf32>
      %cst_70 = arith.constant 4.800000e+01 : f32
      %210 = vector.broadcast %cst_70 : f32 to vector<32x1xf32>
      %211 = arith.divf %209, %210 : vector<32x1xf32>
      %212 = vector.broadcast %204 : vector<32x1xf32> to vector<32x48xf32>
      %213 = arith.subf %200, %212 : vector<32x48xf32>
      %cst_71 = arith.constant 9.99999974E-6 : f32
      %214 = vector.broadcast %cst_71 : f32 to vector<32x1xf32>
      %215 = arith.addf %211, %214 : vector<32x1xf32>
      %216 = math.rsqrt %215 : vector<32x1xf32>
      %217 = vector.broadcast %216 : vector<32x1xf32> to vector<32x48xf32>
      %218 = arith.mulf %213, %217 : vector<32x48xf32>
      %219 = arith.truncf %218 : vector<32x48xf32> to vector<32x48xbf16>
      %c0_72 = arith.constant 0 : index
      %c0_73 = arith.constant 0 : index
      %220 = vector.load %arg6[%c0_72, %c0_73] : memref<48x32xbf16, #tpu.memory_space<vmem>>, vector<48x32xbf16>
      %cst_74 = arith.constant dense<0.000000e+00> : vector<32x32xf32>
      %221 = tpu.matmul %219, %220, %cst_74 {dimension_numbers = #tpu.dot_dimension_numbers<[1], [0], [0], [1], [0, 0, 1, 1], [], []>} : vector<32x48xbf16>, vector<48x32xbf16>, vector<32x32xf32> -> vector<32x32xf32>
      %c0_75 = arith.constant 0 : index
      %c0_76 = arith.constant 0 : index
      %222 = vector.load %arg7[%c0_75, %c0_76] : memref<1x32xf32, #tpu.memory_space<vmem>>, vector<1x32xf32>
      %223 = vector.broadcast %222 : vector<1x32xf32> to vector<32x32xf32>
      %224 = arith.addf %221, %223 : vector<32x32xf32>
      %cst_77 = arith.constant dense<0.000000e+00> : vector<32xf32>
      %225 = vector.multi_reduction <add>, %224, %cst_77 [1] : vector<32x32xf32> to vector<32xf32>
      %226 = vector.shape_cast %225 : vector<32xf32> to vector<32x1xf32>
      %cst_78 = arith.constant 3.200000e+01 : f32
      %227 = vector.broadcast %cst_78 : f32 to vector<32x1xf32>
      %228 = arith.divf %226, %227 : vector<32x1xf32>
      %229 = vector.broadcast %228 : vector<32x1xf32> to vector<32x32xf32>
      %230 = arith.subf %224, %229 : vector<32x32xf32>
      %231 = arith.mulf %230, %230 : vector<32x32xf32>
      %cst_79 = arith.constant dense<0.000000e+00> : vector<32xf32>
      %232 = vector.multi_reduction <add>, %231, %cst_79 [1] : vector<32x32xf32> to vector<32xf32>
      %233 = vector.shape_cast %232 : vector<32xf32> to vector<32x1xf32>
      %cst_80 = arith.constant 3.200000e+01 : f32
      %234 = vector.broadcast %cst_80 : f32 to vector<32x1xf32>
      %235 = arith.divf %233, %234 : vector<32x1xf32>
      %236 = vector.broadcast %228 : vector<32x1xf32> to vector<32x32xf32>
      %237 = arith.subf %224, %236 : vector<32x32xf32>
      %cst_81 = arith.constant 9.99999974E-6 : f32
      %238 = vector.broadcast %cst_81 : f32 to vector<32x1xf32>
      %239 = arith.addf %235, %238 : vector<32x1xf32>
      %240 = math.rsqrt %239 : vector<32x1xf32>
      %241 = vector.broadcast %240 : vector<32x1xf32> to vector<32x32xf32>
      %242 = arith.mulf %237, %241 : vector<32x32xf32>
      %c0_82 = arith.constant 0 : index
      %c0_83 = arith.constant 0 : index
      %243 = vector.load %arg8[%c0_82, %c0_83] : memref<1x32xf32, #tpu.memory_space<vmem>>, vector<1x32xf32>
      %244 = vector.broadcast %243 : vector<1x32xf32> to vector<32x32xf32>
      %245 = arith.mulf %242, %244 : vector<32x32xf32>
      %c0_84 = arith.constant 0 : index
      %c0_85 = arith.constant 0 : index
      %246 = vector.load %arg9[%c0_84, %c0_85] : memref<1x32xf32, #tpu.memory_space<vmem>>, vector<1x32xf32>
      %247 = vector.broadcast %246 : vector<1x32xf32> to vector<32x32xf32>
      %248 = arith.addf %245, %247 : vector<32x32xf32>
      %c0_86 = arith.constant 0 : index
      %c0_87 = arith.constant 0 : index
      %249 = vector.load %arg3[%c0_86, %c0_87] : memref<16x32xf32, #tpu.memory_space<vmem>>, vector<16x32xf32>
      %250 = vector.extract_strided_slice %248 {offsets = [0, 0], sizes = [16, 32], strides = [1, 1]} : vector<32x32xf32> to vector<16x32xf32>
      %251 = arith.addf %250, %249 : vector<16x32xf32>
      %c0_88 = arith.constant 0 : index
      %c0_89 = arith.constant 0 : index
      %252 = vector.load %arg22[%c0_88, %c0_89] : memref<32x32xf32, #tpu.memory_space<vmem>>, vector<16x32xf32>
      tpu.vector_store %arg22[%c0_88, %c0_89], %251 {strides = array<i32>} : memref<32x32xf32, #tpu.memory_space<vmem>>, vector<16x32xf32>,
      %253 = vector.extract_strided_slice %248 {offsets = [16, 0], sizes = [16, 32], strides = [1, 1]} : vector<32x32xf32> to vector<16x32xf32>
      %254 = arith.addf %253, %249 : vector<16x32xf32>
      %c16 = arith.constant 16 : index
      %c0_90 = arith.constant 0 : index
      %255 = vector.load %arg22[%c16, %c0_90] : memref<32x32xf32, #tpu.memory_space<vmem>>, vector<16x32xf32>
      tpu.vector_store %arg22[%c16, %c0_90], %254 {strides = array<i32>} : memref<32x32xf32, #tpu.memory_space<vmem>>, vector<16x32xf32>,
    } else {
    }
    %c0 = arith.constant 0 : index
    %c0_1 = arith.constant 0 : index
    %3 = vector.load %arg22[%c0, %c0_1] : memref<32x32xf32, #tpu.memory_space<vmem>>, vector<32x32xf32>
    %cst = arith.constant dense<0.000000e+00> : vector<32xf32>
    %4 = vector.multi_reduction <add>, %3, %cst [1] : vector<32x32xf32> to vector<32xf32>
    %5 = vector.shape_cast %4 : vector<32xf32> to vector<32x1xf32>
    %cst_2 = arith.constant 3.200000e+01 : f32
    %6 = vector.broadcast %cst_2 : f32 to vector<32x1xf32>
    %7 = arith.divf %5, %6 : vector<32x1xf32>
    %8 = vector.broadcast %7 : vector<32x1xf32> to vector<32x32xf32>
    %9 = arith.subf %3, %8 : vector<32x32xf32>
    %10 = arith.mulf %9, %9 : vector<32x32xf32>
    %cst_3 = arith.constant dense<0.000000e+00> : vector<32xf32>
    %11 = vector.multi_reduction <add>, %10, %cst_3 [1] : vector<32x32xf32> to vector<32xf32>
    %12 = vector.shape_cast %11 : vector<32xf32> to vector<32x1xf32>
    %cst_4 = arith.constant 3.200000e+01 : f32
    %13 = vector.broadcast %cst_4 : f32 to vector<32x1xf32>
    %14 = arith.divf %12, %13 : vector<32x1xf32>
    %15 = vector.broadcast %7 : vector<32x1xf32> to vector<32x32xf32>
    %16 = arith.subf %3, %15 : vector<32x32xf32>
    %cst_5 = arith.constant 9.99999974E-6 : f32
    %17 = vector.broadcast %cst_5 : f32 to vector<32x1xf32>
    %18 = arith.addf %14, %17 : vector<32x1xf32>
    %19 = math.rsqrt %18 : vector<32x1xf32>
    %20 = vector.broadcast %19 : vector<32x1xf32> to vector<32x32xf32>
    %21 = arith.mulf %16, %20 : vector<32x32xf32>
    %22 = arith.truncf %21 : vector<32x32xf32> to vector<32x32xbf16>
    %c0_6 = arith.constant 0 : index
    %c0_7 = arith.constant 0 : index
    %c0_8 = arith.constant 0 : index
    %23 = vector.load %arg10[%c0_6, %c0_7, %c0_8] : memref<1x32x32xbf16, #tpu.memory_space<vmem>>, vector<1x32x32xbf16>
    %24 = vector.shape_cast %23 : vector<1x32x32xbf16> to vector<32x32xbf16>
    %cst_9 = arith.constant dense<0.000000e+00> : vector<32x32xf32>
    %25 = tpu.matmul %22, %24, %cst_9 {dimension_numbers = #tpu.dot_dimension_numbers<[1], [0], [0], [1], [0, 0, 1, 1], [], []>} : vector<32x32xbf16>, vector<32x32xbf16>, vector<32x32xf32> -> vector<32x32xf32>
    %c0_10 = arith.constant 0 : index
    %c0_11 = arith.constant 0 : index
    %c0_12 = arith.constant 0 : index
    %26 = vector.load %arg13[%c0_10, %c0_11, %c0_12] : memref<1x1x32xf32, #tpu.memory_space<vmem>>, vector<1x1x32xf32>
    %27 = vector.shape_cast %26 : vector<1x1x32xf32> to vector<1x32xf32>
    %28 = vector.broadcast %27 : vector<1x32xf32> to vector<32x32xf32>
    %29 = arith.addf %25, %28 : vector<32x32xf32>
    %c0_13 = arith.constant 0 : index
    %c0_14 = arith.constant 0 : index
    %c0_15 = arith.constant 0 : index
    %30 = vector.load %arg11[%c0_13, %c0_14, %c0_15] : memref<1x32x32xbf16, #tpu.memory_space<vmem>>, vector<1x32x32xbf16>
    %31 = vector.shape_cast %30 : vector<1x32x32xbf16> to vector<32x32xbf16>
    %cst_16 = arith.constant dense<0.000000e+00> : vector<32x32xf32>
    %32 = tpu.matmul %22, %31, %cst_16 {dimension_numbers = #tpu.dot_dimension_numbers<[1], [0], [0], [1], [0, 0, 1, 1], [], []>} : vector<32x32xbf16>, vector<32x32xbf16>, vector<32x32xf32> -> vector<32x32xf32>
    %c0_17 = arith.constant 0 : index
    %c0_18 = arith.constant 0 : index
    %c0_19 = arith.constant 0 : index
    %33 = vector.load %arg14[%c0_17, %c0_18, %c0_19] : memref<1x1x32xf32, #tpu.memory_space<vmem>>, vector<1x1x32xf32>
    %34 = vector.shape_cast %33 : vector<1x1x32xf32> to vector<1x32xf32>
    %35 = vector.broadcast %34 : vector<1x32xf32> to vector<32x32xf32>
    %36 = arith.addf %32, %35 : vector<32x32xf32>
    %c0_20 = arith.constant 0 : index
    %c0_21 = arith.constant 0 : index
    %c0_22 = arith.constant 0 : index
    %37 = vector.load %arg12[%c0_20, %c0_21, %c0_22] : memref<1x32x32xbf16, #tpu.memory_space<vmem>>, vector<1x32x32xbf16>
    %38 = vector.shape_cast %37 : vector<1x32x32xbf16> to vector<32x32xbf16>
    %cst_23 = arith.constant dense<0.000000e+00> : vector<32x32xf32>
    %39 = tpu.matmul %22, %38, %cst_23 {dimension_numbers = #tpu.dot_dimension_numbers<[1], [0], [0], [1], [0, 0, 1, 1], [], []>} : vector<32x32xbf16>, vector<32x32xbf16>, vector<32x32xf32> -> vector<32x32xf32>
    %c0_24 = arith.constant 0 : index
    %c0_25 = arith.constant 0 : index
    %c0_26 = arith.constant 0 : index
    %40 = vector.load %arg15[%c0_24, %c0_25, %c0_26] : memref<1x1x32xf32, #tpu.memory_space<vmem>>, vector<1x1x32xf32>
    %41 = vector.shape_cast %40 : vector<1x1x32xf32> to vector<1x32xf32>
    %42 = vector.broadcast %41 : vector<1x32xf32> to vector<32x32xf32>
    %43 = arith.addf %39, %42 : vector<32x32xf32>
    %c0_27 = arith.constant 0 : index
    %44 = memref.load %arg1[%c0_27] : memref<2xi32, #tpu.memory_space<smem>>
    %45 = arith.index_cast %44 : i32 to index
    %c0_28 = arith.constant 0 : index
    %c0_29 = arith.constant 0 : index
    %46 = vector.load %arg4[%45, %c0_28, %c0_29] : memref<2x16x16xf32, #tpu.memory_space<vmem>>, vector<1x16x16xf32>
    %47 = vector.shape_cast %46 : vector<1x16x16xf32> to vector<16x16xf32>
    %48 = vector.extract_strided_slice %29 {offsets = [0, 0], sizes = [16, 8], strides = [1, 1]} : vector<32x32xf32> to vector<16x8xf32>
    %49 = vector.extract_strided_slice %36 {offsets = [0, 0], sizes = [16, 8], strides = [1, 1]} : vector<32x32xf32> to vector<16x8xf32>
    %50 = vector.extract_strided_slice %43 {offsets = [0, 0], sizes = [16, 8], strides = [1, 1]} : vector<32x32xf32> to vector<16x8xf32>
    %51 = vector.extract_strided_slice %29 {offsets = [0, 8], sizes = [16, 8], strides = [1, 1]} : vector<32x32xf32> to vector<16x8xf32>
    %52 = vector.extract_strided_slice %36 {offsets = [0, 8], sizes = [16, 8], strides = [1, 1]} : vector<32x32xf32> to vector<16x8xf32>
    %53 = vector.extract_strided_slice %43 {offsets = [0, 8], sizes = [16, 8], strides = [1, 1]} : vector<32x32xf32> to vector<16x8xf32>
    %54 = vector.extract_strided_slice %29 {offsets = [0, 16], sizes = [16, 8], strides = [1, 1]} : vector<32x32xf32> to vector<16x8xf32>
    %55 = vector.extract_strided_slice %36 {offsets = [0, 16], sizes = [16, 8], strides = [1, 1]} : vector<32x32xf32> to vector<16x8xf32>
    %56 = vector.extract_strided_slice %43 {offsets = [0, 16], sizes = [16, 8], strides = [1, 1]} : vector<32x32xf32> to vector<16x8xf32>
    %57 = vector.extract_strided_slice %29 {offsets = [0, 24], sizes = [16, 8], strides = [1, 1]} : vector<32x32xf32> to vector<16x8xf32>
    %58 = vector.extract_strided_slice %36 {offsets = [0, 24], sizes = [16, 8], strides = [1, 1]} : vector<32x32xf32> to vector<16x8xf32>
    %59 = vector.extract_strided_slice %43 {offsets = [0, 24], sizes = [16, 8], strides = [1, 1]} : vector<32x32xf32> to vector<16x8xf32>
    %c1 = arith.constant 1 : index
    %60 = memref.load %arg1[%c1] : memref<2xi32, #tpu.memory_space<smem>>
    %61 = arith.index_cast %60 : i32 to index
    %c0_30 = arith.constant 0 : index
    %c0_31 = arith.constant 0 : index
    %62 = vector.load %arg4[%61, %c0_30, %c0_31] : memref<2x16x16xf32, #tpu.memory_space<vmem>>, vector<1x16x16xf32>
    %63 = vector.shape_cast %62 : vector<1x16x16xf32> to vector<16x16xf32>
    %64 = vector.extract_strided_slice %29 {offsets = [16, 0], sizes = [16, 8], strides = [1, 1]} : vector<32x32xf32> to vector<16x8xf32>
    %65 = vector.extract_strided_slice %36 {offsets = [16, 0], sizes = [16, 8], strides = [1, 1]} : vector<32x32xf32> to vector<16x8xf32>
    %66 = vector.extract_strided_slice %43 {offsets = [16, 0], sizes = [16, 8], strides = [1, 1]} : vector<32x32xf32> to vector<16x8xf32>
    %67 = vector.extract_strided_slice %29 {offsets = [16, 8], sizes = [16, 8], strides = [1, 1]} : vector<32x32xf32> to vector<16x8xf32>
    %68 = vector.extract_strided_slice %36 {offsets = [16, 8], sizes = [16, 8], strides = [1, 1]} : vector<32x32xf32> to vector<16x8xf32>
    %69 = vector.extract_strided_slice %43 {offsets = [16, 8], sizes = [16, 8], strides = [1, 1]} : vector<32x32xf32> to vector<16x8xf32>
    %70 = vector.extract_strided_slice %29 {offsets = [16, 16], sizes = [16, 8], strides = [1, 1]} : vector<32x32xf32> to vector<16x8xf32>
    %71 = vector.extract_strided_slice %36 {offsets = [16, 16], sizes = [16, 8], strides = [1, 1]} : vector<32x32xf32> to vector<16x8xf32>
    %72 = vector.extract_strided_slice %43 {offsets = [16, 16], sizes = [16, 8], strides = [1, 1]} : vector<32x32xf32> to vector<16x8xf32>
    %73 = vector.extract_strided_slice %29 {offsets = [16, 24], sizes = [16, 8], strides = [1, 1]} : vector<32x32xf32> to vector<16x8xf32>
    %74 = vector.extract_strided_slice %36 {offsets = [16, 24], sizes = [16, 8], strides = [1, 1]} : vector<32x32xf32> to vector<16x8xf32>
    %75 = vector.extract_strided_slice %43 {offsets = [16, 24], sizes = [16, 8], strides = [1, 1]} : vector<32x32xf32> to vector<16x8xf32>
    %76 = vector.shape_cast %48 : vector<16x8xf32> to vector<1x16x8xf32>
    %77 = vector.shape_cast %51 : vector<16x8xf32> to vector<1x16x8xf32>
    %78 = vector.shape_cast %54 : vector<16x8xf32> to vector<1x16x8xf32>
    %79 = vector.shape_cast %57 : vector<16x8xf32> to vector<1x16x8xf32>
    %80 = vector.shape_cast %64 : vector<16x8xf32> to vector<1x16x8xf32>
    %81 = vector.shape_cast %67 : vector<16x8xf32> to vector<1x16x8xf32>
    %82 = vector.shape_cast %70 : vector<16x8xf32> to vector<1x16x8xf32>
    %83 = vector.shape_cast %73 : vector<16x8xf32> to vector<1x16x8xf32>
    %84 = tpu.concatenate %76, %77, %78, %79, %80, %81, %82, %83 in 0 : vector<1x16x8xf32>, vector<1x16x8xf32>, vector<1x16x8xf32>, vector<1x16x8xf32>, vector<1x16x8xf32>, vector<1x16x8xf32>, vector<1x16x8xf32>, vector<1x16x8xf32> -> vector<8x16x8xf32>
    %85 = arith.truncf %84 : vector<8x16x8xf32> to vector<8x16x8xbf16>
    %86 = vector.shape_cast %49 : vector<16x8xf32> to vector<1x16x8xf32>
    %87 = vector.shape_cast %52 : vector<16x8xf32> to vector<1x16x8xf32>
    %88 = vector.shape_cast %55 : vector<16x8xf32> to vector<1x16x8xf32>
    %89 = vector.shape_cast %58 : vector<16x8xf32> to vector<1x16x8xf32>
    %90 = vector.shape_cast %65 : vector<16x8xf32> to vector<1x16x8xf32>
    %91 = vector.shape_cast %68 : vector<16x8xf32> to vector<1x16x8xf32>
    %92 = vector.shape_cast %71 : vector<16x8xf32> to vector<1x16x8xf32>
    %93 = vector.shape_cast %74 : vector<16x8xf32> to vector<1x16x8xf32>
    %94 = tpu.concatenate %86, %87, %88, %89, %90, %91, %92, %93 in 0 : vector<1x16x8xf32>, vector<1x16x8xf32>, vector<1x16x8xf32>, vector<1x16x8xf32>, vector<1x16x8xf32>, vector<1x16x8xf32>, vector<1x16x8xf32>, vector<1x16x8xf32> -> vector<8x16x8xf32>
    %95 = arith.truncf %94 : vector<8x16x8xf32> to vector<8x16x8xbf16>
    %96 = vector.shape_cast %50 : vector<16x8xf32> to vector<1x16x8xf32>
    %97 = vector.shape_cast %53 : vector<16x8xf32> to vector<1x16x8xf32>
    %98 = vector.shape_cast %56 : vector<16x8xf32> to vector<1x16x8xf32>
    %99 = vector.shape_cast %59 : vector<16x8xf32> to vector<1x16x8xf32>
    %100 = vector.shape_cast %66 : vector<16x8xf32> to vector<1x16x8xf32>
    %101 = vector.shape_cast %69 : vector<16x8xf32> to vector<1x16x8xf32>
    %102 = vector.shape_cast %72 : vector<16x8xf32> to vector<1x16x8xf32>
    %103 = vector.shape_cast %75 : vector<16x8xf32> to vector<1x16x8xf32>
    %104 = tpu.concatenate %96, %97, %98, %99, %100, %101, %102, %103 in 0 : vector<1x16x8xf32>, vector<1x16x8xf32>, vector<1x16x8xf32>, vector<1x16x8xf32>, vector<1x16x8xf32>, vector<1x16x8xf32>, vector<1x16x8xf32>, vector<1x16x8xf32> -> vector<8x16x8xf32>
    %105 = arith.truncf %104 : vector<8x16x8xf32> to vector<8x16x8xbf16>
    %106 = vector.shape_cast %47 : vector<16x16xf32> to vector<1x16x16xf32>
    %107 = vector.shape_cast %47 : vector<16x16xf32> to vector<1x16x16xf32>
    %108 = vector.shape_cast %47 : vector<16x16xf32> to vector<1x16x16xf32>
    %109 = vector.shape_cast %47 : vector<16x16xf32> to vector<1x16x16xf32>
    %110 = vector.shape_cast %63 : vector<16x16xf32> to vector<1x16x16xf32>
    %111 = vector.shape_cast %63 : vector<16x16xf32> to vector<1x16x16xf32>
    %112 = vector.shape_cast %63 : vector<16x16xf32> to vector<1x16x16xf32>
    %113 = vector.shape_cast %63 : vector<16x16xf32> to vector<1x16x16xf32>
    %114 = tpu.concatenate %106, %107, %108, %109, %110, %111, %112, %113 in 0 : vector<1x16x16xf32>, vector<1x16x16xf32>, vector<1x16x16xf32>, vector<1x16x16xf32>, vector<1x16x16xf32>, vector<1x16x16xf32>, vector<1x16x16xf32>, vector<1x16x16xf32> -> vector<8x16x16xf32>
    "tpu.trace_start"() <{level = 10 : i32, message = "bnd,bmd->bnm"}> : () -> ()
    %cst_32 = arith.constant dense<0.000000e+00> : vector<8x16x16xf32>
    %115 = tpu.matmul %85, %95, %cst_32 {dimension_numbers = #tpu.dot_dimension_numbers<[2], [2], [1], [1], [0, 0, 0, 1, 1, 1], [0], [0]>} : vector<8x16x8xbf16>, vector<8x16x8xbf16>, vector<8x16x16xf32> -> vector<8x16x16xf32>
    "tpu.trace_stop"() : () -> ()
    %116 = arith.addf %115, %114 : vector<8x16x16xf32>
    %cst_33 = arith.constant dense<0xFF800000> : vector<8x16xf32>
    %117 = vector.multi_reduction <maximumf>, %116, %cst_33 [2] : vector<8x16x16xf32> to vector<8x16xf32>
    %118 = vector.shape_cast %117 : vector<8x16xf32> to vector<8x16x1xf32>
    %119 = vector.broadcast %118 : vector<8x16x1xf32> to vector<8x16x16xf32>
    %120 = arith.subf %116, %119 : vector<8x16x16xf32>
    %121 = math.exp %120 : vector<8x16x16xf32>
    %cst_34 = arith.constant dense<0.000000e+00> : vector<8x16xf32>
    %122 = vector.multi_reduction <add>, %121, %cst_34 [2] : vector<8x16x16xf32> to vector<8x16xf32>
    %123 = vector.shape_cast %122 : vector<8x16xf32> to vector<8x16x1xf32>
    %124 = tpu.reciprocal %123 {approx = true} : vector<8x16x1xf32> -> vector<8x16x1xf32>
    %125 = vector.broadcast %124 : vector<8x16x1xf32> to vector<8x16x16xf32>
    %126 = arith.mulf %121, %125 : vector<8x16x16xf32>
    %127 = arith.truncf %126 : vector<8x16x16xf32> to vector<8x16x16xbf16>
    "tpu.trace_start"() <{level = 10 : i32, message = "bnm,bmd->bnd"}> : () -> ()
    %cst_35 = arith.constant dense<0.000000e+00> : vector<8x16x8xf32>
    %128 = tpu.matmul %127, %105, %cst_35 {dimension_numbers = #tpu.dot_dimension_numbers<[2], [1], [1], [2], [0, 0, 0, 1, 1, 2], [0], [0]>} : vector<8x16x16xbf16>, vector<8x16x8xbf16>, vector<8x16x8xf32> -> vector<8x16x8xf32>
    "tpu.trace_stop"() : () -> ()
    %129 = vector.extract_strided_slice %128 {offsets = [0, 0, 0], sizes = [1, 16, 8], strides = [1, 1, 1]} : vector<8x16x8xf32> to vector<1x16x8xf32>
    %130 = vector.shape_cast %129 : vector<1x16x8xf32> to vector<16x8xf32>
    %131 = vector.extract_strided_slice %128 {offsets = [1, 0, 0], sizes = [1, 16, 8], strides = [1, 1, 1]} : vector<8x16x8xf32> to vector<1x16x8xf32>
    %132 = vector.shape_cast %131 : vector<1x16x8xf32> to vector<16x8xf32>
    %133 = vector.extract_strided_slice %128 {offsets = [2, 0, 0], sizes = [1, 16, 8], strides = [1, 1, 1]} : vector<8x16x8xf32> to vector<1x16x8xf32>
    %134 = vector.shape_cast %133 : vector<1x16x8xf32> to vector<16x8xf32>
    %135 = vector.extract_strided_slice %128 {offsets = [3, 0, 0], sizes = [1, 16, 8], strides = [1, 1, 1]} : vector<8x16x8xf32> to vector<1x16x8xf32>
    %136 = vector.shape_cast %135 : vector<1x16x8xf32> to vector<16x8xf32>
    %137 = tpu.concatenate %130, %132, %134, %136 in 1 : vector<16x8xf32>, vector<16x8xf32>, vector<16x8xf32>, vector<16x8xf32> -> vector<16x32xf32>
    %138 = vector.extract_strided_slice %128 {offsets = [4, 0, 0], sizes = [1, 16, 8], strides = [1, 1, 1]} : vector<8x16x8xf32> to vector<1x16x8xf32>
    %139 = vector.shape_cast %138 : vector<1x16x8xf32> to vector<16x8xf32>
    %140 = vector.extract_strided_slice %128 {offsets = [5, 0, 0], sizes = [1, 16, 8], strides = [1, 1, 1]} : vector<8x16x8xf32> to vector<1x16x8xf32>
    %141 = vector.shape_cast %140 : vector<1x16x8xf32> to vector<16x8xf32>
    %142 = vector.extract_strided_slice %128 {offsets = [6, 0, 0], sizes = [1, 16, 8], strides = [1, 1, 1]} : vector<8x16x8xf32> to vector<1x16x8xf32>
    %143 = vector.shape_cast %142 : vector<1x16x8xf32> to vector<16x8xf32>
    %144 = vector.extract_strided_slice %128 {offsets = [7, 0, 0], sizes = [1, 16, 8], strides = [1, 1, 1]} : vector<8x16x8xf32> to vector<1x16x8xf32>
    %145 = vector.shape_cast %144 : vector<1x16x8xf32> to vector<16x8xf32>
    %146 = tpu.concatenate %139, %141, %143, %145 in 1 : vector<16x8xf32>, vector<16x8xf32>, vector<16x8xf32>, vector<16x8xf32> -> vector<16x32xf32>
    %147 = tpu.concatenate %137, %146 in 0 : vector<16x32xf32>, vector<16x32xf32> -> vector<32x32xf32>
    %148 = arith.truncf %147 : vector<32x32xf32> to vector<32x32xbf16>
    %c0_36 = arith.constant 0 : index
    %c0_37 = arith.constant 0 : index
    %c0_38 = arith.constant 0 : index
    %149 = vector.load %arg16[%c0_36, %c0_37, %c0_38] : memref<1x32x32xbf16, #tpu.memory_space<vmem>>, vector<1x32x32xbf16>
    %150 = vector.shape_cast %149 : vector<1x32x32xbf16> to vector<32x32xbf16>
    %cst_39 = arith.constant dense<0.000000e+00> : vector<32x32xf32>
    %151 = tpu.matmul %148, %150, %cst_39 {dimension_numbers = #tpu.dot_dimension_numbers<[1], [0], [0], [1], [0, 0, 1, 1], [], []>} : vector<32x32xbf16>, vector<32x32xbf16>, vector<32x32xf32> -> vector<32x32xf32>
    %152 = arith.addf %151, %3 : vector<32x32xf32>
    %cst_40 = arith.constant dense<0.000000e+00> : vector<32xf32>
    %153 = vector.multi_reduction <add>, %152, %cst_40 [1] : vector<32x32xf32> to vector<32xf32>
    %154 = vector.shape_cast %153 : vector<32xf32> to vector<32x1xf32>
    %cst_41 = arith.constant 3.200000e+01 : f32
    %155 = vector.broadcast %cst_41 : f32 to vector<32x1xf32>
    %156 = arith.divf %154, %155 : vector<32x1xf32>
    %157 = vector.broadcast %156 : vector<32x1xf32> to vector<32x32xf32>
    %158 = arith.subf %152, %157 : vector<32x32xf32>
    %159 = arith.mulf %158, %158 : vector<32x32xf32>
    %cst_42 = arith.constant dense<0.000000e+00> : vector<32xf32>
    %160 = vector.multi_reduction <add>, %159, %cst_42 [1] : vector<32x32xf32> to vector<32xf32>
    %161 = vector.shape_cast %160 : vector<32xf32> to vector<32x1xf32>
    %cst_43 = arith.constant 3.200000e+01 : f32
    %162 = vector.broadcast %cst_43 : f32 to vector<32x1xf32>
    %163 = arith.divf %161, %162 : vector<32x1xf32>
    %164 = vector.broadcast %156 : vector<32x1xf32> to vector<32x32xf32>
    %165 = arith.subf %152, %164 : vector<32x32xf32>
    %cst_44 = arith.constant 9.99999974E-6 : f32
    %166 = vector.broadcast %cst_44 : f32 to vector<32x1xf32>
    %167 = arith.addf %163, %166 : vector<32x1xf32>
    %168 = math.rsqrt %167 : vector<32x1xf32>
    %169 = vector.broadcast %168 : vector<32x1xf32> to vector<32x32xf32>
    %170 = arith.mulf %165, %169 : vector<32x32xf32>
    %171 = arith.truncf %170 : vector<32x32xf32> to vector<32x32xbf16>
    %c0_45 = arith.constant 0 : index
    %c0_46 = arith.constant 0 : index
    %c0_47 = arith.constant 0 : index
    %172 = vector.load %arg17[%c0_45, %c0_46, %c0_47] : memref<1x32x64xbf16, #tpu.memory_space<vmem>>, vector<1x32x64xbf16>
    %173 = vector.shape_cast %172 : vector<1x32x64xbf16> to vector<32x64xbf16>
    %cst_48 = arith.constant dense<0.000000e+00> : vector<32x64xf32>
    %174 = tpu.matmul %171, %173, %cst_48 {dimension_numbers = #tpu.dot_dimension_numbers<[1], [0], [0], [1], [0, 0, 1, 1], [], []>} : vector<32x32xbf16>, vector<32x64xbf16>, vector<32x64xf32> -> vector<32x64xf32>
    %c0_49 = arith.constant 0 : index
    %c0_50 = arith.constant 0 : index
    %c0_51 = arith.constant 0 : index
    %175 = vector.load %arg18[%c0_49, %c0_50, %c0_51] : memref<1x1x64xf32, #tpu.memory_space<vmem>>, vector<1x1x64xf32>
    %176 = vector.shape_cast %175 : vector<1x1x64xf32> to vector<1x64xf32>
    %177 = vector.broadcast %176 : vector<1x64xf32> to vector<32x64xf32>
    %178 = arith.addf %174, %177 : vector<32x64xf32>
    %cst_52 = arith.constant 5.000000e-01 : f32
    %179 = vector.broadcast %cst_52 : f32 to vector<32x64xf32>
    %180 = arith.mulf %179, %178 : vector<32x64xf32>
    %cst_53 = arith.constant 0.707106769 : f32
    %181 = vector.broadcast %cst_53 : f32 to vector<32x64xf32>
    %182 = arith.mulf %178, %181 : vector<32x64xf32>
    %183 = math.erf %182 : vector<32x64xf32>
    %cst_54 = arith.constant 1.000000e+00 : f32
    %184 = vector.broadcast %cst_54 : f32 to vector<32x64xf32>
    %185 = arith.addf %184, %183 : vector<32x64xf32>
    %186 = arith.mulf %180, %185 : vector<32x64xf32>
    %187 = arith.truncf %186 : vector<32x64xf32> to vector<32x64xbf16>
    %c0_55 = arith.constant 0 : index
    %c0_56 = arith.constant 0 : index
    %c0_57 = arith.constant 0 : index
    %188 = vector.load %arg19[%c0_55, %c0_56, %c0_57] : memref<1x64x32xbf16, #tpu.memory_space<vmem>>, vector<1x64x32xbf16>
    %189 = vector.shape_cast %188 : vector<1x64x32xbf16> to vector<64x32xbf16>
    %cst_58 = arith.constant dense<0.000000e+00> : vector<32x32xf32>
    %190 = tpu.matmul %187, %189, %cst_58 {dimension_numbers = #tpu.dot_dimension_numbers<[1], [0], [0], [1], [0, 0, 1, 1], [], []>} : vector<32x64xbf16>, vector<64x32xbf16>, vector<32x32xf32> -> vector<32x32xf32>
    %c0_59 = arith.constant 0 : index
    %c0_60 = arith.constant 0 : index
    %c0_61 = arith.constant 0 : index
    %191 = vector.load %arg20[%c0_59, %c0_60, %c0_61] : memref<1x1x32xf32, #tpu.memory_space<vmem>>, vector<1x1x32xf32>
    %192 = vector.shape_cast %191 : vector<1x1x32xf32> to vector<1x32xf32>
    %193 = vector.broadcast %192 : vector<1x32xf32> to vector<32x32xf32>
    %194 = arith.addf %190, %193 : vector<32x32xf32>
    %195 = arith.addf %194, %152 : vector<32x32xf32>
    %c0_62 = arith.constant 0 : index
    %c0_63 = arith.constant 0 : index
    %196 = vector.load %arg22[%c0_62, %c0_63] : memref<32x32xf32, #tpu.memory_space<vmem>>, vector<32x32xf32>
    tpu.vector_store %arg22[%c0_62, %c0_63], %195 {strides = array<i32>} : memref<32x32xf32, #tpu.memory_space<vmem>>, vector<32x32xf32>,
    %c1_i32 = arith.constant 1 : i32
    %197 = arith.cmpi eq, %arg0, %c1_i32 : i32
    %198 = arith.extui %197 : i1 to i32
    %c0_i32_64 = arith.constant 0 : i32
    %199 = arith.cmpi ne, %198, %c0_i32_64 : i32
    scf.if %199 {
      %c0_65 = arith.constant 0 : index
      %c0_66 = arith.constant 0 : index
      %200 = vector.load %arg5[%c0_65, %c0_66] : memref<32x1xf32, #tpu.memory_space<vmem>>, vector<32x1xf32>
      %201 = vector.broadcast %200 : vector<32x1xf32> to vector<32x32xf32>
      %202 = arith.mulf %195, %201 : vector<32x32xf32>
      %203 = vector.extract_strided_slice %202 {offsets = [0, 0], sizes = [16, 32], strides = [1, 1]} : vector<32x32xf32> to vector<16x32xf32>
      %cst_67 = arith.constant dense<0.000000e+00> : vector<32xf32>
      %204 = vector.multi_reduction <add>, %203, %cst_67 [0] : vector<16x32xf32> to vector<32xf32>
      %205 = vector.shape_cast %204 : vector<32xf32> to vector<1x32xf32>
      %c0_68 = arith.constant 0 : index
      %c0_69 = arith.constant 0 : index
      %206 = vector.load %arg21[%c0_68, %c0_69] : memref<2x32xf32, #tpu.memory_space<vmem>>, vector<1x32xf32>
      tpu.vector_store %arg21[%c0_68, %c0_69], %205 {strides = array<i32>} : memref<2x32xf32, #tpu.memory_space<vmem>>, vector<1x32xf32>,
      %207 = vector.extract_strided_slice %202 {offsets = [16, 0], sizes = [16, 32], strides = [1, 1]} : vector<32x32xf32> to vector<16x32xf32>
      %cst_70 = arith.constant dense<0.000000e+00> : vector<32xf32>
      %208 = vector.multi_reduction <add>, %207, %cst_70 [0] : vector<16x32xf32> to vector<32xf32>
      %209 = vector.shape_cast %208 : vector<32xf32> to vector<1x32xf32>
      %c1_71 = arith.constant 1 : index
      %c0_72 = arith.constant 0 : index
      %210 = vector.load %arg21[%c1_71, %c0_72] : memref<2x32xf32, #tpu.memory_space<vmem>>, vector<1x32xf32>
      tpu.vector_store %arg21[%c1_71, %c0_72], %209 {strides = array<i32>} : memref<2x32xf32, #tpu.memory_space<vmem>>, vector<1x32xf32>,
    } else {
    }
    return
  }
  func.func @transform_0(%arg0: i32, %arg1: memref<2xi32, #tpu.memory_space<smem>>) -> (i32, i32) {
    %c0_i32 = arith.constant 0 : i32
    %c0_i32_0 = arith.constant 0 : i32
    %c0_i32_1 = arith.constant 0 : i32
    return %c0_i32, %c0_i32_0 : i32, i32
  }
  func.func @transform_1(%arg0: i32, %arg1: memref<2xi32, #tpu.memory_space<smem>>) -> (i32, i32) {
    %c0_i32 = arith.constant 0 : i32
    %c0_i32_0 = arith.constant 0 : i32
    %c0_i32_1 = arith.constant 0 : i32
    return %c0_i32, %c0_i32_0 : i32, i32
  }
  func.func @transform_2(%arg0: i32, %arg1: memref<2xi32, #tpu.memory_space<smem>>) -> (i32, i32, i32) {
    %c0_i32 = arith.constant 0 : i32
    %c0_i32_0 = arith.constant 0 : i32
    %c0_i32_1 = arith.constant 0 : i32
    %c0_i32_2 = arith.constant 0 : i32
    return %c0_i32, %c0_i32_0, %c0_i32_1 : i32, i32, i32
  }
  func.func @transform_3(%arg0: i32, %arg1: memref<2xi32, #tpu.memory_space<smem>>) -> (i32, i32) {
    %c0_i32 = arith.constant 0 : i32
    %c0_i32_0 = arith.constant 0 : i32
    %c0_i32_1 = arith.constant 0 : i32
    return %c0_i32, %c0_i32_0 : i32, i32
  }
  func.func @transform_4(%arg0: i32, %arg1: memref<2xi32, #tpu.memory_space<smem>>) -> (i32, i32) {
    %c0_i32 = arith.constant 0 : i32
    %c0_i32_0 = arith.constant 0 : i32
    %c0_i32_1 = arith.constant 0 : i32
    return %c0_i32, %c0_i32_0 : i32, i32
  }
  func.func @transform_5(%arg0: i32, %arg1: memref<2xi32, #tpu.memory_space<smem>>) -> (i32, i32) {
    %c0_i32 = arith.constant 0 : i32
    %c0_i32_0 = arith.constant 0 : i32
    %c0_i32_1 = arith.constant 0 : i32
    return %c0_i32, %c0_i32_0 : i32, i32
  }
  func.func @transform_6(%arg0: i32, %arg1: memref<2xi32, #tpu.memory_space<smem>>) -> (i32, i32) {
    %c0_i32 = arith.constant 0 : i32
    %c0_i32_0 = arith.constant 0 : i32
    %c0_i32_1 = arith.constant 0 : i32
    return %c0_i32, %c0_i32_0 : i32, i32
  }
  func.func @transform_7(%arg0: i32, %arg1: memref<2xi32, #tpu.memory_space<smem>>) -> (i32, i32) {
    %c0_i32 = arith.constant 0 : i32
    %c0_i32_0 = arith.constant 0 : i32
    %c0_i32_1 = arith.constant 0 : i32
    return %c0_i32, %c0_i32_0 : i32, i32
  }
  func.func @transform_8(%arg0: i32, %arg1: memref<2xi32, #tpu.memory_space<smem>>) -> (i32, i32, i32) {
    %c0_i32 = arith.constant 0 : i32
    %c0_i32_0 = arith.constant 0 : i32
    %c0_i32_1 = arith.constant 0 : i32
    return %arg0, %c0_i32, %c0_i32_0 : i32, i32, i32
  }
  func.func @transform_9(%arg0: i32, %arg1: memref<2xi32, #tpu.memory_space<smem>>) -> (i32, i32, i32) {
    %c0_i32 = arith.constant 0 : i32
    %c0_i32_0 = arith.constant 0 : i32
    %c0_i32_1 = arith.constant 0 : i32
    return %arg0, %c0_i32, %c0_i32_0 : i32, i32, i32
  }
  func.func @transform_10(%arg0: i32, %arg1: memref<2xi32, #tpu.memory_space<smem>>) -> (i32, i32, i32) {
    %c0_i32 = arith.constant 0 : i32
    %c0_i32_0 = arith.constant 0 : i32
    %c0_i32_1 = arith.constant 0 : i32
    return %arg0, %c0_i32, %c0_i32_0 : i32, i32, i32
  }
  func.func @transform_11(%arg0: i32, %arg1: memref<2xi32, #tpu.memory_space<smem>>) -> (i32, i32, i32) {
    %c0_i32 = arith.constant 0 : i32
    %c0_i32_0 = arith.constant 0 : i32
    %c0_i32_1 = arith.constant 0 : i32
    return %arg0, %c0_i32, %c0_i32_0 : i32, i32, i32
  }
  func.func @transform_12(%arg0: i32, %arg1: memref<2xi32, #tpu.memory_space<smem>>) -> (i32, i32, i32) {
    %c0_i32 = arith.constant 0 : i32
    %c0_i32_0 = arith.constant 0 : i32
    %c0_i32_1 = arith.constant 0 : i32
    return %arg0, %c0_i32, %c0_i32_0 : i32, i32, i32
  }
  func.func @transform_13(%arg0: i32, %arg1: memref<2xi32, #tpu.memory_space<smem>>) -> (i32, i32, i32) {
    %c0_i32 = arith.constant 0 : i32
    %c0_i32_0 = arith.constant 0 : i32
    %c0_i32_1 = arith.constant 0 : i32
    return %arg0, %c0_i32, %c0_i32_0 : i32, i32, i32
  }
  func.func @transform_14(%arg0: i32, %arg1: memref<2xi32, #tpu.memory_space<smem>>) -> (i32, i32, i32) {
    %c0_i32 = arith.constant 0 : i32
    %c0_i32_0 = arith.constant 0 : i32
    %c0_i32_1 = arith.constant 0 : i32
    return %arg0, %c0_i32, %c0_i32_0 : i32, i32, i32
  }
  func.func @transform_15(%arg0: i32, %arg1: memref<2xi32, #tpu.memory_space<smem>>) -> (i32, i32, i32) {
    %c0_i32 = arith.constant 0 : i32
    %c0_i32_0 = arith.constant 0 : i32
    %c0_i32_1 = arith.constant 0 : i32
    return %arg0, %c0_i32, %c0_i32_0 : i32, i32, i32
  }
  func.func @transform_16(%arg0: i32, %arg1: memref<2xi32, #tpu.memory_space<smem>>) -> (i32, i32, i32) {
    %c0_i32 = arith.constant 0 : i32
    %c0_i32_0 = arith.constant 0 : i32
    %c0_i32_1 = arith.constant 0 : i32
    return %arg0, %c0_i32, %c0_i32_0 : i32, i32, i32
  }
  func.func @transform_17(%arg0: i32, %arg1: memref<2xi32, #tpu.memory_space<smem>>) -> (i32, i32, i32) {
    %c0_i32 = arith.constant 0 : i32
    %c0_i32_0 = arith.constant 0 : i32
    %c0_i32_1 = arith.constant 0 : i32
    return %arg0, %c0_i32, %c0_i32_0 : i32, i32, i32
  }
  func.func @transform_18(%arg0: i32, %arg1: memref<2xi32, #tpu.memory_space<smem>>) -> (i32, i32, i32) {
    %c0_i32 = arith.constant 0 : i32
    %c0_i32_0 = arith.constant 0 : i32
    %c0_i32_1 = arith.constant 0 : i32
    return %arg0, %c0_i32, %c0_i32_0 : i32, i32, i32
  }
  func.func @transform_19(%arg0: i32, %arg1: memref<2xi32, #tpu.memory_space<smem>>) -> (i32, i32) {
    %c0_i32 = arith.constant 0 : i32
    %c0_i32_0 = arith.constant 0 : i32
    %c0_i32_1 = arith.constant 0 : i32
    return %c0_i32, %c0_i32_0 : i32, i32
  }
}

</mosaic_0001>

<llo_original>
// kernel: tpu_custom_call.1
$region0: #{tpu_custom_call.1}
  #allocation0 [shape = 'u32[]', space=smem, size = 0x4, offset = 0x4, fixed_abs, tag = 'smem constant byte address 0x4 - core index']
  #allocation1 [shape = 'u32[72,128]{1,0:T(1,128)}', space=vmem, size = 0x9000, scoped, tag = 'internal scratch']
  #allocation2 [shape = 'f32[32,32]{1,0:T(8,128)}', space=vmem, size = 0x4000, scoped, tag = 'scratch operand']
  #allocation3 [shape = 's32[1]{0}', space=sflag, size = 0x4, scoped, tag = 'scoped memory for tpu_custom_call.1']
  #allocation4 [shape = 'u8[512]{0}', space=smem, size = 0x200, scoped, tag = 'prefetched SMEM operand 0']
  %s0 = inlined_call_operand.hbm [shape: s32[2], index: 0, kind: input, shape index: {}]
  %s1 = inlined_call_operand.vmem [shape: f32[32,48], index: 1, kind: input, shape index: {}]
  %s2 = inlined_call_operand.hbm [shape: f32[16,32], index: 2, kind: input, shape index: {}]
  %s3 = inlined_call_operand.vmem [shape: f32[2,16,16], index: 3, kind: input, shape index: {}]
  %s4 = inlined_call_operand.vmem [shape: f32[32,1], index: 4, kind: input, shape index: {}]
  %s5 = inlined_call_operand.vmem [shape: bf16[48,32], index: 5, kind: input, shape index: {}]
  %s6 = inlined_call_operand.vmem [shape: f32[1,32], index: 6, kind: input, shape index: {}]
  %s7 = inlined_call_operand.vmem [shape: f32[1,32], index: 7, kind: input, shape index: {}]
  %s8 = inlined_call_operand.vmem [shape: f32[1,32], index: 8, kind: input, shape index: {}]
  %s9 = inlined_call_operand.vmem [shape: bf16[2,32,32], index: 9, kind: input, shape index: {}]
  %s10 = inlined_call_operand.vmem [shape: bf16[2,32,32], index: 10, kind: input, shape index: {}]
  %s11 = inlined_call_operand.hbm [shape: bf16[2,32,32], index: 11, kind: input, shape index: {}]
  %s12 = inlined_call_operand.vmem [shape: f32[2,1,32], index: 12, kind: input, shape index: {}]
  %s13 = inlined_call_operand.vmem [shape: f32[2,1,32], index: 13, kind: input, shape index: {}]
  %s14 = inlined_call_operand.vmem [shape: f32[2,1,32], index: 14, kind: input, shape index: {}]
  %s15 = inlined_call_operand.hbm [shape: bf16[2,32,32], index: 15, kind: input, shape index: {}]
  %s16 = inlined_call_operand.hbm [shape: bf16[2,32,64], index: 16, kind: input, shape index: {}]
  %s17 = inlined_call_operand.vmem [shape: f32[2,1,64], index: 17, kind: input, shape index: {}]
  %s18 = inlined_call_operand.vmem [shape: bf16[2,64,32], index: 18, kind: input, shape index: {}]
  %s19 = inlined_call_operand.vmem [shape: f32[2,1,32], index: 19, kind: input, shape index: {}]
  %s20 = inlined_call_operand.hbm [shape: f32[2,32], index: 20, kind: output, shape index: {}]
  %s21 = sld [smem:[#allocation0]]
  $region133: #{tpu_custom_call.1} parent=0
    _
  %s23 = ssub.s32 1, %s21
  %s24 = scalar_select 0, %s23, %s21
  %s26 = sshll.u32 %s0, 4
  %s27 = int_to_ptr.hbm [resolvable:$true] %s26
  %29 = dma.hbm_to_smem %s27, 16, [#allocation4], [#allocation3]
  %31 = dma.done [#allocation3], 16
  %32 = sfence
  $region1: #{tpu_custom_call.1} parent=0
    #allocation5 [shape = 'u8[8192]{0}', space=vmem, size = 0x2000, scoped, tag = 'input window, operand 2, single buffered']
    #allocation6 [shape = 's32[2]{0}', space=sflag, size = 0x8, scoped, tag = 'scoped memory for tpu_custom_call.1']
    #allocation7 [shape = 's32[2]{0}', space=sflag, size = 0x8, scoped, tag = 'scoped memory for tpu_custom_call.1']
    #allocation8 [shape = 'u8[16384]{0}', space=vmem, size = 0x4000, scoped, tag = 'input window, operand 11']
    #allocation9 [shape = 's32[2]{0}', space=sflag, size = 0x8, scoped, tag = 'scoped memory for tpu_custom_call.1']
    #allocation10 [shape = 'u8[16384]{0}', space=vmem, size = 0x4000, scoped, tag = 'input window, operand 15']
    #allocation11 [shape = 'u8[16384]{0}', space=vmem, size = 0x4000, scoped, tag = 'input window, operand 16']
    #allocation12 [shape = 's32[2]{0}', space=sflag, size = 0x8, scoped, tag = 'scoped memory for tpu_custom_call.1']
    #allocation13 [shape = 'u8[1024]{0}', space=vmem, size = 0x400, scoped, tag = 'output window, operand 0, single buffered']
    %33 = vsyncpa [#allocation6], 0
    %34 = vsyncpa [#allocation9], 0
    %s35 = scalar_lea.sflag [#allocation9], 1
    %36 = vsyncpa %s35, 0
    %37 = vsyncpa [#allocation12], 0
    %s38 = scalar_lea.sflag [#allocation12], 1
    %39 = vsyncpa %s38, 0
    %40 = vsyncpa [#allocation7], 0
    loop: start=0, step=1, limit=4
    $region2: #{tpu_custom_call.1} parent=1 // loop_pre_header
      _
    $region3: #{tpu_custom_call.1} parent=1 // loop_header
      %s42 = sphi 0, %s46
      %p43 = scmp.ge.s32.totalorder %s42, 4
      %s50 = sphi 0, %s50
      %s52 = sphi 0, %s50
      %s53 = sphi 0, %s52
      %s67 = sphi 0, %s53
      %s71 = sphi 0, %s71
      %s73 = sphi 0, %s71
      %s74 = sphi 0, %s73
      %s88 = sphi 0, %s74
      %s92 = sphi 0, %s92
      %s94 = sphi 0, %s92
      %s95 = sphi 0, %s94
      %s109 = sphi 0, %s95
      %s113 = sphi 0, %s113
      %s115 = sphi 0, %s113
      %s116 = sphi 0, %s115
      %s130 = sphi 0, %s116
      %s134 = sphi 0, %s134
      %s136 = sphi 0, %s134
      %s137 = sphi 0, %s136
      %s151 = sphi 0, %s137
      %s155 = sphi 0, %s155
      %s157 = sphi 0, %s155
      %s158 = sphi 0, %s157
      %s172 = sphi 0, %s158
      %s176 = sphi 0, %s176
      %s178 = sphi 0, %s176
      %s179 = sphi 0, %s178
      %s193 = sphi 0, %s179
      %s197 = sphi 0, %s197
      %s199 = sphi 0, %s197
      %s200 = sphi 0, %s199
      %s214 = sphi 0, %s200
      %s220 = sphi 0, %s222
      %s223 = sphi 0, %s220
      %s224 = sphi 0, %s223
      %s240 = sphi 0, %s224
      %s246 = sphi 0, %s248
      %s249 = sphi 0, %s246
      %s250 = sphi 0, %s249
      %s266 = sphi 0, %s250
      %s272 = sphi 0, %s274
      %s275 = sphi 0, %s272
      %s276 = sphi 0, %s275
      %s292 = sphi 0, %s276
      %s298 = sphi 0, %s300
      %s301 = sphi 0, %s298
      %s302 = sphi 0, %s301
      %s318 = sphi 0, %s302
      %s324 = sphi 0, %s326
      %s327 = sphi 0, %s324
      %s328 = sphi 0, %s327
      %s344 = sphi 0, %s328
      %s350 = sphi 0, %s352
      %s353 = sphi 0, %s350
      %s354 = sphi 0, %s353
      %s370 = sphi 0, %s354
      %s376 = sphi 0, %s378
      %s379 = sphi 0, %s376
      %s380 = sphi 0, %s379
      %s396 = sphi 0, %s380
      %s402 = sphi 0, %s404
      %s405 = sphi 0, %s402
      %s406 = sphi 0, %s405
      %s422 = sphi 0, %s406
      %s428 = sphi 0, %s430
      %s431 = sphi 0, %s428
      %s432 = sphi 0, %s431
      %s448 = sphi 0, %s432
      %s454 = sphi 0, %s456
      %s457 = sphi 0, %s454
      %s458 = sphi 0, %s457
      %s474 = sphi 0, %s458
      %s480 = sphi 0, %s482
      %s483 = sphi 0, %s480
      %s484 = sphi 0, %s483
      %s500 = sphi 0, %s484
      %s504 = sphi 0, %s504
      %s506 = sphi 0, %s504
      %s507 = sphi 0, %s506
      %s521 = sphi 0, %s507
    $region4: #{tpu_custom_call.1} parent=1 // loop_header_branch
      %45 = sbr.rel (%p43) target = $region8
    $region5: #{tpu_custom_call.1} parent=1 // loop_body
      %s47 = ssub.s32 %s42, 1
      %s48 = ssub.s32 %s42, 2
      %s49 = sadd.s32 %s42, 1
      %s51 = sadd.s32 %s50, 1
      %p54 = scmp.eq.s32.totalorder %s42, 1
      %p55 = scmp.ne.s32.totalorder %s50, %s52
      %p56 = scmp.eq.s32.totalorder %s42, 0
      %p57 = por %p55, %p56
      %p58 = scmp.ne.s32.totalorder %s50, %s52
      %p59 = scmp.eq.s32.totalorder %s47, 1
      %p60 = por %p58, %p59
      %p61 = scmp.ne.s32.totalorder %s52, %s53
      %p62 = scmp.eq.s32.totalorder %s47, 0
      %p63 = por %p61, %p62
      %p64 = scmp.ne.s32.totalorder %s52, %s53
      %p65 = scmp.eq.s32.totalorder %s48, 1
      %p66 = por %p64, %p65
      %p68 = scmp.ne.s32.totalorder %s53, %s67
      %p69 = scmp.eq.s32.totalorder %s48, 0
      %p70 = por %p68, %p69
      %s72 = sadd.s32 %s71, 1
      %p75 = scmp.eq.s32.totalorder %s42, 1
      %p76 = scmp.ne.s32.totalorder %s71, %s73
      %p77 = scmp.eq.s32.totalorder %s42, 0
      %p78 = por %p76, %p77
      %p79 = scmp.ne.s32.totalorder %s71, %s73
      %p80 = scmp.eq.s32.totalorder %s47, 1
      %p81 = por %p79, %p80
      %p82 = scmp.ne.s32.totalorder %s73, %s74
      %p83 = scmp.eq.s32.totalorder %s47, 0
      %p84 = por %p82, %p83
      %p85 = scmp.ne.s32.totalorder %s73, %s74
      %p86 = scmp.eq.s32.totalorder %s48, 1
      %p87 = por %p85, %p86
      %p89 = scmp.ne.s32.totalorder %s74, %s88
      %p90 = scmp.eq.s32.totalorder %s48, 0
      %p91 = por %p89, %p90
      %s93 = sadd.s32 %s92, 1
      %p96 = scmp.eq.s32.totalorder %s42, 1
      %p97 = scmp.ne.s32.totalorder %s92, %s94
      %p98 = scmp.eq.s32.totalorder %s42, 0
      %p99 = por %p97, %p98
      %p100 = scmp.ne.s32.totalorder %s92, %s94
      %p101 = scmp.eq.s32.totalorder %s47, 1
      %p102 = por %p100, %p101
      %p103 = scmp.ne.s32.totalorder %s94, %s95
      %p104 = scmp.eq.s32.totalorder %s47, 0
      %p105 = por %p103, %p104
      %p106 = scmp.ne.s32.totalorder %s94, %s95
      %p107 = scmp.eq.s32.totalorder %s48, 1
      %p108 = por %p106, %p107
      %p110 = scmp.ne.s32.totalorder %s95, %s109
      %p111 = scmp.eq.s32.totalorder %s48, 0
      %p112 = por %p110, %p111
      %s114 = sadd.s32 %s113, 1
      %p117 = scmp.eq.s32.totalorder %s42, 1
      %p118 = scmp.ne.s32.totalorder %s113, %s115
      %p119 = scmp.eq.s32.totalorder %s42, 0
      %p120 = por %p118, %p119
      %p121 = scmp.ne.s32.totalorder %s113, %s115
      %p122 = scmp.eq.s32.totalorder %s47, 1
      %p123 = por %p121, %p122
      %p124 = scmp.ne.s32.totalorder %s115, %s116
      %p125 = scmp.eq.s32.totalorder %s47, 0
      %p126 = por %p124, %p125
      %p127 = scmp.ne.s32.totalorder %s115, %s116
      %p128 = scmp.eq.s32.totalorder %s48, 1
      %p129 = por %p127, %p128
      %p131 = scmp.ne.s32.totalorder %s116, %s130
      %p132 = scmp.eq.s32.totalorder %s48, 0
      %p133 = por %p131, %p132
      %s135 = sadd.s32 %s134, 1
      %p138 = scmp.eq.s32.totalorder %s42, 1
      %p139 = scmp.ne.s32.totalorder %s134, %s136
      %p140 = scmp.eq.s32.totalorder %s42, 0
      %p141 = por %p139, %p140
      %p142 = scmp.ne.s32.totalorder %s134, %s136
      %p143 = scmp.eq.s32.totalorder %s47, 1
      %p144 = por %p142, %p143
      %p145 = scmp.ne.s32.totalorder %s136, %s137
      %p146 = scmp.eq.s32.totalorder %s47, 0
      %p147 = por %p145, %p146
      %p148 = scmp.ne.s32.totalorder %s136, %s137
      %p149 = scmp.eq.s32.totalorder %s48, 1
      %p150 = por %p148, %p149
      %p152 = scmp.ne.s32.totalorder %s137, %s151
      %p153 = scmp.eq.s32.totalorder %s48, 0
      %p154 = por %p152, %p153
      %s156 = sadd.s32 %s155, 1
      %p159 = scmp.eq.s32.totalorder %s42, 1
      %p160 = scmp.ne.s32.totalorder %s155, %s157
      %p161 = scmp.eq.s32.totalorder %s42, 0
      %p162 = por %p160, %p161
      %p163 = scmp.ne.s32.totalorder %s155, %s157
      %p164 = scmp.eq.s32.totalorder %s47, 1
      %p165 = por %p163, %p164
      %p166 = scmp.ne.s32.totalorder %s157, %s158
      %p167 = scmp.eq.s32.totalorder %s47, 0
      %p168 = por %p166, %p167
      %p169 = scmp.ne.s32.totalorder %s157, %s158
      %p170 = scmp.eq.s32.totalorder %s48, 1
      %p171 = por %p169, %p170
      %p173 = scmp.ne.s32.totalorder %s158, %s172
      %p174 = scmp.eq.s32.totalorder %s48, 0
      %p175 = por %p173, %p174
      %s177 = sadd.s32 %s176, 1
      %p180 = scmp.eq.s32.totalorder %s42, 1
      %p181 = scmp.ne.s32.totalorder %s176, %s178
      %p182 = scmp.eq.s32.totalorder %s42, 0
      %p183 = por %p181, %p182
      %p184 = scmp.ne.s32.totalorder %s176, %s178
      %p185 = scmp.eq.s32.totalorder %s47, 1
      %p186 = por %p184, %p185
      %p187 = scmp.ne.s32.totalorder %s178, %s179
      %p188 = scmp.eq.s32.totalorder %s47, 0
      %p189 = por %p187, %p188
      %p190 = scmp.ne.s32.totalorder %s178, %s179
      %p191 = scmp.eq.s32.totalorder %s48, 1
      %p192 = por %p190, %p191
      %p194 = scmp.ne.s32.totalorder %s179, %s193
      %p195 = scmp.eq.s32.totalorder %s48, 0
      %p196 = por %p194, %p195
      %s198 = sadd.s32 %s197, 1
      %p201 = scmp.eq.s32.totalorder %s42, 1
      %p202 = scmp.ne.s32.totalorder %s197, %s199
      %p203 = scmp.eq.s32.totalorder %s42, 0
      %p204 = por %p202, %p203
      %p205 = scmp.ne.s32.totalorder %s197, %s199
      %p206 = scmp.eq.s32.totalorder %s47, 1
      %p207 = por %p205, %p206
      %p208 = scmp.ne.s32.totalorder %s199, %s200
      %p209 = scmp.eq.s32.totalorder %s47, 0
      %p210 = por %p208, %p209
      %p211 = scmp.ne.s32.totalorder %s199, %s200
      %p212 = scmp.eq.s32.totalorder %s48, 1
      %p213 = por %p211, %p212
      %p215 = scmp.ne.s32.totalorder %s200, %s214
      %p216 = scmp.eq.s32.totalorder %s48, 0
      %p217 = por %p215, %p216
      %s218 = ssub.s32 %s42, %s49
      %p219 = scmp.eq.s32.totalorder %s218, 0
      %s221 = sadd.s32 %s220, 1
      %s222 = scalar_select %p219, %s220, %s221
      %p225 = pneg %p219
      %p226 = scmp.eq.s32.totalorder %s42, 1
      %p227 = por %p225, %p226
      %p228 = scmp.ne.s32.totalorder %s220, %s223
      %p229 = scmp.eq.s32.totalorder %s42, 0
      %p230 = por %p228, %p229
      %p231 = scmp.ne.s32.totalorder %s220, %s223
      %p232 = scmp.eq.s32.totalorder %s47, 1
      %p233 = por %p231, %p232
      %p234 = scmp.ne.s32.totalorder %s223, %s224
      %p235 = scmp.eq.s32.totalorder %s47, 0
      %p236 = por %p234, %p235
      %p237 = scmp.ne.s32.totalorder %s223, %s224
      %p238 = scmp.eq.s32.totalorder %s48, 1
      %p239 = por %p237, %p238
      %p241 = scmp.ne.s32.totalorder %s224, %s240
      %p242 = scmp.eq.s32.totalorder %s48, 0
      %p243 = por %p241, %p242
      %s244 = ssub.s32 %s42, %s49
      %p245 = scmp.eq.s32.totalorder %s244, 0
      %s247 = sadd.s32 %s246, 1
      %s248 = scalar_select %p245, %s246, %s247
      %p251 = pneg %p245
      %p252 = scmp.eq.s32.totalorder %s42, 1
      %p253 = por %p251, %p252
      %p254 = scmp.ne.s32.totalorder %s246, %s249
      %p255 = scmp.eq.s32.totalorder %s42, 0
      %p256 = por %p254, %p255
      %p257 = scmp.ne.s32.totalorder %s246, %s249
      %p258 = scmp.eq.s32.totalorder %s47, 1
      %p259 = por %p257, %p258
      %p260 = scmp.ne.s32.totalorder %s249, %s250
      %p261 = scmp.eq.s32.totalorder %s47, 0
      %p262 = por %p260, %p261
      %p263 = scmp.ne.s32.totalorder %s249, %s250
      %p264 = scmp.eq.s32.totalorder %s48, 1
      %p265 = por %p263, %p264
      %p267 = scmp.ne.s32.totalorder %s250, %s266
      %p268 = scmp.eq.s32.totalorder %s48, 0
      %p269 = por %p267, %p268
      %s270 = ssub.s32 %s42, %s49
      %p271 = scmp.eq.s32.totalorder %s270, 0
      %s273 = sadd.s32 %s272, 1
      %s274 = scalar_select %p271, %s272, %s273
      %p277 = pneg %p271
      %p278 = scmp.eq.s32.totalorder %s42, 1
      %p279 = por %p277, %p278
      %p280 = scmp.ne.s32.totalorder %s272, %s275
      %p281 = scmp.eq.s32.totalorder %s42, 0
      %p282 = por %p280, %p281
      %p283 = scmp.ne.s32.totalorder %s272, %s275
      %p284 = scmp.eq.s32.totalorder %s47, 1
      %p285 = por %p283, %p284
      %p286 = scmp.ne.s32.totalorder %s275, %s276
      %p287 = scmp.eq.s32.totalorder %s47, 0
      %p288 = por %p286, %p287
      %p289 = scmp.ne.s32.totalorder %s275, %s276
      %p290 = scmp.eq.s32.totalorder %s48, 1
      %p291 = por %p289, %p290
      %p293 = scmp.ne.s32.totalorder %s276, %s292
      %p294 = scmp.eq.s32.totalorder %s48, 0
      %p295 = por %p293, %p294
      %s296 = ssub.s32 %s42, %s49
      %p297 = scmp.eq.s32.totalorder %s296, 0
      %s299 = sadd.s32 %s298, 1
      %s300 = scalar_select %p297, %s298, %s299
      %p303 = pneg %p297
      %p304 = scmp.eq.s32.totalorder %s42, 1
      %p305 = por %p303, %p304
      %p306 = scmp.ne.s32.totalorder %s298, %s301
      %p307 = scmp.eq.s32.totalorder %s42, 0
      %p308 = por %p306, %p307
      %p309 = scmp.ne.s32.totalorder %s298, %s301
      %p310 = scmp.eq.s32.totalorder %s47, 1
      %p311 = por %p309, %p310
      %p312 = scmp.ne.s32.totalorder %s301, %s302
      %p313 = scmp.eq.s32.totalorder %s47, 0
      %p314 = por %p312, %p313
      %p315 = scmp.ne.s32.totalorder %s301, %s302
      %p316 = scmp.eq.s32.totalorder %s48, 1
      %p317 = por %p315, %p316
      %p319 = scmp.ne.s32.totalorder %s302, %s318
      %p320 = scmp.eq.s32.totalorder %s48, 0
      %p321 = por %p319, %p320
      %s322 = ssub.s32 %s42, %s49
      %p323 = scmp.eq.s32.totalorder %s322, 0
      %s325 = sadd.s32 %s324, 1
      %s326 = scalar_select %p323, %s324, %s325
      %p329 = pneg %p323
      %p330 = scmp.eq.s32.totalorder %s42, 1
      %p331 = por %p329, %p330
      %p332 = scmp.ne.s32.totalorder %s324, %s327
      %p333 = scmp.eq.s32.totalorder %s42, 0
      %p334 = por %p332, %p333
      %p335 = scmp.ne.s32.totalorder %s324, %s327
      %p336 = scmp.eq.s32.totalorder %s47, 1
      %p337 = por %p335, %p336
      %p338 = scmp.ne.s32.totalorder %s327, %s328
      %p339 = scmp.eq.s32.totalorder %s47, 0
      %p340 = por %p338, %p339
      %p341 = scmp.ne.s32.totalorder %s327, %s328
      %p342 = scmp.eq.s32.totalorder %s48, 1
      %p343 = por %p341, %p342
      %p345 = scmp.ne.s32.totalorder %s328, %s344
      %p346 = scmp.eq.s32.totalorder %s48, 0
      %p347 = por %p345, %p346
      %s348 = ssub.s32 %s42, %s49
      %p349 = scmp.eq.s32.totalorder %s348, 0
      %s351 = sadd.s32 %s350, 1
      %s352 = scalar_select %p349, %s350, %s351
      %p355 = pneg %p349
      %p356 = scmp.eq.s32.totalorder %s42, 1
      %p357 = por %p355, %p356
      %p358 = scmp.ne.s32.totalorder %s350, %s353
      %p359 = scmp.eq.s32.totalorder %s42, 0
      %p360 = por %p358, %p359
      %p361 = scmp.ne.s32.totalorder %s350, %s353
      %p362 = scmp.eq.s32.totalorder %s47, 1
      %p363 = por %p361, %p362
      %p364 = scmp.ne.s32.totalorder %s353, %s354
      %p365 = scmp.eq.s32.totalorder %s47, 0
      %p366 = por %p364, %p365
      %p367 = scmp.ne.s32.totalorder %s353, %s354
      %p368 = scmp.eq.s32.totalorder %s48, 1
      %p369 = por %p367, %p368
      %p371 = scmp.ne.s32.totalorder %s354, %s370
      %p372 = scmp.eq.s32.totalorder %s48, 0
      %p373 = por %p371, %p372
      %s374 = ssub.s32 %s42, %s49
      %p375 = scmp.eq.s32.totalorder %s374, 0
      %s377 = sadd.s32 %s376, 1
      %s378 = scalar_select %p375, %s376, %s377
      %p381 = pneg %p375
      %p382 = scmp.eq.s32.totalorder %s42, 1
      %p383 = por %p381, %p382
      %p384 = scmp.ne.s32.totalorder %s376, %s379
      %p385 = scmp.eq.s32.totalorder %s42, 0
      %p386 = por %p384, %p385
      %p387 = scmp.ne.s32.totalorder %s376, %s379
      %p388 = scmp.eq.s32.totalorder %s47, 1
      %p389 = por %p387, %p388
      %p390 = scmp.ne.s32.totalorder %s379, %s380
      %p391 = scmp.eq.s32.totalorder %s47, 0
      %p392 = por %p390, %p391
      %p393 = scmp.ne.s32.totalorder %s379, %s380
      %p394 = scmp.eq.s32.totalorder %s48, 1
      %p395 = por %p393, %p394
      %p397 = scmp.ne.s32.totalorder %s380, %s396
      %p398 = scmp.eq.s32.totalorder %s48, 0
      %p399 = por %p397, %p398
      %s400 = ssub.s32 %s42, %s49
      %p401 = scmp.eq.s32.totalorder %s400, 0
      %s403 = sadd.s32 %s402, 1
      %s404 = scalar_select %p401, %s402, %s403
      %p407 = pneg %p401
      %p408 = scmp.eq.s32.totalorder %s42, 1
      %p409 = por %p407, %p408
      %p410 = scmp.ne.s32.totalorder %s402, %s405
      %p411 = scmp.eq.s32.totalorder %s42, 0
      %p412 = por %p410, %p411
      %p413 = scmp.ne.s32.totalorder %s402, %s405
      %p414 = scmp.eq.s32.totalorder %s47, 1
      %p415 = por %p413, %p414
      %p416 = scmp.ne.s32.totalorder %s405, %s406
      %p417 = scmp.eq.s32.totalorder %s47, 0
      %p418 = por %p416, %p417
      %p419 = scmp.ne.s32.totalorder %s405, %s406
      %p420 = scmp.eq.s32.totalorder %s48, 1
      %p421 = por %p419, %p420
      %p423 = scmp.ne.s32.totalorder %s406, %s422
      %p424 = scmp.eq.s32.totalorder %s48, 0
      %p425 = por %p423, %p424
      %s426 = ssub.s32 %s42, %s49
      %p427 = scmp.eq.s32.totalorder %s426, 0
      %s429 = sadd.s32 %s428, 1
      %s430 = scalar_select %p427, %s428, %s429
      %p433 = pneg %p427
      %p434 = scmp.eq.s32.totalorder %s42, 1
      %p435 = por %p433, %p434
      %p436 = scmp.ne.s32.totalorder %s428, %s431
      %p437 = scmp.eq.s32.totalorder %s42, 0
      %p438 = por %p436, %p437
      %p439 = scmp.ne.s32.totalorder %s428, %s431
      %p440 = scmp.eq.s32.totalorder %s47, 1
      %p441 = por %p439, %p440
      %p442 = scmp.ne.s32.totalorder %s431, %s432
      %p443 = scmp.eq.s32.totalorder %s47, 0
      %p444 = por %p442, %p443
      %p445 = scmp.ne.s32.totalorder %s431, %s432
      %p446 = scmp.eq.s32.totalorder %s48, 1
      %p447 = por %p445, %p446
      %p449 = scmp.ne.s32.totalorder %s432, %s448
      %p450 = scmp.eq.s32.totalorder %s48, 0
      %p451 = por %p449, %p450
      %s452 = ssub.s32 %s42, %s49
      %p453 = scmp.eq.s32.totalorder %s452, 0
      %s455 = sadd.s32 %s454, 1
      %s456 = scalar_select %p453, %s454, %s455
      %p459 = pneg %p453
      %p460 = scmp.eq.s32.totalorder %s42, 1
      %p461 = por %p459, %p460
      %p462 = scmp.ne.s32.totalorder %s454, %s457
      %p463 = scmp.eq.s32.totalorder %s42, 0
      %p464 = por %p462, %p463
      %p465 = scmp.ne.s32.totalorder %s454, %s457
      %p466 = scmp.eq.s32.totalorder %s47, 1
      %p467 = por %p465, %p466
      %p468 = scmp.ne.s32.totalorder %s457, %s458
      %p469 = scmp.eq.s32.totalorder %s47, 0
      %p470 = por %p468, %p469
      %p471 = scmp.ne.s32.totalorder %s457, %s458
      %p472 = scmp.eq.s32.totalorder %s48, 1
      %p473 = por %p471, %p472
      %p475 = scmp.ne.s32.totalorder %s458, %s474
      %p476 = scmp.eq.s32.totalorder %s48, 0
      %p477 = por %p475, %p476
      %s478 = ssub.s32 %s42, %s49
      %p479 = scmp.eq.s32.totalorder %s478, 0
      %s481 = sadd.s32 %s480, 1
      %s482 = scalar_select %p479, %s480, %s481
      %p485 = pneg %p479
      %p486 = scmp.eq.s32.totalorder %s42, 1
      %p487 = por %p485, %p486
      %p488 = scmp.ne.s32.totalorder %s480, %s483
      %p489 = scmp.eq.s32.totalorder %s42, 0
      %p490 = por %p488, %p489
      %p491 = scmp.ne.s32.totalorder %s480, %s483
      %p492 = scmp.eq.s32.totalorder %s47, 1
      %p493 = por %p491, %p492
      %p494 = scmp.ne.s32.totalorder %s483, %s484
      %p495 = scmp.eq.s32.totalorder %s47, 0
      %p496 = por %p494, %p495
      %p497 = scmp.ne.s32.totalorder %s483, %s484
      %p498 = scmp.eq.s32.totalorder %s48, 1
      %p499 = por %p497, %p498
      %p501 = scmp.ne.s32.totalorder %s484, %s500
      %p502 = scmp.eq.s32.totalorder %s48, 0
      %p503 = por %p501, %p502
      %s505 = sadd.s32 %s504, 1
      %p508 = scmp.eq.s32.totalorder %s42, 1
      %p509 = scmp.ne.s32.totalorder %s504, %s506
      %p510 = scmp.eq.s32.totalorder %s42, 0
      %p511 = por %p509, %p510
      %p512 = scmp.ne.s32.totalorder %s504, %s506
      %p513 = scmp.eq.s32.totalorder %s47, 1
      %p514 = por %p512, %p513
      %p515 = scmp.ne.s32.totalorder %s506, %s507
      %p516 = scmp.eq.s32.totalorder %s47, 0
      %p517 = por %p515, %p516
      %p518 = scmp.ne.s32.totalorder %s506, %s507
      %p519 = scmp.eq.s32.totalorder %s48, 1
      %p520 = por %p518, %p519
      %p522 = scmp.ne.s32.totalorder %s507, %s521
      %p523 = scmp.eq.s32.totalorder %s48, 0
      %p524 = por %p522, %p523
      %p525 = scmp.le.s32.totalorder 1, %s42
      %p526 = scmp.lt.s32.totalorder %s42, 3
      %p527 = pnand %p525, %p526
      %p528 = pneg %p527
      // Predicated region
      $region9: #{tpu_custom_call.1} parent=5 // pred_check
        _
      $region10: #{tpu_custom_call.1} parent=5 // pred_check_branch
        %530 = sbr.rel (%p527) target = $region12
      $region11: #{tpu_custom_call.1} parent=5 // pred_region
        %s531 = ssub.s32 %s42, 1
        // Predicated region
        $region13: #{tpu_custom_call.1} parent=11 // pred_check
          %p532 = pneg %p63
        $region14: #{tpu_custom_call.1} parent=11 // pred_check_branch
          %534 = sbr.rel (%p532) target = $region16
        $region15: #{tpu_custom_call.1} parent=11 // pred_region
          _
        $region16: #{tpu_custom_call.1} parent=11 // pred_fallthru
          _
        // Predicated region
        $region17: #{tpu_custom_call.1} parent=11 // pred_check
          %p535 = pneg %p84
        $region18: #{tpu_custom_call.1} parent=11 // pred_check_branch
          %537 = sbr.rel (%p535) target = $region20
        $region19: #{tpu_custom_call.1} parent=11 // pred_region
          %539 = vsyncadd [#allocation6], 0
          %s540 = sshll.u32 %s2, 4
          %s541 = int_to_ptr.hbm [resolvable:$true] %s540
          %s542 = sshll.u32 [#allocation5], 4
          %s543 = int_to_ptr.vmem [resolvable:$true] %s542
          %548 = dma.hbm_to_vmem [thread:$0]  %s541, 256, %s543, [#allocation6], 128, 128, 8
        $region20: #{tpu_custom_call.1} parent=11 // pred_fallthru
          _
        // Predicated region
        $region21: #{tpu_custom_call.1} parent=11 // pred_check
          %p549 = pneg %p105
        $region22: #{tpu_custom_call.1} parent=11 // pred_check_branch
          %551 = sbr.rel (%p549) target = $region24
        $region23: #{tpu_custom_call.1} parent=11 // pred_region
          _
        $region24: #{tpu_custom_call.1} parent=11 // pred_fallthru
          _
        // Predicated region
        $region25: #{tpu_custom_call.1} parent=11 // pred_check
          %p552 = pneg %p126
        $region26: #{tpu_custom_call.1} parent=11 // pred_check_branch
          %554 = sbr.rel (%p552) target = $region28
        $region27: #{tpu_custom_call.1} parent=11 // pred_region
          _
        $region28: #{tpu_custom_call.1} parent=11 // pred_fallthru
          _
        // Predicated region
        $region29: #{tpu_custom_call.1} parent=11 // pred_check
          %p555 = pneg %p147
        $region30: #{tpu_custom_call.1} parent=11 // pred_check_branch
          %557 = sbr.rel (%p555) target = $region32
        $region31: #{tpu_custom_call.1} parent=11 // pred_region
          _
        $region32: #{tpu_custom_call.1} parent=11 // pred_fallthru
          _
        // Predicated region
        $region33: #{tpu_custom_call.1} parent=11 // pred_check
          %p558 = pneg %p168
        $region34: #{tpu_custom_call.1} parent=11 // pred_check_branch
          %560 = sbr.rel (%p558) target = $region36
        $region35: #{tpu_custom_call.1} parent=11 // pred_region
          _
        $region36: #{tpu_custom_call.1} parent=11 // pred_fallthru
          _
        // Predicated region
        $region37: #{tpu_custom_call.1} parent=11 // pred_check
          %p561 = pneg %p189
        $region38: #{tpu_custom_call.1} parent=11 // pred_check_branch
          %563 = sbr.rel (%p561) target = $region40
        $region39: #{tpu_custom_call.1} parent=11 // pred_region
          _
        $region40: #{tpu_custom_call.1} parent=11 // pred_fallthru
          _
        // Predicated region
        $region41: #{tpu_custom_call.1} parent=11 // pred_check
          %p564 = pneg %p210
        $region42: #{tpu_custom_call.1} parent=11 // pred_check_branch
          %566 = sbr.rel (%p564) target = $region44
        $region43: #{tpu_custom_call.1} parent=11 // pred_region
          _
        $region44: #{tpu_custom_call.1} parent=11 // pred_fallthru
          _
      $region12: #{tpu_custom_call.1} parent=5 // pred_fallthru
        _
      %p567 = scmp.lt.s32.totalorder %s42, 2
      // Predicated region
      $region45: #{tpu_custom_call.1} parent=5 // pred_check
        %p568 = pneg %p567
      $region46: #{tpu_custom_call.1} parent=5 // pred_check_branch
        %570 = sbr.rel (%p568) target = $region48
      $region47: #{tpu_custom_call.1} parent=5 // pred_region
        // Predicated region
        $region49: #{tpu_custom_call.1} parent=47 // pred_check
          %p571 = pneg %p230
        $region50: #{tpu_custom_call.1} parent=47 // pred_check_branch
          %573 = sbr.rel (%p571) target = $region52
        $region51: #{tpu_custom_call.1} parent=47 // pred_region
          %p574 = scmp.lt.s32.totalorder %s42, 1
          %s575 = scalar_select %p574, %s42, 1
          %s576 = smul.addr %s575, 4
          %s577 = smul.addr %s576, 4
          %s578 = scalar_lea.vmem %s9, %s577
        $region52: #{tpu_custom_call.1} parent=47 // pred_fallthru
          _
        // Predicated region
        $region53: #{tpu_custom_call.1} parent=47 // pred_check
          %p579 = pneg %p256
        $region54: #{tpu_custom_call.1} parent=47 // pred_check_branch
          %581 = sbr.rel (%p579) target = $region56
        $region55: #{tpu_custom_call.1} parent=47 // pred_region
          %p582 = scmp.lt.s32.totalorder %s42, 1
          %s583 = scalar_select %p582, %s42, 1
          %s584 = smul.addr %s583, 4
          %s585 = smul.addr %s584, 4
          %s586 = scalar_lea.vmem %s10, %s585
        $region56: #{tpu_custom_call.1} parent=47 // pred_fallthru
          _
        // Predicated region
        $region57: #{tpu_custom_call.1} parent=47 // pred_check
          %p587 = pneg %p282
        $region58: #{tpu_custom_call.1} parent=47 // pred_check_branch
          %589 = sbr.rel (%p587) target = $region60
        $region59: #{tpu_custom_call.1} parent=47 // pred_region
          %s590 = sand.u32 %s42, 1
          %s591 = scalar_lea.sflag [#allocation9], %s590
          %s592 = sand.u32 %s272, 1
          %s593 = smul.addr %s592, 16
          %s594 = scalar_lea.vmem [#allocation8], %s593
          %596 = vsyncadd %s591, 0
          %s597 = smul.addr %s42, 4
          %s598 = smul.addr %s597, 4
          %s599 = scalar_lea.hbm %s11, %s598
          %s600 = sshll.u32 %s599, 4
          %s601 = int_to_ptr.hbm [resolvable:$true] %s600
          %s602 = sshll.u32 %s594, 4
          %s603 = int_to_ptr.vmem [resolvable:$true] %s602
          %608 = dma.hbm_to_vmem [thread:$0]  %s601, 256, %s603, %s591, 64, 64, 4
        $region60: #{tpu_custom_call.1} parent=47 // pred_fallthru
          _
        // Predicated region
        $region61: #{tpu_custom_call.1} parent=47 // pred_check
          %p609 = pneg %p308
        $region62: #{tpu_custom_call.1} parent=47 // pred_check_branch
          %611 = sbr.rel (%p609) target = $region64
        $region63: #{tpu_custom_call.1} parent=47 // pred_region
          %p612 = scmp.lt.s32.totalorder %s42, 1
          %s613 = scalar_select %p612, %s42, 1
          %s614 = scalar_lea.vmem %s12, %s613
        $region64: #{tpu_custom_call.1} parent=47 // pred_fallthru
          _
        // Predicated region
        $region65: #{tpu_custom_call.1} parent=47 // pred_check
          %p615 = pneg %p334
        $region66: #{tpu_custom_call.1} parent=47 // pred_check_branch
          %617 = sbr.rel (%p615) target = $region68
        $region67: #{tpu_custom_call.1} parent=47 // pred_region
          %p618 = scmp.lt.s32.totalorder %s42, 1
          %s619 = scalar_select %p618, %s42, 1
          %s620 = scalar_lea.vmem %s13, %s619
        $region68: #{tpu_custom_call.1} parent=47 // pred_fallthru
          _
        // Predicated region
        $region69: #{tpu_custom_call.1} parent=47 // pred_check
          %p621 = pneg %p360
        $region70: #{tpu_custom_call.1} parent=47 // pred_check_branch
          %623 = sbr.rel (%p621) target = $region72
        $region71: #{tpu_custom_call.1} parent=47 // pred_region
          %p624 = scmp.lt.s32.totalorder %s42, 1
          %s625 = scalar_select %p624, %s42, 1
          %s626 = scalar_lea.vmem %s14, %s625
        $region72: #{tpu_custom_call.1} parent=47 // pred_fallthru
          _
        // Predicated region
        $region73: #{tpu_custom_call.1} parent=47 // pred_check
          %p627 = pneg %p386
        $region74: #{tpu_custom_call.1} parent=47 // pred_check_branch
          %629 = sbr.rel (%p627) target = $region76
        $region75: #{tpu_custom_call.1} parent=47 // pred_region
          %s630 = sand.u32 %s42, 1
          %s631 = scalar_lea.sflag [#allocation9], %s630
          %s632 = sand.u32 %s376, 1
          %s633 = smul.addr %s632, 16
          %s634 = scalar_lea.vmem [#allocation10], %s633
          %636 = vsyncadd %s631, 0
          %s637 = smul.addr %s42, 4
          %s638 = smul.addr %s637, 4
          %s639 = scalar_lea.hbm %s15, %s638
          %s640 = sshll.u32 %s639, 4
          %s641 = int_to_ptr.hbm [resolvable:$true] %s640
          %s642 = sshll.u32 %s634, 4
          %s643 = int_to_ptr.vmem [resolvable:$true] %s642
          %648 = dma.hbm_to_vmem [thread:$0]  %s641, 256, %s643, %s631, 64, 64, 4
        $region76: #{tpu_custom_call.1} parent=47 // pred_fallthru
          _
        // Predicated region
        $region77: #{tpu_custom_call.1} parent=47 // pred_check
          %p649 = pneg %p412
        $region78: #{tpu_custom_call.1} parent=47 // pred_check_branch
          %651 = sbr.rel (%p649) target = $region80
        $region79: #{tpu_custom_call.1} parent=47 // pred_region
          %s652 = sand.u32 %s402, 1
          %s653 = scalar_lea.sflag [#allocation12], %s652
          %s654 = sand.u32 %s402, 1
          %s655 = smul.addr %s654, 16
          %s656 = scalar_lea.vmem [#allocation11], %s655
          %658 = vsyncadd %s653, 0
          %s659 = smul.addr %s42, 4
          %s660 = smul.addr %s659, 4
          %s661 = scalar_lea.hbm %s16, %s660
          %s662 = sshll.u32 %s661, 4
          %s663 = int_to_ptr.hbm [resolvable:$true] %s662
          %s664 = sshll.u32 %s656, 4
          %s665 = int_to_ptr.vmem [resolvable:$true] %s664
          %670 = dma.hbm_to_vmem [thread:$0]  %s663, 256, %s665, %s653, 64, 64, 4
        $region80: #{tpu_custom_call.1} parent=47 // pred_fallthru
          _
        // Predicated region
        $region81: #{tpu_custom_call.1} parent=47 // pred_check
          %p671 = pneg %p438
        $region82: #{tpu_custom_call.1} parent=47 // pred_check_branch
          %673 = sbr.rel (%p671) target = $region84
        $region83: #{tpu_custom_call.1} parent=47 // pred_region
          %p674 = scmp.lt.s32.totalorder %s42, 1
          %s675 = scalar_select %p674, %s42, 1
          %s676 = scalar_lea.vmem %s17, %s675
        $region84: #{tpu_custom_call.1} parent=47 // pred_fallthru
          _
        // Predicated region
        $region85: #{tpu_custom_call.1} parent=47 // pred_check
          %p677 = pneg %p464
        $region86: #{tpu_custom_call.1} parent=47 // pred_check_branch
          %679 = sbr.rel (%p677) target = $region88
        $region87: #{tpu_custom_call.1} parent=47 // pred_region
          %p680 = scmp.lt.s32.totalorder %s42, 1
          %s681 = scalar_select %p680, %s42, 1
          %s682 = smul.addr %s681, 8
          %s683 = smul.addr %s682, 4
          %s684 = scalar_lea.vmem %s18, %s683
        $region88: #{tpu_custom_call.1} parent=47 // pred_fallthru
          _
        // Predicated region
        $region89: #{tpu_custom_call.1} parent=47 // pred_check
          %p685 = pneg %p490
        $region90: #{tpu_custom_call.1} parent=47 // pred_check_branch
          %687 = sbr.rel (%p685) target = $region92
        $region91: #{tpu_custom_call.1} parent=47 // pred_region
          %p688 = scmp.lt.s32.totalorder %s42, 1
          %s689 = scalar_select %p688, %s42, 1
          %s690 = scalar_lea.vmem %s19, %s689
        $region92: #{tpu_custom_call.1} parent=47 // pred_fallthru
          _
      $region48: #{tpu_custom_call.1} parent=5 // pred_fallthru
        _
      %p691 = scmp.le.s32.totalorder 1, %s42
      %p692 = scmp.lt.s32.totalorder %s42, 3
      %p693 = pnand %p691, %p692
      %p694 = pneg %p693
      // Predicated region
      $region93: #{tpu_custom_call.1} parent=5 // pred_check
        _
      $region94: #{tpu_custom_call.1} parent=5 // pred_check_branch
        %696 = sbr.rel (%p693) target = $region96
      $region95: #{tpu_custom_call.1} parent=5 // pred_region
        %s697 = ssub.s32 %s42, 1
        // Predicated region
        $region97: #{tpu_custom_call.1} parent=95 // pred_check
          %p698 = pneg %p84
        $region98: #{tpu_custom_call.1} parent=95 // pred_check_branch
          %700 = sbr.rel (%p698) target = $region100
        $region99: #{tpu_custom_call.1} parent=95 // pred_region
          %702 = dma.done [#allocation6], 256
        $region100: #{tpu_custom_call.1} parent=95 // pred_fallthru
          _
        %s703 = sand.u32 %s47, 1
        %s704 = scalar_lea.sflag [#allocation9], %s703
        %s705 = sand.u32 %s275, 1
        %s706 = smul.addr %s705, 16
        %s707 = scalar_lea.vmem [#allocation8], %s706
        // Predicated region
        $region101: #{tpu_custom_call.1} parent=95 // pred_check
          %p708 = pneg %p288
        $region102: #{tpu_custom_call.1} parent=95 // pred_check_branch
          %710 = sbr.rel (%p708) target = $region104
        $region103: #{tpu_custom_call.1} parent=95 // pred_region
          %712 = dma.done %s704, 256
        $region104: #{tpu_custom_call.1} parent=95 // pred_fallthru
          _
        %s713 = sand.u32 %s47, 1
        %s714 = scalar_lea.sflag [#allocation9], %s713
        %s715 = sand.u32 %s379, 1
        %s716 = smul.addr %s715, 16
        %s717 = scalar_lea.vmem [#allocation10], %s716
        // Predicated region
        $region105: #{tpu_custom_call.1} parent=95 // pred_check
          %p718 = pneg %p392
        $region106: #{tpu_custom_call.1} parent=95 // pred_check_branch
          %720 = sbr.rel (%p718) target = $region108
        $region107: #{tpu_custom_call.1} parent=95 // pred_region
          %722 = dma.done %s714, 256
        $region108: #{tpu_custom_call.1} parent=95 // pred_fallthru
          _
        %s723 = sand.u32 %s405, 1
        %s724 = scalar_lea.sflag [#allocation12], %s723
        %s725 = sand.u32 %s405, 1
        %s726 = smul.addr %s725, 16
        %s727 = scalar_lea.vmem [#allocation11], %s726
        // Predicated region
        $region109: #{tpu_custom_call.1} parent=95 // pred_check
          %p728 = pneg %p418
        $region110: #{tpu_custom_call.1} parent=95 // pred_check_branch
          %730 = sbr.rel (%p728) target = $region112
        $region111: #{tpu_custom_call.1} parent=95 // pred_region
          %732 = dma.done %s724, 256
        $region112: #{tpu_custom_call.1} parent=95 // pred_fallthru
          _
        %p733 = pneg %p63
        %p734 = pneg %p60
        %p735 = pneg %p84
        %p736 = pneg %p81
        %p737 = pneg %p105
        %p738 = pneg %p102
        %p739 = pneg %p126
        %p740 = pneg %p123
        %p741 = pneg %p147
        %p742 = pneg %p144
        %p743 = pneg %p168
        %p744 = pneg %p165
        %p745 = pneg %p189
        %p746 = pneg %p186
        %p747 = pneg %p210
        %p748 = pneg %p207
        %p749 = scmp.lt.s32.totalorder %s47, 1
        %s750 = scalar_select %p749, %s47, 1
        %s751 = smul.addr %s750, 4
        %s752 = smul.addr %s751, 4
        %s753 = scalar_lea.vmem %s9, %s752
        %p754 = pneg %p236
        %p755 = pneg %p233
        %p756 = scmp.lt.s32.totalorder %s47, 1
        %s757 = scalar_select %p756, %s47, 1
        %s758 = smul.addr %s757, 4
        %s759 = smul.addr %s758, 4
        %s760 = scalar_lea.vmem %s10, %s759
        %p761 = pneg %p262
        %p762 = pneg %p259
        %s763 = sand.u32 %s47, 1
        %s764 = scalar_lea.sflag [#allocation9], %s763
        %s765 = sand.u32 %s275, 1
        %s766 = smul.addr %s765, 16
        %s767 = scalar_lea.vmem [#allocation8], %s766
        %p768 = pneg %p288
        %p769 = pneg %p285
        %p770 = scmp.lt.s32.totalorder %s47, 1
        %s771 = scalar_select %p770, %s47, 1
        %s772 = scalar_lea.vmem %s12, %s771
        %p773 = pneg %p314
        %p774 = pneg %p311
        %p775 = scmp.lt.s32.totalorder %s47, 1
        %s776 = scalar_select %p775, %s47, 1
        %s777 = scalar_lea.vmem %s13, %s776
        %p778 = pneg %p340
        %p779 = pneg %p337
        %p780 = scmp.lt.s32.totalorder %s47, 1
        %s781 = scalar_select %p780, %s47, 1
        %s782 = scalar_lea.vmem %s14, %s781
        %p783 = pneg %p366
        %p784 = pneg %p363
        %s785 = sand.u32 %s47, 1
        %s786 = scalar_lea.sflag [#allocation9], %s785
        %s787 = sand.u32 %s379, 1
        %s788 = smul.addr %s787, 16
        %s789 = scalar_lea.vmem [#allocation10], %s788
        %p790 = pneg %p392
        %p791 = pneg %p389
        %s792 = sand.u32 %s405, 1
        %s793 = scalar_lea.sflag [#allocation12], %s792
        %s794 = sand.u32 %s405, 1
        %s795 = smul.addr %s794, 16
        %s796 = scalar_lea.vmem [#allocation11], %s795
        %p797 = pneg %p418
        %p798 = pneg %p415
        %p799 = scmp.lt.s32.totalorder %s47, 1
        %s800 = scalar_select %p799, %s47, 1
        %s801 = scalar_lea.vmem %s17, %s800
        %p802 = pneg %p444
        %p803 = pneg %p441
        %p804 = scmp.lt.s32.totalorder %s47, 1
        %s805 = scalar_select %p804, %s47, 1
        %s806 = smul.addr %s805, 8
        %s807 = smul.addr %s806, 4
        %s808 = scalar_lea.vmem %s18, %s807
        %p809 = pneg %p470
        %p810 = pneg %p467
        %p811 = scmp.lt.s32.totalorder %s47, 1
        %s812 = scalar_select %p811, %s47, 1
        %s813 = scalar_lea.vmem %s19, %s812
        %p814 = pneg %p496
        %p815 = pneg %p493
        %p816 = pneg %p517
        %p817 = pneg %p514
        %p818 = scmp.lt.s32.totalorder %s47, 1
        %s819 = scalar_select %p818, %s47, 1
        %s820 = smul.addr %s819, 4
        %s821 = smul.addr %s820, 4
        %s822 = scalar_lea.vmem %s9, %s821
        %p823 = scmp.lt.s32.totalorder %s47, 1
        %s824 = scalar_select %p823, %s47, 1
        %s825 = smul.addr %s824, 4
        %s826 = smul.addr %s825, 4
        %s827 = scalar_lea.vmem %s10, %s826
        %p828 = scmp.lt.s32.totalorder %s47, 1
        %s829 = scalar_select %p828, %s47, 1
        %s830 = scalar_lea.vmem %s12, %s829
        %p831 = scmp.lt.s32.totalorder %s47, 1
        %s832 = scalar_select %p831, %s47, 1
        %s833 = scalar_lea.vmem %s13, %s832
        %p834 = scmp.lt.s32.totalorder %s47, 1
        %s835 = scalar_select %p834, %s47, 1
        %s836 = scalar_lea.vmem %s14, %s835
        %p837 = scmp.lt.s32.totalorder %s47, 1
        %s838 = scalar_select %p837, %s47, 1
        %s839 = scalar_lea.vmem %s17, %s838
        %p840 = scmp.lt.s32.totalorder %s47, 1
        %s841 = scalar_select %p840, %s47, 1
        %s842 = smul.addr %s841, 8
        %s843 = smul.addr %s842, 4
        %s844 = scalar_lea.vmem %s18, %s843
        %p845 = scmp.lt.s32.totalorder %s47, 1
        %s846 = scalar_select %p845, %s47, 1
        %s847 = scalar_lea.vmem %s19, %s846
        %p849 = scmp.eq.s32.totalorder %s47, 0
        // Predicated region
        $region113: #{tpu_custom_call.1} parent=95 // pred_check
          %p850 = pneg %p849
        $region114: #{tpu_custom_call.1} parent=95 // pred_check_branch
          %852 = sbr.rel (%p850) target = $region116
        $region115: #{tpu_custom_call.1} parent=95 // pred_region
          %v853 = vld [vmem:[%s1] sm:$0xff]
          %v854 = vld [vmem:[%s1 + $0x8] sm:$0xff]
          %v855 = vld [vmem:[%s1 + $0x10] sm:$0xff]
          %v856 = vld [vmem:[%s1 + $0x18] sm:$0xff]
          %vm857 = vcmask 392192
          %v858 = vsel %vm857, %v853, 0.0
          %859 = vadd.xlane.f32.xlu0 %v858
          %v860 = vpop.xlane.xlu0 %859
          %v861 = vsel %vm857, %v854, 0.0
          %862 = vadd.xlane.f32.xlu0 %v861
          %v863 = vpop.xlane.xlu0 %862
          %v864 = vsel %vm857, %v855, 0.0
          %865 = vadd.xlane.f32.xlu0 %v864
          %v866 = vpop.xlane.xlu0 %865
          %v867 = vsel %vm857, %v856, 0.0
          %868 = vadd.xlane.f32.xlu0 %v867
          %v869 = vpop.xlane.xlu0 %868
          %v870 = vrcp.pop 48.0
          %v871 = vmul.f32 48.0, %v870
          %v872 = vsub.f32 1.0, %v871
          %v873 = vmul.f32 %v870, %v872
          %v874 = vadd.f32 %v870, %v873
          %vm875 = vweird.f32 %v870
          %v876 = vsel %vm875, %v870, %v874
          %v877 = vmul.f32 %v860, %v876
          %v878 = vmul.f32 %v863, %v876
          %v879 = vmul.f32 %v866, %v876
          %v880 = vmul.f32 %v869, %v876
          %v881 = vsub.f32 %v853, %v877
          %v882 = vsub.f32 %v854, %v878
          %v883 = vsub.f32 %v855, %v879
          %v884 = vsub.f32 %v856, %v880
          %v885 = vmul.f32 %v881, %v881
          %v886 = vmul.f32 %v882, %v882
          %v887 = vmul.f32 %v883, %v883
          %v888 = vmul.f32 %v884, %v884
          %v889 = vsel %vm857, %v885, 0.0
          %890 = vadd.xlane.f32.xlu0 %v889
          %v891 = vpop.xlane.xlu0 %890
          %v892 = vsel %vm857, %v886, 0.0
          %893 = vadd.xlane.f32.xlu0 %v892
          %v894 = vpop.xlane.xlu0 %893
          %v895 = vsel %vm857, %v887, 0.0
          %896 = vadd.xlane.f32.xlu0 %v895
          %v897 = vpop.xlane.xlu0 %896
          %v898 = vsel %vm857, %v888, 0.0
          %899 = vadd.xlane.f32.xlu0 %v898
          %v900 = vpop.xlane.xlu0 %899
          %v901 = vmul.f32 %v891, %v876
          %v902 = vmul.f32 %v894, %v876
          %v903 = vmul.f32 %v897, %v876
          %v904 = vmul.f32 %v900, %v876
          %v905 = vadd.f32 %v901, 1e-05
          %v906 = vadd.f32 %v902, 1e-05
          %v907 = vadd.f32 %v903, 1e-05
          %v908 = vadd.f32 %v904, 1e-05
          %v909 = vrsqrt.pop %v905
          %v910 = vmul.f32 %v909, %v905
          %v911 = vmul.f32 %v910, %v909
          %v912 = vmul.f32 0.5, %v911
          %v913 = vsub.f32 1.5, %v912
          %v914 = vmul.f32 %v909, %v913
          %vm915 = vweird.f32 %v905
          %vm916 = vweird.f32 %v909
          %vm917 = vmor %vm915, %vm916
          %v918 = vsel %vm917, %v909, %v914
          %v919 = vrsqrt.pop %v906
          %v920 = vmul.f32 %v919, %v906
          %v921 = vmul.f32 %v920, %v919
          %v922 = vmul.f32 0.5, %v921
          %v923 = vsub.f32 1.5, %v922
          %v924 = vmul.f32 %v919, %v923
          %vm925 = vweird.f32 %v906
          %vm926 = vweird.f32 %v919
          %vm927 = vmor %vm925, %vm926
          %v928 = vsel %vm927, %v919, %v924
          %v929 = vrsqrt.pop %v907
          %v930 = vmul.f32 %v929, %v907
          %v931 = vmul.f32 %v930, %v929
          %v932 = vmul.f32 0.5, %v931
          %v933 = vsub.f32 1.5, %v932
          %v934 = vmul.f32 %v929, %v933
          %vm935 = vweird.f32 %v907
          %vm936 = vweird.f32 %v929
          %vm937 = vmor %vm935, %vm936
          %v938 = vsel %vm937, %v929, %v934
          %v939 = vrsqrt.pop %v908
          %v940 = vmul.f32 %v939, %v908
          %v941 = vmul.f32 %v940, %v939
          %v942 = vmul.f32 0.5, %v941
          %v943 = vsub.f32 1.5, %v942
          %v944 = vmul.f32 %v939, %v943
          %vm945 = vweird.f32 %v908
          %vm946 = vweird.f32 %v939
          %vm947 = vmor %vm945, %vm946
          %v948 = vsel %vm947, %v939, %v944
          %v949 = vmul.f32 %v881, %v918
          %v950 = vmul.f32 %v882, %v928
          %v951 = vmul.f32 %v883, %v938
          %v952 = vmul.f32 %v884, %v948
          %v953 = vpack.c.bf16 %v950, %v949
          %v954 = vpack.c.bf16 %v952, %v951
          %v955 = vld [vmem:[%s5] sm:$0xf]
          %v956 = vld [vmem:[%s5 + $0x4] sm:$0xf]
          %v957 = vld [vmem:[%s5 + $0x8] sm:$0xf]
          %v958 = vld [vmem:[%s5 + $0xc] sm:$0xf]
          %v959 = vld [vmem:[%s5 + $0x10] sm:$0xf]
          %v960 = vld [vmem:[%s5 + $0x14] sm:$0xf]
          %v961 = vld [vmem:[%s6] sm:$0x1]
          %v963 = vperm.slane %v961, 0
          %v971 = vunpack.c.l.b16 %v955
          %v972 = vunpack.c.l.b16 %v956
          %v973 = vunpack.c.l.b16 %v957
          %v974 = vunpack.c.l.b16 %v958
          %v975 = vunpack.c.l.b16 %v959
          %v976 = vunpack.c.l.b16 %v960
          %v977 = vpack.c.b16 %v972, %v971
          %v978 = vpack.c.b16 %v974, %v973
          %v979 = vpack.c.b16 %v976, %v975
          %v984 = vsel %vm857, %v953, 0
          %v987 = vsel %vm857, %v954, 0
          %989 = vmatpush.bf16.msra.mxu0 0
          %990 = vmatpush.bf16.msra.mxu0 0
          %991 = vmatpush.bf16.msra.mxu0 0
          %992 = vmatpush.bf16.msra.mxu0 0
          %993 = vmatpush.bf16.msra.mxu0 0
          %994 = vmatpush.bf16.msra.mxu0 %v979
          %995 = vmatpush.bf16.msra.mxu0 %v978
          %996 = vmatpush.bf16.msra.mxu0 %v977
          %997 = vmatmul.bf16.gmra.mxu0 %v984
          %v998 = vpop.f32.mrf.mxu0
          %v999 = vadd.f32 %v963, %v998
          %v1000 = vpop.f32.mrf.mxu0
          %v1001 = vadd.f32 %v963, %v1000
          %1002 = vmatmul.bf16.gmra.mxu0 %v987
          %v1003 = vpop.f32.mrf.mxu0
          %v1004 = vadd.f32 %v963, %v1003
          %v1005 = vpop.f32.mrf.mxu0
          %v1006 = vadd.f32 %v963, %v1005
          %1007 = vdwg.mxu0
          %vm1008 = vcmask 261120
          %v1009 = vsel %vm1008, %v999, 0.0
          %1010 = vadd.xlane.f32.xlu0 %v1009
          %v1011 = vpop.xlane.xlu0 %1010
          %v1012 = vsel %vm1008, %v1001, 0.0
          %1013 = vadd.xlane.f32.xlu0 %v1012
          %v1014 = vpop.xlane.xlu0 %1013
          %v1015 = vsel %vm1008, %v1004, 0.0
          %1016 = vadd.xlane.f32.xlu0 %v1015
          %v1017 = vpop.xlane.xlu0 %1016
          %v1018 = vsel %vm1008, %v1006, 0.0
          %1019 = vadd.xlane.f32.xlu0 %v1018
          %v1020 = vpop.xlane.xlu0 %1019
          %v1021 = vrcp.pop 32.0
          %v1022 = vmul.f32 32.0, %v1021
          %v1023 = vsub.f32 1.0, %v1022
          %v1024 = vmul.f32 %v1021, %v1023
          %v1025 = vadd.f32 %v1021, %v1024
          %vm1026 = vweird.f32 %v1021
          %v1027 = vsel %vm1026, %v1021, %v1025
          %v1028 = vmul.f32 %v1011, %v1027
          %v1029 = vmul.f32 %v1014, %v1027
          %v1030 = vmul.f32 %v1017, %v1027
          %v1031 = vmul.f32 %v1020, %v1027
          %v1032 = vsub.f32 %v999, %v1028
          %v1033 = vsub.f32 %v1001, %v1029
          %v1034 = vsub.f32 %v1004, %v1030
          %v1035 = vsub.f32 %v1006, %v1031
          %v1036 = vmul.f32 %v1032, %v1032
          %v1037 = vmul.f32 %v1033, %v1033
          %v1038 = vmul.f32 %v1034, %v1034
          %v1039 = vmul.f32 %v1035, %v1035
          %v1040 = vsel %vm1008, %v1036, 0.0
          %1041 = vadd.xlane.f32.xlu0 %v1040
          %v1042 = vpop.xlane.xlu0 %1041
          %v1043 = vsel %vm1008, %v1037, 0.0
          %1044 = vadd.xlane.f32.xlu0 %v1043
          %v1045 = vpop.xlane.xlu0 %1044
          %v1046 = vsel %vm1008, %v1038, 0.0
          %1047 = vadd.xlane.f32.xlu0 %v1046
          %v1048 = vpop.xlane.xlu0 %1047
          %v1049 = vsel %vm1008, %v1039, 0.0
          %1050 = vadd.xlane.f32.xlu0 %v1049
          %v1051 = vpop.xlane.xlu0 %1050
          %v1052 = vmul.f32 %v1042, %v1027
          %v1053 = vmul.f32 %v1045, %v1027
          %v1054 = vmul.f32 %v1048, %v1027
          %v1055 = vmul.f32 %v1051, %v1027
          %v1056 = vadd.f32 %v1052, 1e-05
          %v1057 = vadd.f32 %v1053, 1e-05
          %v1058 = vadd.f32 %v1054, 1e-05
          %v1059 = vadd.f32 %v1055, 1e-05
          %v1060 = vrsqrt.pop %v1056
          %v1061 = vmul.f32 %v1060, %v1056
          %v1062 = vmul.f32 %v1061, %v1060
          %v1063 = vmul.f32 0.5, %v1062
          %v1064 = vsub.f32 1.5, %v1063
          %v1065 = vmul.f32 %v1060, %v1064
          %vm1066 = vweird.f32 %v1056
          %vm1067 = vweird.f32 %v1060
          %vm1068 = vmor %vm1066, %vm1067
          %v1069 = vsel %vm1068, %v1060, %v1065
          %v1070 = vrsqrt.pop %v1057
          %v1071 = vmul.f32 %v1070, %v1057
          %v1072 = vmul.f32 %v1071, %v1070
          %v1073 = vmul.f32 0.5, %v1072
          %v1074 = vsub.f32 1.5, %v1073
          %v1075 = vmul.f32 %v1070, %v1074
          %vm1076 = vweird.f32 %v1057
          %vm1077 = vweird.f32 %v1070
          %vm1078 = vmor %vm1076, %vm1077
          %v1079 = vsel %vm1078, %v1070, %v1075
          %v1080 = vrsqrt.pop %v1058
          %v1081 = vmul.f32 %v1080, %v1058
          %v1082 = vmul.f32 %v1081, %v1080
          %v1083 = vmul.f32 0.5, %v1082
          %v1084 = vsub.f32 1.5, %v1083
          %v1085 = vmul.f32 %v1080, %v1084
          %vm1086 = vweird.f32 %v1058
          %vm1087 = vweird.f32 %v1080
          %vm1088 = vmor %vm1086, %vm1087
          %v1089 = vsel %vm1088, %v1080, %v1085
          %v1090 = vrsqrt.pop %v1059
          %v1091 = vmul.f32 %v1090, %v1059
          %v1092 = vmul.f32 %v1091, %v1090
          %v1093 = vmul.f32 0.5, %v1092
          %v1094 = vsub.f32 1.5, %v1093
          %v1095 = vmul.f32 %v1090, %v1094
          %vm1096 = vweird.f32 %v1059
          %vm1097 = vweird.f32 %v1090
          %vm1098 = vmor %vm1096, %vm1097
          %v1099 = vsel %vm1098, %v1090, %v1095
          %v1100 = vmul.f32 %v1032, %v1069
          %v1101 = vmul.f32 %v1033, %v1079
          %v1102 = vmul.f32 %v1034, %v1089
          %v1103 = vmul.f32 %v1035, %v1099
          %v1104 = vld [vmem:[%s7] sm:$0x1]
          %v1106 = vperm.slane %v1104, 0
          %v1108 = vmul.f32 %v1100, %v1106
          %v1109 = vmul.f32 %v1101, %v1106
          %v1110 = vmul.f32 %v1102, %v1106
          %v1111 = vmul.f32 %v1103, %v1106
          %v1112 = vld [vmem:[%s8] sm:$0x1]
          %v1114 = vperm.slane %v1112, 0
          %v1116 = vadd.f32 %v1108, %v1114
          %v1117 = vadd.f32 %v1109, %v1114
          %v1118 = vadd.f32 %v1110, %v1114
          %v1119 = vadd.f32 %v1111, %v1114
          %v1120 = vld [vmem:[#allocation5] sm:$0xff]
          %v1121 = vld [vmem:[#allocation5 + $0x8] sm:$0xff]
          %v1122 = vadd.f32 %v1116, %v1120
          %v1123 = vadd.f32 %v1117, %v1121
          %1124 = vst.msk [vmem:[#allocation2] sm:$0xff] %vm1008, %v1122
          %1125 = vst.msk [vmem:[#allocation2 + $0x8] sm:$0xff] %vm1008, %v1123
          %v1126 = vadd.f32 %v1118, %v1120
          %v1127 = vadd.f32 %v1119, %v1121
          %1128 = vst.msk [vmem:[#allocation2 + $0x10] sm:$0xff] %vm1008, %v1126
          %1129 = vst.msk [vmem:[#allocation2 + $0x18] sm:$0xff] %vm1008, %v1127
        $region116: #{tpu_custom_call.1} parent=95 // pred_fallthru
          _
        %v1130 = vld [vmem:[#allocation2] sm:$0xff]
        %v1131 = vld [vmem:[#allocation2 + $0x8] sm:$0xff]
        %v1132 = vld [vmem:[#allocation2 + $0x10] sm:$0xff]
        %v1133 = vld [vmem:[#allocation2 + $0x18] sm:$0xff]
        %vm1134 = vcmask 261120
        %v1135 = vsel %vm1134, %v1130, 0.0
        %1136 = vadd.xlane.f32.xlu0 %v1135
        %v1137 = vpop.xlane.xlu0 %1136
        %v1138 = vsel %vm1134, %v1131, 0.0
        %1139 = vadd.xlane.f32.xlu0 %v1138
        %v1140 = vpop.xlane.xlu0 %1139
        %v1141 = vsel %vm1134, %v1132, 0.0
        %1142 = vadd.xlane.f32.xlu0 %v1141
        %v1143 = vpop.xlane.xlu0 %1142
        %v1144 = vsel %vm1134, %v1133, 0.0
        %1145 = vadd.xlane.f32.xlu0 %v1144
        %v1146 = vpop.xlane.xlu0 %1145
        %v1147 = vrcp.pop 32.0
        %v1148 = vmul.f32 32.0, %v1147
        %v1149 = vsub.f32 1.0, %v1148
        %v1150 = vmul.f32 %v1147, %v1149
        %v1151 = vadd.f32 %v1147, %v1150
        %vm1152 = vweird.f32 %v1147
        %v1153 = vsel %vm1152, %v1147, %v1151
        %v1154 = vmul.f32 %v1137, %v1153
        %v1155 = vmul.f32 %v1140, %v1153
        %v1156 = vmul.f32 %v1143, %v1153
        %v1157 = vmul.f32 %v1146, %v1153
        %v1158 = vsub.f32 %v1130, %v1154
        %v1159 = vsub.f32 %v1131, %v1155
        %v1160 = vsub.f32 %v1132, %v1156
        %v1161 = vsub.f32 %v1133, %v1157
        %v1162 = vmul.f32 %v1158, %v1158
        %v1163 = vmul.f32 %v1159, %v1159
        %v1164 = vmul.f32 %v1160, %v1160
        %v1165 = vmul.f32 %v1161, %v1161
        %v1166 = vsel %vm1134, %v1162, 0.0
        %1167 = vadd.xlane.f32.xlu0 %v1166
        %v1168 = vpop.xlane.xlu0 %1167
        %v1169 = vsel %vm1134, %v1163, 0.0
        %1170 = vadd.xlane.f32.xlu0 %v1169
        %v1171 = vpop.xlane.xlu0 %1170
        %v1172 = vsel %vm1134, %v1164, 0.0
        %1173 = vadd.xlane.f32.xlu0 %v1172
        %v1174 = vpop.xlane.xlu0 %1173
        %v1175 = vsel %vm1134, %v1165, 0.0
        %1176 = vadd.xlane.f32.xlu0 %v1175
        %v1177 = vpop.xlane.xlu0 %1176
        %v1178 = vmul.f32 %v1168, %v1153
        %v1179 = vmul.f32 %v1171, %v1153
        %v1180 = vmul.f32 %v1174, %v1153
        %v1181 = vmul.f32 %v1177, %v1153
        %v1182 = vadd.f32 %v1178, 1e-05
        %v1183 = vadd.f32 %v1179, 1e-05
        %v1184 = vadd.f32 %v1180, 1e-05
        %v1185 = vadd.f32 %v1181, 1e-05
        %v1186 = vrsqrt.pop %v1182
        %v1187 = vmul.f32 %v1186, %v1182
        %v1188 = vmul.f32 %v1187, %v1186
        %v1189 = vmul.f32 0.5, %v1188
        %v1190 = vsub.f32 1.5, %v1189
        %v1191 = vmul.f32 %v1186, %v1190
        %vm1192 = vweird.f32 %v1182
        %vm1193 = vweird.f32 %v1186
        %vm1194 = vmor %vm1192, %vm1193
        %v1195 = vsel %vm1194, %v1186, %v1191
        %v1196 = vrsqrt.pop %v1183
        %v1197 = vmul.f32 %v1196, %v1183
        %v1198 = vmul.f32 %v1197, %v1196
        %v1199 = vmul.f32 0.5, %v1198
        %v1200 = vsub.f32 1.5, %v1199
        %v1201 = vmul.f32 %v1196, %v1200
        %vm1202 = vweird.f32 %v1183
        %vm1203 = vweird.f32 %v1196
        %vm1204 = vmor %vm1202, %vm1203
        %v1205 = vsel %vm1204, %v1196, %v1201
        %v1206 = vrsqrt.pop %v1184
        %v1207 = vmul.f32 %v1206, %v1184
        %v1208 = vmul.f32 %v1207, %v1206
        %v1209 = vmul.f32 0.5, %v1208
        %v1210 = vsub.f32 1.5, %v1209
        %v1211 = vmul.f32 %v1206, %v1210
        %vm1212 = vweird.f32 %v1184
        %vm1213 = vweird.f32 %v1206
        %vm1214 = vmor %vm1212, %vm1213
        %v1215 = vsel %vm1214, %v1206, %v1211
        %v1216 = vrsqrt.pop %v1185
        %v1217 = vmul.f32 %v1216, %v1185
        %v1218 = vmul.f32 %v1217, %v1216
        %v1219 = vmul.f32 0.5, %v1218
        %v1220 = vsub.f32 1.5, %v1219
        %v1221 = vmul.f32 %v1216, %v1220
        %vm1222 = vweird.f32 %v1185
        %vm1223 = vweird.f32 %v1216
        %vm1224 = vmor %vm1222, %vm1223
        %v1225 = vsel %vm1224, %v1216, %v1221
        %v1226 = vmul.f32 %v1158, %v1195
        %v1227 = vmul.f32 %v1159, %v1205
        %v1228 = vmul.f32 %v1160, %v1215
        %v1229 = vmul.f32 %v1161, %v1225
        %v1230 = vpack.c.bf16 %v1227, %v1226
        %v1231 = vpack.c.bf16 %v1229, %v1228
        %v1232 = vld [vmem:[%s822] sm:$0xf]
        %v1233 = vld [vmem:[%s822 + $0x4] sm:$0xf]
        %v1234 = vld [vmem:[%s822 + $0x8] sm:$0xf]
        %v1235 = vld [vmem:[%s822 + $0xc] sm:$0xf]
        %v1236 = vld [vmem:[%s830] sm:$0x1]
        %v1238 = vperm.slane %v1236, 0
        %v1244 = vunpack.c.l.b16 %v1232
        %v1245 = vunpack.c.l.b16 %v1233
        %v1246 = vunpack.c.l.b16 %v1234
        %v1247 = vunpack.c.l.b16 %v1235
        %v1248 = vpack.c.b16 %v1245, %v1244
        %v1249 = vpack.c.b16 %v1247, %v1246
        %v1253 = vsel %vm1134, %v1230, 0
        %v1256 = vsel %vm1134, %v1231, 0
        %1258 = vmatpush.bf16.msra.mxu0 0
        %1259 = vmatpush.bf16.msra.mxu0 0
        %1260 = vmatpush.bf16.msra.mxu0 0
        %1261 = vmatpush.bf16.msra.mxu0 0
        %1262 = vmatpush.bf16.msra.mxu0 0
        %1263 = vmatpush.bf16.msra.mxu0 0
        %1264 = vmatpush.bf16.msra.mxu0 %v1249
        %1265 = vmatpush.bf16.msra.mxu0 %v1248
        %1266 = vmatmul.bf16.gmra.mxu0 %v1253
        %v1267 = vpop.f32.mrf.mxu0
        %v1268 = vadd.f32 %v1238, %v1267
        %v1269 = vpop.f32.mrf.mxu0
        %v1270 = vadd.f32 %v1238, %v1269
        %1271 = vmatmul.bf16.gmra.mxu0 %v1256
        %v1272 = vpop.f32.mrf.mxu0
        %v1273 = vadd.f32 %v1238, %v1272
        %v1274 = vpop.f32.mrf.mxu0
        %v1275 = vadd.f32 %v1238, %v1274
        %1276 = vdwg.mxu0
        %v1277 = vld [vmem:[%s827] sm:$0xf]
        %v1278 = vld [vmem:[%s827 + $0x4] sm:$0xf]
        %v1279 = vld [vmem:[%s827 + $0x8] sm:$0xf]
        %v1280 = vld [vmem:[%s827 + $0xc] sm:$0xf]
        %v1281 = vld [vmem:[%s833] sm:$0x1]
        %v1283 = vperm.slane %v1281, 0
        %v1289 = vunpack.c.l.b16 %v1277
        %v1290 = vunpack.c.l.b16 %v1278
        %v1291 = vunpack.c.l.b16 %v1279
        %v1292 = vunpack.c.l.b16 %v1280
        %v1293 = vpack.c.b16 %v1290, %v1289
        %v1294 = vpack.c.b16 %v1292, %v1291
        %1297 = vmatpush.bf16.msra.mxu0 0
        %1298 = vmatpush.bf16.msra.mxu0 0
        %1299 = vmatpush.bf16.msra.mxu0 0
        %1300 = vmatpush.bf16.msra.mxu0 0
        %1301 = vmatpush.bf16.msra.mxu0 0
        %1302 = vmatpush.bf16.msra.mxu0 0
        %1303 = vmatpush.bf16.msra.mxu0 %v1294
        %1304 = vmatpush.bf16.msra.mxu0 %v1293
        %1305 = vmatmul.bf16.gmra.mxu0 %v1253
        %v1306 = vpop.f32.mrf.mxu0
        %v1307 = vadd.f32 %v1283, %v1306
        %v1308 = vpop.f32.mrf.mxu0
        %v1309 = vadd.f32 %v1283, %v1308
        %1310 = vmatmul.bf16.gmra.mxu0 %v1256
        %v1311 = vpop.f32.mrf.mxu0
        %v1312 = vadd.f32 %v1283, %v1311
        %v1313 = vpop.f32.mrf.mxu0
        %v1314 = vadd.f32 %v1283, %v1313
        %1315 = vdwg.mxu0
        %v1316 = vld [vmem:[%s707] sm:$0xf]
        %v1317 = vld [vmem:[%s707 + $0x4] sm:$0xf]
        %v1318 = vld [vmem:[%s707 + $0x8] sm:$0xf]
        %v1319 = vld [vmem:[%s707 + $0xc] sm:$0xf]
        %v1320 = vld [vmem:[%s836] sm:$0x1]
        %v1322 = vperm.slane %v1320, 0
        %v1328 = vunpack.c.l.b16 %v1316
        %v1329 = vunpack.c.l.b16 %v1317
        %v1330 = vunpack.c.l.b16 %v1318
        %v1331 = vunpack.c.l.b16 %v1319
        %v1332 = vpack.c.b16 %v1329, %v1328
        %v1333 = vpack.c.b16 %v1331, %v1330
        %1336 = vmatpush.bf16.msra.mxu0 0
        %1337 = vmatpush.bf16.msra.mxu0 0
        %1338 = vmatpush.bf16.msra.mxu0 0
        %1339 = vmatpush.bf16.msra.mxu0 0
        %1340 = vmatpush.bf16.msra.mxu0 0
        %1341 = vmatpush.bf16.msra.mxu0 0
        %1342 = vmatpush.bf16.msra.mxu0 %v1333
        %1343 = vmatpush.bf16.msra.mxu0 %v1332
        %1344 = vmatmul.bf16.gmra.mxu0 %v1253
        %v1345 = vpop.f32.mrf.mxu0
        %v1346 = vadd.f32 %v1322, %v1345
        %v1347 = vpop.f32.mrf.mxu0
        %v1348 = vadd.f32 %v1322, %v1347
        %1349 = vmatmul.bf16.gmra.mxu0 %v1256
        %v1350 = vpop.f32.mrf.mxu0
        %v1351 = vadd.f32 %v1322, %v1350
        %v1352 = vpop.f32.mrf.mxu0
        %v1353 = vadd.f32 %v1322, %v1352
        %1354 = vdwg.mxu0
        %s1355 = sld [smem:[#allocation4]]
        %s1356 = smul.u32 %s1355, 16
        %s1357 = scalar_lea.vmem %s3, %s1356
        %v1358 = vld [vmem:[%s1357] sm:$0xff]
        %v1359 = vld [vmem:[%s1357 + $0x8] sm:$0xff]
        %s1360 = sld [smem:[#allocation4 + $0x1]]
        %s1361 = smul.u32 %s1360, 16
        %s1362 = scalar_lea.vmem %s3, %s1361
        %v1363 = vld [vmem:[%s1362] sm:$0xff]
        %v1364 = vld [vmem:[%s1362 + $0x8] sm:$0xff]
        %1367 = vrot.lane.b32.xlu0 %v1268, 120
        %v1368 = vpop.permute.xlu0 %1367
        %1369 = vrot.lane.b32.xlu0 %v1270, 120
        %v1370 = vpop.permute.xlu0 %1369
        %1373 = vrot.lane.b32.xlu0 %v1268, 112
        %v1374 = vpop.permute.xlu0 %1373
        %1375 = vrot.lane.b32.xlu0 %v1270, 112
        %v1376 = vpop.permute.xlu0 %1375
        %1379 = vrot.lane.b32.xlu0 %v1268, 104
        %v1380 = vpop.permute.xlu0 %1379
        %1381 = vrot.lane.b32.xlu0 %v1270, 104
        %v1382 = vpop.permute.xlu0 %1381
        %1387 = vrot.lane.b32.xlu0 %v1273, 120
        %v1388 = vpop.permute.xlu0 %1387
        %1389 = vrot.lane.b32.xlu0 %v1275, 120
        %v1390 = vpop.permute.xlu0 %1389
        %1393 = vrot.lane.b32.xlu0 %v1273, 112
        %v1394 = vpop.permute.xlu0 %1393
        %1395 = vrot.lane.b32.xlu0 %v1275, 112
        %v1396 = vpop.permute.xlu0 %1395
        %1399 = vrot.lane.b32.xlu0 %v1273, 104
        %v1400 = vpop.permute.xlu0 %1399
        %1401 = vrot.lane.b32.xlu0 %v1275, 104
        %v1402 = vpop.permute.xlu0 %1401
        %v1405 = vpack.c.bf16 %v1268, %v1268
        %v1406 = vpack.c.bf16 %v1270, %v1270
        %v1407 = vpack.c.bf16 %v1368, %v1368
        %v1408 = vpack.c.bf16 %v1370, %v1370
        %v1409 = vpack.c.bf16 %v1374, %v1374
        %v1410 = vpack.c.bf16 %v1376, %v1376
        %v1411 = vpack.c.bf16 %v1380, %v1380
        %v1412 = vpack.c.bf16 %v1382, %v1382
        %v1413 = vpack.c.bf16 %v1273, %v1273
        %v1414 = vpack.c.bf16 %v1275, %v1275
        %v1415 = vpack.c.bf16 %v1388, %v1388
        %v1416 = vpack.c.bf16 %v1390, %v1390
        %v1417 = vpack.c.bf16 %v1394, %v1394
        %v1418 = vpack.c.bf16 %v1396, %v1396
        %v1419 = vpack.c.bf16 %v1400, %v1400
        %v1420 = vpack.c.bf16 %v1402, %v1402
        %1423 = vrot.lane.b32.xlu0 %v1307, 120
        %v1424 = vpop.permute.xlu0 %1423
        %1425 = vrot.lane.b32.xlu0 %v1309, 120
        %v1426 = vpop.permute.xlu0 %1425
        %1429 = vrot.lane.b32.xlu0 %v1307, 112
        %v1430 = vpop.permute.xlu0 %1429
        %1431 = vrot.lane.b32.xlu0 %v1309, 112
        %v1432 = vpop.permute.xlu0 %1431
        %1435 = vrot.lane.b32.xlu0 %v1307, 104
        %v1436 = vpop.permute.xlu0 %1435
        %1437 = vrot.lane.b32.xlu0 %v1309, 104
        %v1438 = vpop.permute.xlu0 %1437
        %1443 = vrot.lane.b32.xlu0 %v1312, 120
        %v1444 = vpop.permute.xlu0 %1443
        %1445 = vrot.lane.b32.xlu0 %v1314, 120
        %v1446 = vpop.permute.xlu0 %1445
        %1449 = vrot.lane.b32.xlu0 %v1312, 112
        %v1450 = vpop.permute.xlu0 %1449
        %1451 = vrot.lane.b32.xlu0 %v1314, 112
        %v1452 = vpop.permute.xlu0 %1451
        %1455 = vrot.lane.b32.xlu0 %v1312, 104
        %v1456 = vpop.permute.xlu0 %1455
        %1457 = vrot.lane.b32.xlu0 %v1314, 104
        %v1458 = vpop.permute.xlu0 %1457
        %v1461 = vpack.c.bf16 %v1307, %v1307
        %v1462 = vpack.c.bf16 %v1309, %v1309
        %v1463 = vpack.c.bf16 %v1424, %v1424
        %v1464 = vpack.c.bf16 %v1426, %v1426
        %v1465 = vpack.c.bf16 %v1430, %v1430
        %v1466 = vpack.c.bf16 %v1432, %v1432
        %v1467 = vpack.c.bf16 %v1436, %v1436
        %v1468 = vpack.c.bf16 %v1438, %v1438
        %v1469 = vpack.c.bf16 %v1312, %v1312
        %v1470 = vpack.c.bf16 %v1314, %v1314
        %v1471 = vpack.c.bf16 %v1444, %v1444
        %v1472 = vpack.c.bf16 %v1446, %v1446
        %v1473 = vpack.c.bf16 %v1450, %v1450
        %v1474 = vpack.c.bf16 %v1452, %v1452
        %v1475 = vpack.c.bf16 %v1456, %v1456
        %v1476 = vpack.c.bf16 %v1458, %v1458
        %1479 = vrot.lane.b32.xlu0 %v1346, 120
        %v1480 = vpop.permute.xlu0 %1479
        %1481 = vrot.lane.b32.xlu0 %v1348, 120
        %v1482 = vpop.permute.xlu0 %1481
        %1485 = vrot.lane.b32.xlu0 %v1346, 112
        %v1486 = vpop.permute.xlu0 %1485
        %1487 = vrot.lane.b32.xlu0 %v1348, 112
        %v1488 = vpop.permute.xlu0 %1487
        %1491 = vrot.lane.b32.xlu0 %v1346, 104
        %v1492 = vpop.permute.xlu0 %1491
        %1493 = vrot.lane.b32.xlu0 %v1348, 104
        %v1494 = vpop.permute.xlu0 %1493
        %1499 = vrot.lane.b32.xlu0 %v1351, 120
        %v1500 = vpop.permute.xlu0 %1499
        %1501 = vrot.lane.b32.xlu0 %v1353, 120
        %v1502 = vpop.permute.xlu0 %1501
        %1505 = vrot.lane.b32.xlu0 %v1351, 112
        %v1506 = vpop.permute.xlu0 %1505
        %1507 = vrot.lane.b32.xlu0 %v1353, 112
        %v1508 = vpop.permute.xlu0 %1507
        %1511 = vrot.lane.b32.xlu0 %v1351, 104
        %v1512 = vpop.permute.xlu0 %1511
        %1513 = vrot.lane.b32.xlu0 %v1353, 104
        %v1514 = vpop.permute.xlu0 %1513
        %v1517 = vpack.c.bf16 %v1346, %v1346
        %v1518 = vpack.c.bf16 %v1348, %v1348
        %v1519 = vpack.c.bf16 %v1480, %v1480
        %v1520 = vpack.c.bf16 %v1482, %v1482
        %v1521 = vpack.c.bf16 %v1486, %v1486
        %v1522 = vpack.c.bf16 %v1488, %v1488
        %v1523 = vpack.c.bf16 %v1492, %v1492
        %v1524 = vpack.c.bf16 %v1494, %v1494
        %v1525 = vpack.c.bf16 %v1351, %v1351
        %v1526 = vpack.c.bf16 %v1353, %v1353
        %v1527 = vpack.c.bf16 %v1500, %v1500
        %v1528 = vpack.c.bf16 %v1502, %v1502
        %v1529 = vpack.c.bf16 %v1506, %v1506
        %v1530 = vpack.c.bf16 %v1508, %v1508
        %v1531 = vpack.c.bf16 %v1512, %v1512
        %v1532 = vpack.c.bf16 %v1514, %v1514
        %v1535 = vunpack.c.l.b16 %v1405
        %v1536 = vunpack.c.l.b16 %v1406
        %v1537 = vpack.c.b16 %v1536, %v1535
        %v1540 = vunpack.c.l.b16 %v1461
        %v1541 = vunpack.c.l.b16 %v1462
        %v1542 = vpack.c.b16 %v1541, %v1540
        %vm1543 = vcmask 64512
        %v1545 = vsel %vm1543, %v1537, 0
        %v1548 = vsel %vm1543, %v1542, 0
        %1550 = vmatpush.bf16.xpose.msra.mxu0 0
        %1551 = vmatpush.bf16.xpose.msra.mxu0 0
        %1552 = vmatpush.bf16.xpose.msra.mxu0 0
        %1553 = vmatpush.bf16.xpose.msra.mxu0 0
        %1554 = vmatpush.bf16.xpose.msra.mxu0 0
        %1555 = vmatpush.bf16.xpose.msra.mxu0 0
        %1556 = vmatpush.bf16.xpose.msra.mxu0 0
        %1557 = vmatpush.bf16.xpose.msra.mxu0 %v1548
        %1558 = vmatmul.bf16.gmra.mxu0 %v1545
        %v1559 = vpop.f32.mrf.mxu0
        %v1560 = vadd.f32 %v1358, %v1559
        %v1561 = vpop.f32.mrf.mxu0
        %v1562 = vadd.f32 %v1359, %v1561
        %1563 = vdwg.mxu0
        %v1566 = vunpack.c.l.b16 %v1407
        %v1567 = vunpack.c.l.b16 %v1408
        %v1568 = vpack.c.b16 %v1567, %v1566
        %v1571 = vunpack.c.l.b16 %v1463
        %v1572 = vunpack.c.l.b16 %v1464
        %v1573 = vpack.c.b16 %v1572, %v1571
        %v1575 = vsel %vm1543, %v1568, 0
        %v1578 = vsel %vm1543, %v1573, 0
        %1580 = vmatpush.bf16.xpose.msra.mxu0 0
        %1581 = vmatpush.bf16.xpose.msra.mxu0 0
        %1582 = vmatpush.bf16.xpose.msra.mxu0 0
        %1583 = vmatpush.bf16.xpose.msra.mxu0 0
        %1584 = vmatpush.bf16.xpose.msra.mxu0 0
        %1585 = vmatpush.bf16.xpose.msra.mxu0 0
        %1586 = vmatpush.bf16.xpose.msra.mxu0 0
        %1587 = vmatpush.bf16.xpose.msra.mxu0 %v1578
        %1588 = vmatmul.bf16.gmra.mxu0 %v1575
        %v1589 = vpop.f32.mrf.mxu0
        %v1590 = vadd.f32 %v1358, %v1589
        %v1591 = vpop.f32.mrf.mxu0
        %v1592 = vadd.f32 %v1359, %v1591
        %1593 = vdwg.mxu0
        %v1596 = vunpack.c.l.b16 %v1409
        %v1597 = vunpack.c.l.b16 %v1410
        %v1598 = vpack.c.b16 %v1597, %v1596
        %v1601 = vunpack.c.l.b16 %v1465
        %v1602 = vunpack.c.l.b16 %v1466
        %v1603 = vpack.c.b16 %v1602, %v1601
        %v1605 = vsel %vm1543, %v1598, 0
        %v1608 = vsel %vm1543, %v1603, 0
        %1610 = vmatpush.bf16.xpose.msra.mxu0 0
        %1611 = vmatpush.bf16.xpose.msra.mxu0 0
        %1612 = vmatpush.bf16.xpose.msra.mxu0 0
        %1613 = vmatpush.bf16.xpose.msra.mxu0 0
        %1614 = vmatpush.bf16.xpose.msra.mxu0 0
        %1615 = vmatpush.bf16.xpose.msra.mxu0 0
        %1616 = vmatpush.bf16.xpose.msra.mxu0 0
        %1617 = vmatpush.bf16.xpose.msra.mxu0 %v1608
        %1618 = vmatmul.bf16.gmra.mxu0 %v1605
        %v1619 = vpop.f32.mrf.mxu0
        %v1620 = vadd.f32 %v1358, %v1619
        %v1621 = vpop.f32.mrf.mxu0
        %v1622 = vadd.f32 %v1359, %v1621
        %1623 = vdwg.mxu0
        %v1626 = vunpack.c.l.b16 %v1411
        %v1627 = vunpack.c.l.b16 %v1412
        %v1628 = vpack.c.b16 %v1627, %v1626
        %v1631 = vunpack.c.l.b16 %v1467
        %v1632 = vunpack.c.l.b16 %v1468
        %v1633 = vpack.c.b16 %v1632, %v1631
        %v1635 = vsel %vm1543, %v1628, 0
        %v1638 = vsel %vm1543, %v1633, 0
        %1640 = vmatpush.bf16.xpose.msra.mxu0 0
        %1641 = vmatpush.bf16.xpose.msra.mxu0 0
        %1642 = vmatpush.bf16.xpose.msra.mxu0 0
        %1643 = vmatpush.bf16.xpose.msra.mxu0 0
        %1644 = vmatpush.bf16.xpose.msra.mxu0 0
        %1645 = vmatpush.bf16.xpose.msra.mxu0 0
        %1646 = vmatpush.bf16.xpose.msra.mxu0 0
        %1647 = vmatpush.bf16.xpose.msra.mxu0 %v1638
        %1648 = vmatmul.bf16.gmra.mxu0 %v1635
        %v1649 = vpop.f32.mrf.mxu0
        %v1650 = vadd.f32 %v1358, %v1649
        %v1651 = vpop.f32.mrf.mxu0
        %v1652 = vadd.f32 %v1359, %v1651
        %1653 = vdwg.mxu0
        %v1656 = vunpack.c.l.b16 %v1413
        %v1657 = vunpack.c.l.b16 %v1414
        %v1658 = vpack.c.b16 %v1657, %v1656
        %v1661 = vunpack.c.l.b16 %v1469
        %v1662 = vunpack.c.l.b16 %v1470
        %v1663 = vpack.c.b16 %v1662, %v1661
        %v1665 = vsel %vm1543, %v1658, 0
        %v1668 = vsel %vm1543, %v1663, 0
        %1670 = vmatpush.bf16.xpose.msra.mxu0 0
        %1671 = vmatpush.bf16.xpose.msra.mxu0 0
        %1672 = vmatpush.bf16.xpose.msra.mxu0 0
        %1673 = vmatpush.bf16.xpose.msra.mxu0 0
        %1674 = vmatpush.bf16.xpose.msra.mxu0 0
        %1675 = vmatpush.bf16.xpose.msra.mxu0 0
        %1676 = vmatpush.bf16.xpose.msra.mxu0 0
        %1677 = vmatpush.bf16.xpose.msra.mxu0 %v1668
        %1678 = vmatmul.bf16.gmra.mxu0 %v1665
        %v1679 = vpop.f32.mrf.mxu0
        %v1680 = vadd.f32 %v1363, %v1679
        %v1681 = vpop.f32.mrf.mxu0
        %v1682 = vadd.f32 %v1364, %v1681
        %1683 = vdwg.mxu0
        %v1686 = vunpack.c.l.b16 %v1415
        %v1687 = vunpack.c.l.b16 %v1416
        %v1688 = vpack.c.b16 %v1687, %v1686
        %v1691 = vunpack.c.l.b16 %v1471
        %v1692 = vunpack.c.l.b16 %v1472
        %v1693 = vpack.c.b16 %v1692, %v1691
        %v1695 = vsel %vm1543, %v1688, 0
        %v1698 = vsel %vm1543, %v1693, 0
        %1700 = vmatpush.bf16.xpose.msra.mxu0 0
        %1701 = vmatpush.bf16.xpose.msra.mxu0 0
        %1702 = vmatpush.bf16.xpose.msra.mxu0 0
        %1703 = vmatpush.bf16.xpose.msra.mxu0 0
        %1704 = vmatpush.bf16.xpose.msra.mxu0 0
        %1705 = vmatpush.bf16.xpose.msra.mxu0 0
        %1706 = vmatpush.bf16.xpose.msra.mxu0 0
        %1707 = vmatpush.bf16.xpose.msra.mxu0 %v1698
        %1708 = vmatmul.bf16.gmra.mxu0 %v1695
        %v1709 = vpop.f32.mrf.mxu0
        %v1710 = vadd.f32 %v1363, %v1709
        %v1711 = vpop.f32.mrf.mxu0
        %v1712 = vadd.f32 %v1364, %v1711
        %1713 = vdwg.mxu0
        %v1716 = vunpack.c.l.b16 %v1417
        %v1717 = vunpack.c.l.b16 %v1418
        %v1718 = vpack.c.b16 %v1717, %v1716
        %v1721 = vunpack.c.l.b16 %v1473
        %v1722 = vunpack.c.l.b16 %v1474
        %v1723 = vpack.c.b16 %v1722, %v1721
        %v1725 = vsel %vm1543, %v1718, 0
        %v1728 = vsel %vm1543, %v1723, 0
        %1730 = vmatpush.bf16.xpose.msra.mxu0 0
        %1731 = vmatpush.bf16.xpose.msra.mxu0 0
        %1732 = vmatpush.bf16.xpose.msra.mxu0 0
        %1733 = vmatpush.bf16.xpose.msra.mxu0 0
        %1734 = vmatpush.bf16.xpose.msra.mxu0 0
        %1735 = vmatpush.bf16.xpose.msra.mxu0 0
        %1736 = vmatpush.bf16.xpose.msra.mxu0 0
        %1737 = vmatpush.bf16.xpose.msra.mxu0 %v1728
        %1738 = vmatmul.bf16.gmra.mxu0 %v1725
        %v1739 = vpop.f32.mrf.mxu0
        %v1740 = vadd.f32 %v1363, %v1739
        %v1741 = vpop.f32.mrf.mxu0
        %v1742 = vadd.f32 %v1364, %v1741
        %1743 = vdwg.mxu0
        %v1746 = vunpack.c.l.b16 %v1419
        %v1747 = vunpack.c.l.b16 %v1420
        %v1748 = vpack.c.b16 %v1747, %v1746
        %v1751 = vunpack.c.l.b16 %v1475
        %v1752 = vunpack.c.l.b16 %v1476
        %v1753 = vpack.c.b16 %v1752, %v1751
        %v1755 = vsel %vm1543, %v1748, 0
        %v1758 = vsel %vm1543, %v1753, 0
        %1760 = vmatpush.bf16.xpose.msra.mxu0 0
        %1761 = vmatpush.bf16.xpose.msra.mxu0 0
        %1762 = vmatpush.bf16.xpose.msra.mxu0 0
        %1763 = vmatpush.bf16.xpose.msra.mxu0 0
        %1764 = vmatpush.bf16.xpose.msra.mxu0 0
        %1765 = vmatpush.bf16.xpose.msra.mxu0 0
        %1766 = vmatpush.bf16.xpose.msra.mxu0 0
        %1767 = vmatpush.bf16.xpose.msra.mxu0 %v1758
        %1768 = vmatmul.bf16.gmra.mxu0 %v1755
        %v1769 = vpop.f32.mrf.mxu0
        %v1770 = vadd.f32 %v1363, %v1769
        %v1771 = vpop.f32.mrf.mxu0
        %v1772 = vadd.f32 %v1364, %v1771
        %1773 = vdwg.mxu0
        %vm1774 = vcmask 130048
        %v1775 = vsel %vm1774, %v1560, -inf
        %1776 = vmax.xlane.f32.xlu0 %v1775
        %v1777 = vpop.xlane.xlu0 %1776
        %v1778 = vsel %vm1774, %v1562, -inf
        %1779 = vmax.xlane.f32.xlu0 %v1778
        %v1780 = vpop.xlane.xlu0 %1779
        %v1781 = vsel %vm1774, %v1590, -inf
        %1782 = vmax.xlane.f32.xlu0 %v1781
        %v1783 = vpop.xlane.xlu0 %1782
        %v1784 = vsel %vm1774, %v1592, -inf
        %1785 = vmax.xlane.f32.xlu0 %v1784
        %v1786 = vpop.xlane.xlu0 %1785
        %v1787 = vsel %vm1774, %v1620, -inf
        %1788 = vmax.xlane.f32.xlu0 %v1787
        %v1789 = vpop.xlane.xlu0 %1788
        %v1790 = vsel %vm1774, %v1622, -inf
        %1791 = vmax.xlane.f32.xlu0 %v1790
        %v1792 = vpop.xlane.xlu0 %1791
        %v1793 = vsel %vm1774, %v1650, -inf
        %1794 = vmax.xlane.f32.xlu0 %v1793
        %v1795 = vpop.xlane.xlu0 %1794
        %v1796 = vsel %vm1774, %v1652, -inf
        %1797 = vmax.xlane.f32.xlu0 %v1796
        %v1798 = vpop.xlane.xlu0 %1797
        %v1799 = vsel %vm1774, %v1680, -inf
        %1800 = vmax.xlane.f32.xlu0 %v1799
        %v1801 = vpop.xlane.xlu0 %1800
        %v1802 = vsel %vm1774, %v1682, -inf
        %1803 = vmax.xlane.f32.xlu0 %v1802
        %v1804 = vpop.xlane.xlu0 %1803
        %v1805 = vsel %vm1774, %v1710, -inf
        %1806 = vmax.xlane.f32.xlu0 %v1805
        %v1807 = vpop.xlane.xlu0 %1806
        %v1808 = vsel %vm1774, %v1712, -inf
        %1809 = vmax.xlane.f32.xlu0 %v1808
        %v1810 = vpop.xlane.xlu0 %1809
        %v1811 = vsel %vm1774, %v1740, -inf
        %1812 = vmax.xlane.f32.xlu0 %v1811
        %v1813 = vpop.xlane.xlu0 %1812
        %v1814 = vsel %vm1774, %v1742, -inf
        %1815 = vmax.xlane.f32.xlu0 %v1814
        %v1816 = vpop.xlane.xlu0 %1815
        %v1817 = vsel %vm1774, %v1770, -inf
        %1818 = vmax.xlane.f32.xlu0 %v1817
        %v1819 = vpop.xlane.xlu0 %1818
        %v1820 = vsel %vm1774, %v1772, -inf
        %1821 = vmax.xlane.f32.xlu0 %v1820
        %v1822 = vpop.xlane.xlu0 %1821
        %v1823 = vsub.f32 %v1560, %v1777
        %v1824 = vsub.f32 %v1562, %v1780
        %v1825 = vsub.f32 %v1590, %v1783
        %v1826 = vsub.f32 %v1592, %v1786
        %v1827 = vsub.f32 %v1620, %v1789
        %v1828 = vsub.f32 %v1622, %v1792
        %v1829 = vsub.f32 %v1650, %v1795
        %v1830 = vsub.f32 %v1652, %v1798
        %v1831 = vsub.f32 %v1680, %v1801
        %v1832 = vsub.f32 %v1682, %v1804
        %v1833 = vsub.f32 %v1710, %v1807
        %v1834 = vsub.f32 %v1712, %v1810
        %v1835 = vsub.f32 %v1740, %v1813
        %v1836 = vsub.f32 %v1742, %v1816
        %v1837 = vsub.f32 %v1770, %v1819
        %v1838 = vsub.f32 %v1772, %v1822
        %v1839 = vmul.f32 %v1823, 1.442695
        %v1840 = vpow.pop %v1839
        %v1841 = vmul.f32 %v1824, 1.442695
        %v1842 = vpow.pop %v1841
        %v1843 = vmul.f32 %v1825, 1.442695
        %v1844 = vpow.pop %v1843
        %v1845 = vmul.f32 %v1826, 1.442695
        %v1846 = vpow.pop %v1845
        %v1847 = vmul.f32 %v1827, 1.442695
        %v1848 = vpow.pop %v1847
        %v1849 = vmul.f32 %v1828, 1.442695
        %v1850 = vpow.pop %v1849
        %v1851 = vmul.f32 %v1829, 1.442695
        %v1852 = vpow.pop %v1851
        %v1853 = vmul.f32 %v1830, 1.442695
        %v1854 = vpow.pop %v1853
        %v1855 = vmul.f32 %v1831, 1.442695
        %v1856 = vpow.pop %v1855
        %v1857 = vmul.f32 %v1832, 1.442695
        %v1858 = vpow.pop %v1857
        %v1859 = vmul.f32 %v1833, 1.442695
        %v1860 = vpow.pop %v1859
        %v1861 = vmul.f32 %v1834, 1.442695
        %v1862 = vpow.pop %v1861
        %v1863 = vmul.f32 %v1835, 1.442695
        %v1864 = vpow.pop %v1863
        %v1865 = vmul.f32 %v1836, 1.442695
        %v1866 = vpow.pop %v1865
        %v1867 = vmul.f32 %v1837, 1.442695
        %v1868 = vpow.pop %v1867
        %v1869 = vmul.f32 %v1838, 1.442695
        %v1870 = vpow.pop %v1869
        %v1871 = vsel %vm1774, %v1840, 0.0
        %1872 = vadd.xlane.f32.xlu0 %v1871
        %v1873 = vpop.xlane.xlu0 %1872
        %v1874 = vsel %vm1774, %v1842, 0.0
        %1875 = vadd.xlane.f32.xlu0 %v1874
        %v1876 = vpop.xlane.xlu0 %1875
        %v1877 = vsel %vm1774, %v1844, 0.0
        %1878 = vadd.xlane.f32.xlu0 %v1877
        %v1879 = vpop.xlane.xlu0 %1878
        %v1880 = vsel %vm1774, %v1846, 0.0
        %1881 = vadd.xlane.f32.xlu0 %v1880
        %v1882 = vpop.xlane.xlu0 %1881
        %v1883 = vsel %vm1774, %v1848, 0.0
        %1884 = vadd.xlane.f32.xlu0 %v1883
        %v1885 = vpop.xlane.xlu0 %1884
        %v1886 = vsel %vm1774, %v1850, 0.0
        %1887 = vadd.xlane.f32.xlu0 %v1886
        %v1888 = vpop.xlane.xlu0 %1887
        %v1889 = vsel %vm1774, %v1852, 0.0
        %1890 = vadd.xlane.f32.xlu0 %v1889
        %v1891 = vpop.xlane.xlu0 %1890
        %v1892 = vsel %vm1774, %v1854, 0.0
        %1893 = vadd.xlane.f32.xlu0 %v1892
        %v1894 = vpop.xlane.xlu0 %1893
        %v1895 = vsel %vm1774, %v1856, 0.0
        %1896 = vadd.xlane.f32.xlu0 %v1895
        %v1897 = vpop.xlane.xlu0 %1896
        %v1898 = vsel %vm1774, %v1858, 0.0
        %1899 = vadd.xlane.f32.xlu0 %v1898
        %v1900 = vpop.xlane.xlu0 %1899
        %v1901 = vsel %vm1774, %v1860, 0.0
        %1902 = vadd.xlane.f32.xlu0 %v1901
        %v1903 = vpop.xlane.xlu0 %1902
        %v1904 = vsel %vm1774, %v1862, 0.0
        %1905 = vadd.xlane.f32.xlu0 %v1904
        %v1906 = vpop.xlane.xlu0 %1905
        %v1907 = vsel %vm1774, %v1864, 0.0
        %1908 = vadd.xlane.f32.xlu0 %v1907
        %v1909 = vpop.xlane.xlu0 %1908
        %v1910 = vsel %vm1774, %v1866, 0.0
        %1911 = vadd.xlane.f32.xlu0 %v1910
        %v1912 = vpop.xlane.xlu0 %1911
        %v1913 = vsel %vm1774, %v1868, 0.0
        %1914 = vadd.xlane.f32.xlu0 %v1913
        %v1915 = vpop.xlane.xlu0 %1914
        %v1916 = vsel %vm1774, %v1870, 0.0
        %1917 = vadd.xlane.f32.xlu0 %v1916
        %v1918 = vpop.xlane.xlu0 %1917
        %v1919 = vrcp.pop %v1873
        %v1920 = vrcp.pop %v1876
        %v1921 = vrcp.pop %v1879
        %v1922 = vrcp.pop %v1882
        %v1923 = vrcp.pop %v1885
        %v1924 = vrcp.pop %v1888
        %v1925 = vrcp.pop %v1891
        %v1926 = vrcp.pop %v1894
        %v1927 = vrcp.pop %v1897
        %v1928 = vrcp.pop %v1900
        %v1929 = vrcp.pop %v1903
        %v1930 = vrcp.pop %v1906
        %v1931 = vrcp.pop %v1909
        %v1932 = vrcp.pop %v1912
        %v1933 = vrcp.pop %v1915
        %v1934 = vrcp.pop %v1918
        %v1935 = vmul.f32 %v1840, %v1919
        %v1936 = vmul.f32 %v1842, %v1920
        %v1937 = vmul.f32 %v1844, %v1921
        %v1938 = vmul.f32 %v1846, %v1922
        %v1939 = vmul.f32 %v1848, %v1923
        %v1940 = vmul.f32 %v1850, %v1924
        %v1941 = vmul.f32 %v1852, %v1925
        %v1942 = vmul.f32 %v1854, %v1926
        %v1943 = vmul.f32 %v1856, %v1927
        %v1944 = vmul.f32 %v1858, %v1928
        %v1945 = vmul.f32 %v1860, %v1929
        %v1946 = vmul.f32 %v1862, %v1930
        %v1947 = vmul.f32 %v1864, %v1931
        %v1948 = vmul.f32 %v1866, %v1932
        %v1949 = vmul.f32 %v1868, %v1933
        %v1950 = vmul.f32 %v1870, %v1934
        %v1951 = vpack.c.bf16 %v1935, %v1935
        %v1952 = vpack.c.bf16 %v1936, %v1936
        %v1953 = vpack.c.bf16 %v1937, %v1937
        %v1954 = vpack.c.bf16 %v1938, %v1938
        %v1955 = vpack.c.bf16 %v1939, %v1939
        %v1956 = vpack.c.bf16 %v1940, %v1940
        %v1957 = vpack.c.bf16 %v1941, %v1941
        %v1958 = vpack.c.bf16 %v1942, %v1942
        %v1959 = vpack.c.bf16 %v1943, %v1943
        %v1960 = vpack.c.bf16 %v1944, %v1944
        %v1961 = vpack.c.bf16 %v1945, %v1945
        %v1962 = vpack.c.bf16 %v1946, %v1946
        %v1963 = vpack.c.bf16 %v1947, %v1947
        %v1964 = vpack.c.bf16 %v1948, %v1948
        %v1965 = vpack.c.bf16 %v1949, %v1949
        %v1966 = vpack.c.bf16 %v1950, %v1950
        %v1969 = vunpack.c.l.b16 %v1951
        %v1970 = vunpack.c.l.b16 %v1952
        %v1971 = vpack.c.b16 %v1970, %v1969
        %v1974 = vunpack.c.l.b16 %v1517
        %v1975 = vunpack.c.l.b16 %v1518
        %v1976 = vpack.c.b16 %v1975, %v1974
        %v1979 = vsel %vm1774, %v1971, 0
        %1981 = vmatpush.bf16.msra.mxu0 0
        %1982 = vmatpush.bf16.msra.mxu0 0
        %1983 = vmatpush.bf16.msra.mxu0 0
        %1984 = vmatpush.bf16.msra.mxu0 0
        %1985 = vmatpush.bf16.msra.mxu0 0
        %1986 = vmatpush.bf16.msra.mxu0 0
        %1987 = vmatpush.bf16.msra.mxu0 0
        %1988 = vmatpush.bf16.msra.mxu0 %v1976
        %1989 = vmatmul.bf16.gmra.mxu0 %v1979
        %v1990 = vpop.f32.mrf.mxu0
        %v1991 = vadd.f32 0.0, %v1990
        %v1992 = vpop.f32.mrf.mxu0
        %v1993 = vadd.f32 0.0, %v1992
        %1994 = vdwg.mxu0
        %v1997 = vunpack.c.l.b16 %v1953
        %v1998 = vunpack.c.l.b16 %v1954
        %v1999 = vpack.c.b16 %v1998, %v1997
        %v2002 = vunpack.c.l.b16 %v1519
        %v2003 = vunpack.c.l.b16 %v1520
        %v2004 = vpack.c.b16 %v2003, %v2002
        %v2007 = vsel %vm1774, %v1999, 0
        %2009 = vmatpush.bf16.msra.mxu0 0
        %2010 = vmatpush.bf16.msra.mxu0 0
        %2011 = vmatpush.bf16.msra.mxu0 0
        %2012 = vmatpush.bf16.msra.mxu0 0
        %2013 = vmatpush.bf16.msra.mxu0 0
        %2014 = vmatpush.bf16.msra.mxu0 0
        %2015 = vmatpush.bf16.msra.mxu0 0
        %2016 = vmatpush.bf16.msra.mxu0 %v2004
        %2017 = vmatmul.bf16.gmra.mxu0 %v2007
        %v2018 = vpop.f32.mrf.mxu0
        %v2019 = vadd.f32 0.0, %v2018
        %v2020 = vpop.f32.mrf.mxu0
        %v2021 = vadd.f32 0.0, %v2020
        %2022 = vdwg.mxu0
        %v2025 = vunpack.c.l.b16 %v1955
        %v2026 = vunpack.c.l.b16 %v1956
        %v2027 = vpack.c.b16 %v2026, %v2025
        %v2030 = vunpack.c.l.b16 %v1521
        %v2031 = vunpack.c.l.b16 %v1522
        %v2032 = vpack.c.b16 %v2031, %v2030
        %v2035 = vsel %vm1774, %v2027, 0
        %2037 = vmatpush.bf16.msra.mxu0 0
        %2038 = vmatpush.bf16.msra.mxu0 0
        %2039 = vmatpush.bf16.msra.mxu0 0
        %2040 = vmatpush.bf16.msra.mxu0 0
        %2041 = vmatpush.bf16.msra.mxu0 0
        %2042 = vmatpush.bf16.msra.mxu0 0
        %2043 = vmatpush.bf16.msra.mxu0 0
        %2044 = vmatpush.bf16.msra.mxu0 %v2032
        %2045 = vmatmul.bf16.gmra.mxu0 %v2035
        %v2046 = vpop.f32.mrf.mxu0
        %v2047 = vadd.f32 0.0, %v2046
        %v2048 = vpop.f32.mrf.mxu0
        %v2049 = vadd.f32 0.0, %v2048
        %2050 = vdwg.mxu0
        %v2053 = vunpack.c.l.b16 %v1957
        %v2054 = vunpack.c.l.b16 %v1958
        %v2055 = vpack.c.b16 %v2054, %v2053
        %v2058 = vunpack.c.l.b16 %v1523
        %v2059 = vunpack.c.l.b16 %v1524
        %v2060 = vpack.c.b16 %v2059, %v2058
        %v2063 = vsel %vm1774, %v2055, 0
        %2065 = vmatpush.bf16.msra.mxu0 0
        %2066 = vmatpush.bf16.msra.mxu0 0
        %2067 = vmatpush.bf16.msra.mxu0 0
        %2068 = vmatpush.bf16.msra.mxu0 0
        %2069 = vmatpush.bf16.msra.mxu0 0
        %2070 = vmatpush.bf16.msra.mxu0 0
        %2071 = vmatpush.bf16.msra.mxu0 0
        %2072 = vmatpush.bf16.msra.mxu0 %v2060
        %2073 = vmatmul.bf16.gmra.mxu0 %v2063
        %v2074 = vpop.f32.mrf.mxu0
        %v2075 = vadd.f32 0.0, %v2074
        %v2076 = vpop.f32.mrf.mxu0
        %v2077 = vadd.f32 0.0, %v2076
        %2078 = vdwg.mxu0
        %v2081 = vunpack.c.l.b16 %v1959
        %v2082 = vunpack.c.l.b16 %v1960
        %v2083 = vpack.c.b16 %v2082, %v2081
        %v2086 = vunpack.c.l.b16 %v1525
        %v2087 = vunpack.c.l.b16 %v1526
        %v2088 = vpack.c.b16 %v2087, %v2086
        %v2091 = vsel %vm1774, %v2083, 0
        %2093 = vmatpush.bf16.msra.mxu0 0
        %2094 = vmatpush.bf16.msra.mxu0 0
        %2095 = vmatpush.bf16.msra.mxu0 0
        %2096 = vmatpush.bf16.msra.mxu0 0
        %2097 = vmatpush.bf16.msra.mxu0 0
        %2098 = vmatpush.bf16.msra.mxu0 0
        %2099 = vmatpush.bf16.msra.mxu0 0
        %2100 = vmatpush.bf16.msra.mxu0 %v2088
        %2101 = vmatmul.bf16.gmra.mxu0 %v2091
        %v2102 = vpop.f32.mrf.mxu0
        %v2103 = vadd.f32 0.0, %v2102
        %v2104 = vpop.f32.mrf.mxu0
        %v2105 = vadd.f32 0.0, %v2104
        %2106 = vdwg.mxu0
        %v2109 = vunpack.c.l.b16 %v1961
        %v2110 = vunpack.c.l.b16 %v1962
        %v2111 = vpack.c.b16 %v2110, %v2109
        %v2114 = vunpack.c.l.b16 %v1527
        %v2115 = vunpack.c.l.b16 %v1528
        %v2116 = vpack.c.b16 %v2115, %v2114
        %v2119 = vsel %vm1774, %v2111, 0
        %2121 = vmatpush.bf16.msra.mxu0 0
        %2122 = vmatpush.bf16.msra.mxu0 0
        %2123 = vmatpush.bf16.msra.mxu0 0
        %2124 = vmatpush.bf16.msra.mxu0 0
        %2125 = vmatpush.bf16.msra.mxu0 0
        %2126 = vmatpush.bf16.msra.mxu0 0
        %2127 = vmatpush.bf16.msra.mxu0 0
        %2128 = vmatpush.bf16.msra.mxu0 %v2116
        %2129 = vmatmul.bf16.gmra.mxu0 %v2119
        %v2130 = vpop.f32.mrf.mxu0
        %v2131 = vadd.f32 0.0, %v2130
        %v2132 = vpop.f32.mrf.mxu0
        %v2133 = vadd.f32 0.0, %v2132
        %2134 = vdwg.mxu0
        %v2137 = vunpack.c.l.b16 %v1963
        %v2138 = vunpack.c.l.b16 %v1964
        %v2139 = vpack.c.b16 %v2138, %v2137
        %v2142 = vunpack.c.l.b16 %v1529
        %v2143 = vunpack.c.l.b16 %v1530
        %v2144 = vpack.c.b16 %v2143, %v2142
        %v2147 = vsel %vm1774, %v2139, 0
        %2149 = vmatpush.bf16.msra.mxu0 0
        %2150 = vmatpush.bf16.msra.mxu0 0
        %2151 = vmatpush.bf16.msra.mxu0 0
        %2152 = vmatpush.bf16.msra.mxu0 0
        %2153 = vmatpush.bf16.msra.mxu0 0
        %2154 = vmatpush.bf16.msra.mxu0 0
        %2155 = vmatpush.bf16.msra.mxu0 0
        %2156 = vmatpush.bf16.msra.mxu0 %v2144
        %2157 = vmatmul.bf16.gmra.mxu0 %v2147
        %v2158 = vpop.f32.mrf.mxu0
        %v2159 = vadd.f32 0.0, %v2158
        %v2160 = vpop.f32.mrf.mxu0
        %v2161 = vadd.f32 0.0, %v2160
        %2162 = vdwg.mxu0
        %v2165 = vunpack.c.l.b16 %v1965
        %v2166 = vunpack.c.l.b16 %v1966
        %v2167 = vpack.c.b16 %v2166, %v2165
        %v2170 = vunpack.c.l.b16 %v1531
        %v2171 = vunpack.c.l.b16 %v1532
        %v2172 = vpack.c.b16 %v2171, %v2170
        %v2175 = vsel %vm1774, %v2167, 0
        %2177 = vmatpush.bf16.msra.mxu0 0
        %2178 = vmatpush.bf16.msra.mxu0 0
        %2179 = vmatpush.bf16.msra.mxu0 0
        %2180 = vmatpush.bf16.msra.mxu0 0
        %2181 = vmatpush.bf16.msra.mxu0 0
        %2182 = vmatpush.bf16.msra.mxu0 0
        %2183 = vmatpush.bf16.msra.mxu0 0
        %2184 = vmatpush.bf16.msra.mxu0 %v2172
        %2185 = vmatmul.bf16.gmra.mxu0 %v2175
        %v2186 = vpop.f32.mrf.mxu0
        %v2187 = vadd.f32 0.0, %v2186
        %v2188 = vpop.f32.mrf.mxu0
        %v2189 = vadd.f32 0.0, %v2188
        %2190 = vdwg.mxu0
        %2193 = vrot.lane.b32.xlu0 %v2019, 8
        %v2194 = vpop.permute.xlu0 %2193
        %2195 = vrot.lane.b32.xlu0 %v2021, 8
        %v2196 = vpop.permute.xlu0 %2195
        %2201 = vrot.lane.b32.xlu0 %v2047, 16
        %v2202 = vpop.permute.xlu0 %2201
        %2203 = vrot.lane.b32.xlu0 %v2049, 16
        %v2204 = vpop.permute.xlu0 %2203
        %2209 = vrot.lane.b32.xlu0 %v2075, 24
        %v2210 = vpop.permute.xlu0 %2209
        %2211 = vrot.lane.b32.xlu0 %v2077, 24
        %v2212 = vpop.permute.xlu0 %2211
        %v2215 = vsel %vm1543, %v1991, %v2194
        %v2216 = vsel %vm1543, %v1993, %v2196
        %v2217 = vsel %vm1774, %v2215, %v2202
        %v2218 = vsel %vm1774, %v2216, %v2204
        %vm2219 = vcmask 195584
        %v2220 = vsel %vm2219, %v2217, %v2210
        %v2221 = vsel %vm2219, %v2218, %v2212
        %2224 = vrot.lane.b32.xlu0 %v2131, 8
        %v2225 = vpop.permute.xlu0 %2224
        %2226 = vrot.lane.b32.xlu0 %v2133, 8
        %v2227 = vpop.permute.xlu0 %2226
        %2232 = vrot.lane.b32.xlu0 %v2159, 16
        %v2233 = vpop.permute.xlu0 %2232
        %2234 = vrot.lane.b32.xlu0 %v2161, 16
        %v2235 = vpop.permute.xlu0 %2234
        %2240 = vrot.lane.b32.xlu0 %v2187, 24
        %v2241 = vpop.permute.xlu0 %2240
        %2242 = vrot.lane.b32.xlu0 %v2189, 24
        %v2243 = vpop.permute.xlu0 %2242
        %v2246 = vsel %vm1543, %v2103, %v2225
        %v2247 = vsel %vm1543, %v2105, %v2227
        %v2248 = vsel %vm1774, %v2246, %v2233
        %v2249 = vsel %vm1774, %v2247, %v2235
        %v2250 = vsel %vm2219, %v2248, %v2241
        %v2251 = vsel %vm2219, %v2249, %v2243
        %v2252 = vpack.c.bf16 %v2221, %v2220
        %v2253 = vpack.c.bf16 %v2251, %v2250
        %v2254 = vld [vmem:[%s717] sm:$0xf]
        %v2255 = vld [vmem:[%s717 + $0x4] sm:$0xf]
        %v2256 = vld [vmem:[%s717 + $0x8] sm:$0xf]
        %v2257 = vld [vmem:[%s717 + $0xc] sm:$0xf]
        %v2262 = vunpack.c.l.b16 %v2254
        %v2263 = vunpack.c.l.b16 %v2255
        %v2264 = vunpack.c.l.b16 %v2256
        %v2265 = vunpack.c.l.b16 %v2257
        %v2266 = vpack.c.b16 %v2263, %v2262
        %v2267 = vpack.c.b16 %v2265, %v2264
        %v2271 = vsel %vm1134, %v2252, 0
        %v2274 = vsel %vm1134, %v2253, 0
        %2276 = vmatpush.bf16.msra.mxu0 0
        %2277 = vmatpush.bf16.msra.mxu0 0
        %2278 = vmatpush.bf16.msra.mxu0 0
        %2279 = vmatpush.bf16.msra.mxu0 0
        %2280 = vmatpush.bf16.msra.mxu0 0
        %2281 = vmatpush.bf16.msra.mxu0 0
        %2282 = vmatpush.bf16.msra.mxu0 %v2267
        %2283 = vmatpush.bf16.msra.mxu0 %v2266
        %2284 = vmatmul.bf16.gmra.mxu0 %v2271
        %v2285 = vpop.f32.mrf.mxu0
        %v2286 = vadd.f32 %v1130, %v2285
        %v2287 = vpop.f32.mrf.mxu0
        %v2288 = vadd.f32 %v1131, %v2287
        %2289 = vmatmul.bf16.gmra.mxu0 %v2274
        %v2290 = vpop.f32.mrf.mxu0
        %v2291 = vadd.f32 %v1132, %v2290
        %v2292 = vpop.f32.mrf.mxu0
        %v2293 = vadd.f32 %v1133, %v2292
        %2294 = vdwg.mxu0
        %v2295 = vsel %vm1134, %v2286, 0.0
        %2296 = vadd.xlane.f32.xlu0 %v2295
        %v2297 = vpop.xlane.xlu0 %2296
        %v2298 = vsel %vm1134, %v2288, 0.0
        %2299 = vadd.xlane.f32.xlu0 %v2298
        %v2300 = vpop.xlane.xlu0 %2299
        %v2301 = vsel %vm1134, %v2291, 0.0
        %2302 = vadd.xlane.f32.xlu0 %v2301
        %v2303 = vpop.xlane.xlu0 %2302
        %v2304 = vsel %vm1134, %v2293, 0.0
        %2305 = vadd.xlane.f32.xlu0 %v2304
        %v2306 = vpop.xlane.xlu0 %2305
        %v2307 = vmul.f32 %v2297, %v1153
        %v2308 = vmul.f32 %v2300, %v1153
        %v2309 = vmul.f32 %v2303, %v1153
        %v2310 = vmul.f32 %v2306, %v1153
        %v2311 = vsub.f32 %v2286, %v2307
        %v2312 = vsub.f32 %v2288, %v2308
        %v2313 = vsub.f32 %v2291, %v2309
        %v2314 = vsub.f32 %v2293, %v2310
        %v2315 = vmul.f32 %v2311, %v2311
        %v2316 = vmul.f32 %v2312, %v2312
        %v2317 = vmul.f32 %v2313, %v2313
        %v2318 = vmul.f32 %v2314, %v2314
        %v2319 = vsel %vm1134, %v2315, 0.0
        %2320 = vadd.xlane.f32.xlu0 %v2319
        %v2321 = vpop.xlane.xlu0 %2320
        %v2322 = vsel %vm1134, %v2316, 0.0
        %2323 = vadd.xlane.f32.xlu0 %v2322
        %v2324 = vpop.xlane.xlu0 %2323
        %v2325 = vsel %vm1134, %v2317, 0.0
        %2326 = vadd.xlane.f32.xlu0 %v2325
        %v2327 = vpop.xlane.xlu0 %2326
        %v2328 = vsel %vm1134, %v2318, 0.0
        %2329 = vadd.xlane.f32.xlu0 %v2328
        %v2330 = vpop.xlane.xlu0 %2329
        %v2331 = vmul.f32 %v2321, %v1153
        %v2332 = vmul.f32 %v2324, %v1153
        %v2333 = vmul.f32 %v2327, %v1153
        %v2334 = vmul.f32 %v2330, %v1153
        %v2335 = vadd.f32 %v2331, 1e-05
        %v2336 = vadd.f32 %v2332, 1e-05
        %v2337 = vadd.f32 %v2333, 1e-05
        %v2338 = vadd.f32 %v2334, 1e-05
        %v2339 = vrsqrt.pop %v2335
        %v2340 = vmul.f32 %v2339, %v2335
        %v2341 = vmul.f32 %v2340, %v2339
        %v2342 = vmul.f32 0.5, %v2341
        %v2343 = vsub.f32 1.5, %v2342
        %v2344 = vmul.f32 %v2339, %v2343
        %vm2345 = vweird.f32 %v2335
        %vm2346 = vweird.f32 %v2339
        %vm2347 = vmor %vm2345, %vm2346
        %v2348 = vsel %vm2347, %v2339, %v2344
        %v2349 = vrsqrt.pop %v2336
        %v2350 = vmul.f32 %v2349, %v2336
        %v2351 = vmul.f32 %v2350, %v2349
        %v2352 = vmul.f32 0.5, %v2351
        %v2353 = vsub.f32 1.5, %v2352
        %v2354 = vmul.f32 %v2349, %v2353
        %vm2355 = vweird.f32 %v2336
        %vm2356 = vweird.f32 %v2349
        %vm2357 = vmor %vm2355, %vm2356
        %v2358 = vsel %vm2357, %v2349, %v2354
        %v2359 = vrsqrt.pop %v2337
        %v2360 = vmul.f32 %v2359, %v2337
        %v2361 = vmul.f32 %v2360, %v2359
        %v2362 = vmul.f32 0.5, %v2361
        %v2363 = vsub.f32 1.5, %v2362
        %v2364 = vmul.f32 %v2359, %v2363
        %vm2365 = vweird.f32 %v2337
        %vm2366 = vweird.f32 %v2359
        %vm2367 = vmor %vm2365, %vm2366
        %v2368 = vsel %vm2367, %v2359, %v2364
        %v2369 = vrsqrt.pop %v2338
        %v2370 = vmul.f32 %v2369, %v2338
        %v2371 = vmul.f32 %v2370, %v2369
        %v2372 = vmul.f32 0.5, %v2371
        %v2373 = vsub.f32 1.5, %v2372
        %v2374 = vmul.f32 %v2369, %v2373
        %vm2375 = vweird.f32 %v2338
        %vm2376 = vweird.f32 %v2369
        %vm2377 = vmor %vm2375, %vm2376
        %v2378 = vsel %vm2377, %v2369, %v2374
        %v2379 = vmul.f32 %v2311, %v2348
        %v2380 = vmul.f32 %v2312, %v2358
        %v2381 = vmul.f32 %v2313, %v2368
        %v2382 = vmul.f32 %v2314, %v2378
        %v2383 = vpack.c.bf16 %v2380, %v2379
        %v2384 = vpack.c.bf16 %v2382, %v2381
        %v2385 = vld [vmem:[%s727] sm:$0xf]
        %v2386 = vld [vmem:[%s727 + $0x4] sm:$0xf]
        %v2387 = vld [vmem:[%s727 + $0x8] sm:$0xf]
        %v2388 = vld [vmem:[%s727 + $0xc] sm:$0xf]
        %v2389 = vld [vmem:[%s839] sm:$0x1]
        %v2391 = vperm.slane %v2389, 0
        %v2397 = vunpack.c.l.b16 %v2385
        %v2398 = vunpack.c.l.b16 %v2386
        %v2399 = vunpack.c.l.b16 %v2387
        %v2400 = vunpack.c.l.b16 %v2388
        %v2401 = vpack.c.b16 %v2398, %v2397
        %v2402 = vpack.c.b16 %v2400, %v2399
        %v2406 = vsel %vm1134, %v2383, 0
        %v2409 = vsel %vm1134, %v2384, 0
        %2411 = vmatpush.bf16.msra.mxu0 0
        %2412 = vmatpush.bf16.msra.mxu0 0
        %2413 = vmatpush.bf16.msra.mxu0 0
        %2414 = vmatpush.bf16.msra.mxu0 0
        %2415 = vmatpush.bf16.msra.mxu0 0
        %2416 = vmatpush.bf16.msra.mxu0 0
        %2417 = vmatpush.bf16.msra.mxu0 %v2402
        %2418 = vmatpush.bf16.msra.mxu0 %v2401
        %2419 = vmatmul.bf16.gmra.mxu0 %v2406
        %v2420 = vpop.f32.mrf.mxu0
        %v2421 = vadd.f32 %v2391, %v2420
        %v2422 = vpop.f32.mrf.mxu0
        %v2423 = vadd.f32 %v2391, %v2422
        %2424 = vmatmul.bf16.gmra.mxu0 %v2409
        %v2425 = vpop.f32.mrf.mxu0
        %v2426 = vadd.f32 %v2391, %v2425
        %v2427 = vpop.f32.mrf.mxu0
        %v2428 = vadd.f32 %v2391, %v2427
        %2429 = vdwg.mxu0
        %v2430 = vmul.f32 %v2421, 0.5
        %v2431 = vmul.f32 %v2423, 0.5
        %v2432 = vmul.f32 %v2426, 0.5
        %v2433 = vmul.f32 %v2428, 0.5
        %v2434 = vmul.f32 %v2421, 0.70710677
        %v2435 = vmul.f32 %v2423, 0.70710677
        %v2436 = vmul.f32 %v2426, 0.70710677
        %v2437 = vmul.f32 %v2428, 0.70710677
        %v2438 = vmul.f32 %v2434, %v2434
        %v2439 = vmin.f32 16.0, %v2438
        %v2440 = vmul.f32 %v2439, 2.1237322e-06
        %v2441 = vadd.f32 %v2440, 0.00028619796
        %v2442 = vmul.f32 %v2439, %v2441
        %v2443 = vadd.f32 %v2442, 0.0036580483
        %v2444 = vmul.f32 %v2439, %v2443
        %v2445 = vadd.f32 %v2444, 0.05243302
        %v2446 = vmul.f32 %v2439, %v2445
        %v2447 = vadd.f32 %v2446, 0.18741608
        %v2448 = vmul.f32 %v2439, %v2447
        %v2449 = vadd.f32 %v2448, 1.1283791
        %v2450 = vmul.f32 %v2434, %v2449
        %v2451 = vmul.f32 %v2439, 3.8918573e-05
        %v2452 = vadd.f32 %v2451, 0.001143296
        %v2453 = vmul.f32 %v2439, %v2452
        %v2454 = vadd.f32 %v2453, 0.014752088
        %v2455 = vmul.f32 %v2439, %v2454
        %v2456 = vadd.f32 %v2455, 0.112945676
        %v2457 = vmul.f32 %v2439, %v2456
        %v2458 = vadd.f32 %v2457, 0.4994258
        %v2459 = vmul.f32 %v2439, %v2458
        %v2460 = vadd.f32 %v2459, 1.0
        %v2461 = vrcp.pop %v2460
        %v2462 = vmul.f32 %v2460, %v2461
        %v2463 = vsub.f32 1.0, %v2462
        %v2464 = vmul.f32 %v2461, %v2463
        %v2465 = vadd.f32 %v2461, %v2464
        %vm2466 = vweird.f32 %v2460
        %vm2467 = vweird.f32 %v2461
        %vm2468 = vmor %vm2466, %vm2467
        %v2469 = vsel %vm2468, %v2461, %v2465
        %v2470 = vand.u32 2147483647, %v2460
        %vm2471 = vcmp.eq.f32.partialorder %v2470, 8.507059e+37
        %v2472 = vand.u32 %v2460, 2147483648
        %v2473 = vor.u32 1.1754944e-38, %v2472
        %v2474 = vsel %vm2471, %v2473, %v2469
        %v2475 = vmul.f32 %v2450, %v2474
        %v2476 = vmin.f32 %v2475, 1.0
        %v2477 = vmax.f32 %v2476, -1.0
        %v2478 = vmul.f32 %v2435, %v2435
        %v2479 = vmin.f32 16.0, %v2478
        %v2480 = vmul.f32 %v2479, 2.1237322e-06
        %v2481 = vadd.f32 %v2480, 0.00028619796
        %v2482 = vmul.f32 %v2479, %v2481
        %v2483 = vadd.f32 %v2482, 0.0036580483
        %v2484 = vmul.f32 %v2479, %v2483
        %v2485 = vadd.f32 %v2484, 0.05243302
        %v2486 = vmul.f32 %v2479, %v2485
        %v2487 = vadd.f32 %v2486, 0.18741608
        %v2488 = vmul.f32 %v2479, %v2487
        %v2489 = vadd.f32 %v2488, 1.1283791
        %v2490 = vmul.f32 %v2435, %v2489
        %v2491 = vmul.f32 %v2479, 3.8918573e-05
        %v2492 = vadd.f32 %v2491, 0.001143296
        %v2493 = vmul.f32 %v2479, %v2492
        %v2494 = vadd.f32 %v2493, 0.014752088
        %v2495 = vmul.f32 %v2479, %v2494
        %v2496 = vadd.f32 %v2495, 0.112945676
        %v2497 = vmul.f32 %v2479, %v2496
        %v2498 = vadd.f32 %v2497, 0.4994258
        %v2499 = vmul.f32 %v2479, %v2498
        %v2500 = vadd.f32 %v2499, 1.0
        %v2501 = vrcp.pop %v2500
        %v2502 = vmul.f32 %v2500, %v2501
        %v2503 = vsub.f32 1.0, %v2502
        %v2504 = vmul.f32 %v2501, %v2503
        %v2505 = vadd.f32 %v2501, %v2504
        %vm2506 = vweird.f32 %v2500
        %vm2507 = vweird.f32 %v2501
        %vm2508 = vmor %vm2506, %vm2507
        %v2509 = vsel %vm2508, %v2501, %v2505
        %v2510 = vand.u32 2147483647, %v2500
        %vm2511 = vcmp.eq.f32.partialorder %v2510, 8.507059e+37
        %v2512 = vand.u32 %v2500, 2147483648
        %v2513 = vor.u32 1.1754944e-38, %v2512
        %v2514 = vsel %vm2511, %v2513, %v2509
        %v2515 = vmul.f32 %v2490, %v2514
        %v2516 = vmin.f32 %v2515, 1.0
        %v2517 = vmax.f32 %v2516, -1.0
        %v2518 = vmul.f32 %v2436, %v2436
        %v2519 = vmin.f32 16.0, %v2518
        %v2520 = vmul.f32 %v2519, 2.1237322e-06
        %v2521 = vadd.f32 %v2520, 0.00028619796
        %v2522 = vmul.f32 %v2519, %v2521
        %v2523 = vadd.f32 %v2522, 0.0036580483
        %v2524 = vmul.f32 %v2519, %v2523
        %v2525 = vadd.f32 %v2524, 0.05243302
        %v2526 = vmul.f32 %v2519, %v2525
        %v2527 = vadd.f32 %v2526, 0.18741608
        %v2528 = vmul.f32 %v2519, %v2527
        %v2529 = vadd.f32 %v2528, 1.1283791
        %v2530 = vmul.f32 %v2436, %v2529
        %v2531 = vmul.f32 %v2519, 3.8918573e-05
        %v2532 = vadd.f32 %v2531, 0.001143296
        %v2533 = vmul.f32 %v2519, %v2532
        %v2534 = vadd.f32 %v2533, 0.014752088
        %v2535 = vmul.f32 %v2519, %v2534
        %v2536 = vadd.f32 %v2535, 0.112945676
        %v2537 = vmul.f32 %v2519, %v2536
        %v2538 = vadd.f32 %v2537, 0.4994258
        %v2539 = vmul.f32 %v2519, %v2538
        %v2540 = vadd.f32 %v2539, 1.0
        %v2541 = vrcp.pop %v2540
        %v2542 = vmul.f32 %v2540, %v2541
        %v2543 = vsub.f32 1.0, %v2542
        %v2544 = vmul.f32 %v2541, %v2543
        %v2545 = vadd.f32 %v2541, %v2544
        %vm2546 = vweird.f32 %v2540
        %vm2547 = vweird.f32 %v2541
        %vm2548 = vmor %vm2546, %vm2547
        %v2549 = vsel %vm2548, %v2541, %v2545
        %v2550 = vand.u32 2147483647, %v2540
        %vm2551 = vcmp.eq.f32.partialorder %v2550, 8.507059e+37
        %v2552 = vand.u32 %v2540, 2147483648
        %v2553 = vor.u32 1.1754944e-38, %v2552
        %v2554 = vsel %vm2551, %v2553, %v2549
        %v2555 = vmul.f32 %v2530, %v2554
        %v2556 = vmin.f32 %v2555, 1.0
        %v2557 = vmax.f32 %v2556, -1.0
        %v2558 = vmul.f32 %v2437, %v2437
        %v2559 = vmin.f32 16.0, %v2558
        %v2560 = vmul.f32 %v2559, 2.1237322e-06
        %v2561 = vadd.f32 %v2560, 0.00028619796
        %v2562 = vmul.f32 %v2559, %v2561
        %v2563 = vadd.f32 %v2562, 0.0036580483
        %v2564 = vmul.f32 %v2559, %v2563
        %v2565 = vadd.f32 %v2564, 0.05243302
        %v2566 = vmul.f32 %v2559, %v2565
        %v2567 = vadd.f32 %v2566, 0.18741608
        %v2568 = vmul.f32 %v2559, %v2567
        %v2569 = vadd.f32 %v2568, 1.1283791
        %v2570 = vmul.f32 %v2437, %v2569
        %v2571 = vmul.f32 %v2559, 3.8918573e-05
        %v2572 = vadd.f32 %v2571, 0.001143296
        %v2573 = vmul.f32 %v2559, %v2572
        %v2574 = vadd.f32 %v2573, 0.014752088
        %v2575 = vmul.f32 %v2559, %v2574
        %v2576 = vadd.f32 %v2575, 0.112945676
        %v2577 = vmul.f32 %v2559, %v2576
        %v2578 = vadd.f32 %v2577, 0.4994258
        %v2579 = vmul.f32 %v2559, %v2578
        %v2580 = vadd.f32 %v2579, 1.0
        %v2581 = vrcp.pop %v2580
        %v2582 = vmul.f32 %v2580, %v2581
        %v2583 = vsub.f32 1.0, %v2582
        %v2584 = vmul.f32 %v2581, %v2583
        %v2585 = vadd.f32 %v2581, %v2584
        %vm2586 = vweird.f32 %v2580
        %vm2587 = vweird.f32 %v2581
        %vm2588 = vmor %vm2586, %vm2587
        %v2589 = vsel %vm2588, %v2581, %v2585
        %v2590 = vand.u32 2147483647, %v2580
        %vm2591 = vcmp.eq.f32.partialorder %v2590, 8.507059e+37
        %v2592 = vand.u32 %v2580, 2147483648
        %v2593 = vor.u32 1.1754944e-38, %v2592
        %v2594 = vsel %vm2591, %v2593, %v2589
        %v2595 = vmul.f32 %v2570, %v2594
        %v2596 = vmin.f32 %v2595, 1.0
        %v2597 = vmax.f32 %v2596, -1.0
        %v2598 = vadd.f32 %v2477, 1.0
        %v2599 = vadd.f32 %v2517, 1.0
        %v2600 = vadd.f32 %v2557, 1.0
        %v2601 = vadd.f32 %v2597, 1.0
        %v2602 = vmul.f32 %v2430, %v2598
        %v2603 = vmul.f32 %v2431, %v2599
        %v2604 = vmul.f32 %v2432, %v2600
        %v2605 = vmul.f32 %v2433, %v2601
        %v2606 = vpack.c.bf16 %v2603, %v2602
        %v2607 = vpack.c.bf16 %v2605, %v2604
        %v2608 = vld [vmem:[%s844] sm:$0xf]
        %v2609 = vld [vmem:[%s844 + $0x4] sm:$0xf]
        %v2610 = vld [vmem:[%s844 + $0x8] sm:$0xf]
        %v2611 = vld [vmem:[%s844 + $0xc] sm:$0xf]
        %v2612 = vld [vmem:[%s844 + $0x10] sm:$0xf]
        %v2613 = vld [vmem:[%s844 + $0x14] sm:$0xf]
        %v2614 = vld [vmem:[%s844 + $0x18] sm:$0xf]
        %v2615 = vld [vmem:[%s844 + $0x1c] sm:$0xf]
        %v2616 = vld [vmem:[%s847] sm:$0x1]
        %v2618 = vperm.slane %v2616, 0
        %v2628 = vunpack.c.l.b16 %v2608
        %v2629 = vunpack.c.l.b16 %v2609
        %v2630 = vunpack.c.l.b16 %v2610
        %v2631 = vunpack.c.l.b16 %v2611
        %v2632 = vunpack.c.l.b16 %v2612
        %v2633 = vunpack.c.l.b16 %v2613
        %v2634 = vunpack.c.l.b16 %v2614
        %v2635 = vunpack.c.l.b16 %v2615
        %v2636 = vpack.c.b16 %v2629, %v2628
        %v2637 = vpack.c.b16 %v2631, %v2630
        %v2638 = vpack.c.b16 %v2633, %v2632
        %v2639 = vpack.c.b16 %v2635, %v2634
        %vm2644 = vcmask 523264
        %v2646 = vsel %vm2644, %v2606, 0
        %v2649 = vsel %vm2644, %v2607, 0
        %2651 = vmatpush.bf16.msra.mxu0 0
        %2652 = vmatpush.bf16.msra.mxu0 0
        %2653 = vmatpush.bf16.msra.mxu0 0
        %2654 = vmatpush.bf16.msra.mxu0 0
        %2655 = vmatpush.bf16.msra.mxu0 %v2639
        %2656 = vmatpush.bf16.msra.mxu0 %v2638
        %2657 = vmatpush.bf16.msra.mxu0 %v2637
        %2658 = vmatpush.bf16.msra.mxu0 %v2636
        %2659 = vmatmul.bf16.gmra.mxu0 %v2646
        %v2660 = vpop.f32.mrf.mxu0
        %v2661 = vadd.f32 %v2618, %v2660
        %v2662 = vpop.f32.mrf.mxu0
        %v2663 = vadd.f32 %v2618, %v2662
        %2664 = vmatmul.bf16.gmra.mxu0 %v2649
        %v2665 = vpop.f32.mrf.mxu0
        %v2666 = vadd.f32 %v2618, %v2665
        %v2667 = vpop.f32.mrf.mxu0
        %v2668 = vadd.f32 %v2618, %v2667
        %2669 = vdwg.mxu0
        %v2670 = vadd.f32 %v2661, %v2286
        %v2671 = vadd.f32 %v2663, %v2288
        %v2672 = vadd.f32 %v2666, %v2291
        %v2673 = vadd.f32 %v2668, %v2293
        %2674 = vst.msk [vmem:[#allocation2] sm:$0xff] %vm1134, %v2670
        %2675 = vst.msk [vmem:[#allocation2 + $0x8] sm:$0xff] %vm1134, %v2671
        %2676 = vst.msk [vmem:[#allocation2 + $0x10] sm:$0xff] %vm1134, %v2672
        %2677 = vst.msk [vmem:[#allocation2 + $0x18] sm:$0xff] %vm1134, %v2673
        %p2678 = scmp.eq.s32.totalorder %s47, 1
        // Predicated region
        $region117: #{tpu_custom_call.1} parent=95 // pred_check
          %p2679 = pneg %p2678
        $region118: #{tpu_custom_call.1} parent=95 // pred_check_branch
          %2681 = sbr.rel (%p2679) target = $region120
        $region119: #{tpu_custom_call.1} parent=95 // pred_region
          %v2682 = vld [vmem:[%s4] sm:$0xff]
          %v2683 = vld [vmem:[%s4 + $0x8] sm:$0xff]
          %v2684 = vld [vmem:[%s4 + $0x10] sm:$0xff]
          %v2685 = vld [vmem:[%s4 + $0x18] sm:$0xff]
          %2687 = vset.pattern.permute.xlu0 0
          %2688 = vperm.xlu0 %2687, %v2682
          %v2689 = vpop.permute.xlu0 %2688
          %2692 = vset.pattern.permute.xlu0 0
          %2693 = vperm.xlu0 %2692, %v2683
          %v2694 = vpop.permute.xlu0 %2693
          %2697 = vset.pattern.permute.xlu0 0
          %2698 = vperm.xlu0 %2697, %v2684
          %v2699 = vpop.permute.xlu0 %2698
          %2702 = vset.pattern.permute.xlu0 0
          %2703 = vperm.xlu0 %2702, %v2685
          %v2704 = vpop.permute.xlu0 %2703
          %v2706 = vmul.f32 %v2670, %v2689
          %v2707 = vmul.f32 %v2671, %v2694
          %v2708 = vmul.f32 %v2672, %v2699
          %v2709 = vmul.f32 %v2673, %v2704
          %v2710 = vsel %vm1134, %v2706, 0.0
          %v2711 = vsel %vm1134, %v2707, 0.0
          %v2712 = vadd.f32 %v2710, %v2711
          %v2713 = vrot.slane %v2712, 4
          %v2714 = vadd.f32 %v2712, %v2713
          %v2715 = vrot.slane %v2714, 2
          %v2716 = vadd.f32 %v2714, %v2715
          %v2717 = vrot.slane %v2716, 1
          %v2718 = vadd.f32 %v2716, %v2717
          %vm2719 = vcmask 253952
          %2720 = vst.msk [vmem:[#allocation13] sm:$0x1] %vm2719, %v2718
          %v2721 = vsel %vm1134, %v2708, 0.0
          %v2722 = vsel %vm1134, %v2709, 0.0
          %v2723 = vadd.f32 %v2721, %v2722
          %v2724 = vrot.slane %v2723, 4
          %v2725 = vadd.f32 %v2723, %v2724
          %v2726 = vrot.slane %v2725, 2
          %v2727 = vadd.f32 %v2725, %v2726
          %v2728 = vrot.slane %v2727, 1
          %v2729 = vadd.f32 %v2727, %v2728
          %2730 = vst.msk [vmem:[#allocation13 + $0x1] sm:$0x1] %vm2719, %v2729
        $region120: #{tpu_custom_call.1} parent=95 // pred_fallthru
          _
        // Predicated region
        $region121: #{tpu_custom_call.1} parent=95 // pred_check
          %p2731 = pneg %p514
        $region122: #{tpu_custom_call.1} parent=95 // pred_check_branch
          %2733 = sbr.rel (%p2731) target = $region124
        $region123: #{tpu_custom_call.1} parent=95 // pred_region
          %2735 = vsyncadd [#allocation7], 0
          %s2737 = sshll.u32 [#allocation13], 4
          %s2738 = int_to_ptr.vmem [resolvable:$true] %s2737
          %s2739 = sshll.u32 %s20, 4
          %s2740 = int_to_ptr.hbm [resolvable:$true] %s2739
          %2742 = dma.vmem_to_hbm [thread:$0]  %s2738, 32, %s2740, [#allocation7]
        $region124: #{tpu_custom_call.1} parent=95 // pred_fallthru
          _
        // Predicated region
        $region125: #{tpu_custom_call.1} parent=95 // pred_check
          %p2743 = pneg %p514
        $region126: #{tpu_custom_call.1} parent=95 // pred_check_branch
          %2745 = sbr.rel (%p2743) target = $region128
        $region127: #{tpu_custom_call.1} parent=95 // pred_region
          %2747 = dma.done [#allocation7], 32
        $region128: #{tpu_custom_call.1} parent=95 // pred_fallthru
          _
      $region96: #{tpu_custom_call.1} parent=5 // pred_fallthru
        _
      %p2748 = scmp.le.s32.totalorder 2, %s42
      // Predicated region
      $region129: #{tpu_custom_call.1} parent=5 // pred_check
        %p2749 = pneg %p2748
      $region130: #{tpu_custom_call.1} parent=5 // pred_check_branch
        %2751 = sbr.rel (%p2749) target = $region132
      $region131: #{tpu_custom_call.1} parent=5 // pred_region
        %s2752 = ssub.s32 %s42, 2
      $region132: #{tpu_custom_call.1} parent=5 // pred_fallthru
        _
    $region6: #{tpu_custom_call.1} parent=1 // loop_footer
      %s46 = sadd.s32 1, %s42
    $region7: #{tpu_custom_call.1} parent=1 // loop_footer_branch
      %41 = sbr.rel target = $region3
    $region8: #{tpu_custom_call.1} parent=1 // loop_exit
      _
    %2753 = vsyncpa [#allocation6], 1
    %s2754 = scalar_lea.sflag [#allocation6], 1
    %2755 = vsyncpa %s2754, 1
    %2756 = vsyncpa [#allocation9], 1
    %s2757 = scalar_lea.sflag [#allocation9], 1
    %2758 = vsyncpa %s2757, 1
    %2759 = vsyncpa [#allocation12], 1
    %s2760 = scalar_lea.sflag [#allocation12], 1
    %2761 = vsyncpa %s2760, 1
    %2762 = vsyncpa [#allocation7], 1
    %s2763 = scalar_lea.sflag [#allocation7], 1
    %2764 = vsyncpa %s2763, 1

</llo_original>
